<compile_context>
chip_gen: v7x
topology: tpu7x:2x2x1
jax: 0.10.0
libtpu: 0.0.40
codegen_flags: <defaults>
</compile_context>

<pallas_src>
import functools

import jax
import jax.numpy as jnp
from jax.experimental import pallas as pl
from jax.experimental.pallas import tpu as pltpu


LANE = 128


def _round_up(x, m):
    return (x + m - 1) // m * m


# ---------------------------------------------------------------------------
# Fused Pallas kernel: whole forward pass in one shot.
# ---------------------------------------------------------------------------
def _fused_kernel(x_ref, w_bd_ref, b0_ref,
                  wct_ref, wcb_ref, bc_ref,
                  w1_ref, b1_ref, w2_ref, b2_ref, w3_ref, b3_ref,
                  o_ref, *, e_num):
    B = x_ref.shape[0]

    # ---- Stage 1: all per-feature-block linears as ONE block-diagonal matmul.
    # first: (B, n_blocks*512) f32;  block i lives in columns [i*512, (i+1)*512)
    first = jnp.dot(x_ref[...], w_bd_ref[...],
                    preferred_element_type=jnp.float32) + b0_ref[...]

    # ---- Stage 2 + first final-MLP layer, fused per pair (no concats).
    #   second_p = first[:, 2p*512:(2p+1)*512] @ Wc_top
    #            + first[:, (2p+1)*512:(2p+2)*512] @ Wc_bot + bc
    #   h1 = relu( sum_p second_p @ W1[p*512:(p+1)*512, :] + b1 )
    h1 = jnp.broadcast_to(b1_ref[...], (B, b1_ref.shape[1])).astype(jnp.float32)
    for p in range(e_num):
        a = first[:, (2 * p) * 512:(2 * p + 1) * 512].astype(jnp.bfloat16)
        b = first[:, (2 * p + 1) * 512:(2 * p + 2) * 512].astype(jnp.bfloat16)
        second_p = (jnp.dot(a, wct_ref[...], preferred_element_type=jnp.float32)
                    + jnp.dot(b, wcb_ref[...], preferred_element_type=jnp.float32)
                    + bc_ref[...])
        h1 = h1 + jnp.dot(second_p.astype(jnp.bfloat16),
                          w1_ref[p * 512:(p + 1) * 512, :],
                          preferred_element_type=jnp.float32)
    h1 = jnp.maximum(h1, 0.0)

    # ---- Remaining final MLP: Linear-ReLU-Linear (output lane-padded to 128).
    h2 = jnp.dot(h1.astype(jnp.bfloat16), w2_ref[...],
                 preferred_element_type=jnp.float32) + b2_ref[...]
    h2 = jnp.maximum(h2, 0.0)
    y = jnp.dot(h2.astype(jnp.bfloat16), w3_ref[...],
                preferred_element_type=jnp.float32) + b3_ref[...]
    o_ref[...] = y.astype(o_ref.dtype)


# ---------------------------------------------------------------------------
# Parameter setup (PyTorch-default-style uniform init, weights stored (in,out))
# ---------------------------------------------------------------------------
def _init_linear(key, fan_in, fan_out):
    kw, kb = jax.random.split(key)
    bound = 1.0 / (fan_in ** 0.5)
    w = jax.random.uniform(kw, (fan_in, fan_out), jnp.float32, -bound, bound)
    b = jax.random.uniform(kb, (fan_out,), jnp.float32, -bound, bound)
    return w, b


def init_classify_model(key, e_feature_shape_list, output_dim):
    e_num = len(e_feature_shape_list) // 2
    n_blocks = len(e_feature_shape_list)
    keys = jax.random.split(key, n_blocks + 1 + 3)
    params = {}
    params["e_linear"] = [
        _init_linear(keys[i], fs, 512) for i, fs in enumerate(e_feature_shape_list)
    ]
    # Shared combined layer (PyTorch ModuleList repeats the SAME module object).
    params["e_combined"] = _init_linear(keys[n_blocks], 1024, 512)
    params["final"] = [
        _init_linear(keys[n_blocks + 1], 512 * e_num, 256 * e_num),
        _init_linear(keys[n_blocks + 2], 256 * e_num, 128 * e_num),
        _init_linear(keys[n_blocks + 3], 128 * e_num, output_dim),
    ]
    return params


def pack_params(params, e_feature_shape_list, output_dim):
    """Pre-pack parameters into the fused-kernel layout (done once, off the hot path)."""
    n_blocks = len(e_feature_shape_list)
    total_feat = sum(e_feature_shape_list)

    # Block-diagonal stage-1 weight + concatenated biases.
    w_bd = jnp.zeros((total_feat, n_blocks * 512), jnp.float32)
    b0_parts = []
    start = 0
    for i, (w, b) in enumerate(params["e_linear"]):
        fs = e_feature_shape_list[i]
        w_bd = w_bd.at[start:start + fs, i * 512:(i + 1) * 512].set(w)
        b0_parts.append(b)
        start += fs
    b0 = jnp.concatenate(b0_parts).reshape(1, n_blocks * 512)

    # Shared combined layer split into top/bottom halves of its K dim.
    wc, bc = params["e_combined"]
    wc_top, wc_bot = wc[:512, :], wc[512:, :]

    (w1, b1), (w2, b2), (w3, b3) = params["final"]

    # Lane-dense output: pad the last layer's N to a multiple of 128.
    n_pad = _round_up(output_dim, LANE)
    w3p = jnp.zeros((w3.shape[0], n_pad), jnp.float32).at[:, :output_dim].set(w3)
    b3p = jnp.zeros((1, n_pad), jnp.float32).at[:, :output_dim].set(b3)

    bf = lambda a: a.astype(jnp.bfloat16)
    return dict(
        w_bd=bf(w_bd), b0=b0,
        wc_top=bf(wc_top), wc_bot=bf(wc_bot), bc=bc.reshape(1, 512),
        w1=bf(w1), b1=b1.reshape(1, -1),
        w2=bf(w2), b2=b2.reshape(1, -1),
        w3=bf(w3p), b3=b3p,
    )


# ---------------------------------------------------------------------------
# Fused forward pass: one pallas_call, everything resident in VMEM.
# ---------------------------------------------------------------------------
@functools.partial(jax.jit, static_argnames=("e_num", "output_dim"))
def classify_forward(packed, X, *, e_num, output_dim):
    B = X.shape[0]
    n_pad = packed["w3"].shape[1]
    vmem_spec = pl.BlockSpec(memory_space=pltpu.MemorySpace.VMEM)
    out = pl.pallas_call(
        functools.partial(_fused_kernel, e_num=e_num),
        out_shape=jax.ShapeDtypeStruct((B, n_pad), jnp.float32),
        in_specs=[vmem_spec] * 12,
        out_specs=vmem_spec,
        compiler_params=pltpu.CompilerParams(vmem_limit_bytes=32 * 1024 * 1024),
    )(
        X.astype(jnp.bfloat16),
        packed["w_bd"], packed["b0"],
        packed["wc_top"], packed["wc_bot"], packed["bc"],
        packed["w1"], packed["b1"],
        packed["w2"], packed["b2"],
        packed["w3"], packed["b3"],
    )
    return out[:, :output_dim]


# ---------------------------------------------------------------------------
# Pure-JAX f32 reference (mirrors the PyTorch forward) for validation.
# ---------------------------------------------------------------------------
def classify_forward_reference(params, X, e_feature_shape_list):
    first = []
    start = 0
    for i, fs in enumerate(e_feature_shape_list):
        w, b = params["e_linear"][i]
        first.append(X[:, start:start + fs] @ w + b)
        start += fs
    wc, bc = params["e_combined"]
    second = []
    s, e = 0, 1
    while e < len(first):
        second.append(jnp.concatenate([first[s], first[e]], axis=1) @ wc + bc)
        s += 2
        e += 2
    combined = jnp.concatenate(second, axis=1)
    (w1, b1), (w2, b2), (w3, b3) = params["final"]
    h = jnp.maximum(combined @ w1 + b1, 0.0)
    h = jnp.maximum(h @ w2 + b2, 0.0)
    return h @ w3 + b3


if __name__ == "__main__":
    # Small, module-consistent shapes: 4 feature blocks -> e_num = 2 pairs.
    e_feature_shape_list = [32, 48, 64, 16]   # total input features = 160
    output_dim = 26
    batch = 8
    e_num = len(e_feature_shape_list) // 2

    key = jax.random.PRNGKey(0)
    k_params, k_x = jax.random.split(key)

    params = init_classify_model(k_params, e_feature_shape_list, output_dim)
    packed = pack_params(params, e_feature_shape_list, output_dim)
    X = jax.random.normal(k_x, (batch, sum(e_feature_shape_list)), jnp.float32)

    Y = classify_forward(packed, X, e_num=e_num, output_dim=output_dim)
    Y = jax.block_until_ready(Y)

    assert Y.shape == (batch, output_dim), Y.shape
    assert Y.dtype == jnp.float32

    # Validate against the f32 pure-JAX reference (loose tolerance for bf16 weights).
    Y_ref = classify_forward_reference(params, X, e_feature_shape_list)
    max_err = float(jnp.max(jnp.abs(Y - Y_ref)))
    assert bool(jnp.all(jnp.isfinite(Y))), "non-finite output"
    assert max_err < 1e-1, f"max abs err vs reference = {max_err}"

    print("KERNEL_OK")
</pallas_src>

<mosaic_0001>
module attributes {stable_mosaic.version = 11 : i64} {
  func.func @_fused_kernel(%arg0: memref<8x160xbf16, #tpu.memory_space<vmem>>, %arg1: memref<160x2048xbf16, #tpu.memory_space<vmem>>, %arg2: memref<1x2048xf32, #tpu.memory_space<vmem>>, %arg3: memref<512x512xbf16, #tpu.memory_space<vmem>>, %arg4: memref<512x512xbf16, #tpu.memory_space<vmem>>, %arg5: memref<1x512xf32, #tpu.memory_space<vmem>>, %arg6: memref<1024x512xbf16, #tpu.memory_space<vmem>>, %arg7: memref<1x512xf32, #tpu.memory_space<vmem>>, %arg8: memref<512x256xbf16, #tpu.memory_space<vmem>>, %arg9: memref<1x256xf32, #tpu.memory_space<vmem>>, %arg10: memref<256x128xbf16, #tpu.memory_space<vmem>>, %arg11: memref<1x128xf32, #tpu.memory_space<vmem>>, %arg12: memref<8x128xf32, #tpu.memory_space<vmem>>) attributes {dimension_semantics = [], scalar_prefetch = 0 : i64, scratch_operands = 0 : i64, tpu.core_type = #tpu.core_type<tc>} {
    %c0 = arith.constant 0 : index
    %c0_0 = arith.constant 0 : index
    %0 = vector.load %arg0[%c0, %c0_0] : memref<8x160xbf16, #tpu.memory_space<vmem>>, vector<8x160xbf16>
    %c0_1 = arith.constant 0 : index
    %c0_2 = arith.constant 0 : index
    %1 = vector.load %arg1[%c0_1, %c0_2] : memref<160x2048xbf16, #tpu.memory_space<vmem>>, vector<160x2048xbf16>
    %cst = arith.constant dense<0.000000e+00> : vector<8x2048xf32>
    %2 = tpu.matmul %0, %1, %cst {dimension_numbers = #tpu.dot_dimension_numbers<[1], [0], [0], [1], [0, 0, 1, 1], [], []>} : vector<8x160xbf16>, vector<160x2048xbf16>, vector<8x2048xf32> -> vector<8x2048xf32>
    %c0_3 = arith.constant 0 : index
    %c0_4 = arith.constant 0 : index
    %3 = vector.load %arg2[%c0_3, %c0_4] : memref<1x2048xf32, #tpu.memory_space<vmem>>, vector<1x2048xf32>
    %4 = vector.broadcast %3 : vector<1x2048xf32> to vector<8x2048xf32>
    %5 = arith.addf %2, %4 : vector<8x2048xf32>
    %c0_5 = arith.constant 0 : index
    %c0_6 = arith.constant 0 : index
    %6 = vector.load %arg7[%c0_5, %c0_6] : memref<1x512xf32, #tpu.memory_space<vmem>>, vector<1x512xf32>
    %7 = vector.shape_cast %6 : vector<1x512xf32> to vector<1x512xf32>
    %8 = vector.broadcast %7 : vector<1x512xf32> to vector<8x512xf32>
    %9 = vector.extract_strided_slice %5 {offsets = [0, 0], sizes = [8, 512], strides = [1, 1]} : vector<8x2048xf32> to vector<8x512xf32>
    %10 = arith.truncf %9 : vector<8x512xf32> to vector<8x512xbf16>
    %11 = vector.extract_strided_slice %5 {offsets = [0, 512], sizes = [8, 512], strides = [1, 1]} : vector<8x2048xf32> to vector<8x512xf32>
    %12 = arith.truncf %11 : vector<8x512xf32> to vector<8x512xbf16>
    %c0_7 = arith.constant 0 : index
    %c0_8 = arith.constant 0 : index
    %13 = vector.load %arg3[%c0_7, %c0_8] : memref<512x512xbf16, #tpu.memory_space<vmem>>, vector<512x512xbf16>
    %cst_9 = arith.constant dense<0.000000e+00> : vector<8x512xf32>
    %14 = tpu.matmul %10, %13, %cst_9 {dimension_numbers = #tpu.dot_dimension_numbers<[1], [0], [0], [1], [0, 0, 1, 1], [], []>} : vector<8x512xbf16>, vector<512x512xbf16>, vector<8x512xf32> -> vector<8x512xf32>
    %c0_10 = arith.constant 0 : index
    %c0_11 = arith.constant 0 : index
    %15 = vector.load %arg4[%c0_10, %c0_11] : memref<512x512xbf16, #tpu.memory_space<vmem>>, vector<512x512xbf16>
    %cst_12 = arith.constant dense<0.000000e+00> : vector<8x512xf32>
    %16 = tpu.matmul %12, %15, %cst_12 {dimension_numbers = #tpu.dot_dimension_numbers<[1], [0], [0], [1], [0, 0, 1, 1], [], []>} : vector<8x512xbf16>, vector<512x512xbf16>, vector<8x512xf32> -> vector<8x512xf32>
    %17 = arith.addf %14, %16 : vector<8x512xf32>
    %c0_13 = arith.constant 0 : index
    %c0_14 = arith.constant 0 : index
    %18 = vector.load %arg5[%c0_13, %c0_14] : memref<1x512xf32, #tpu.memory_space<vmem>>, vector<1x512xf32>
    %19 = vector.broadcast %18 : vector<1x512xf32> to vector<8x512xf32>
    %20 = arith.addf %17, %19 : vector<8x512xf32>
    %21 = arith.truncf %20 : vector<8x512xf32> to vector<8x512xbf16>
    %c0_15 = arith.constant 0 : index
    %c0_16 = arith.constant 0 : index
    %22 = vector.load %arg6[%c0_15, %c0_16] : memref<1024x512xbf16, #tpu.memory_space<vmem>>, vector<512x512xbf16>
    %cst_17 = arith.constant dense<0.000000e+00> : vector<8x512xf32>
    %23 = tpu.matmul %21, %22, %cst_17 {dimension_numbers = #tpu.dot_dimension_numbers<[1], [0], [0], [1], [0, 0, 1, 1], [], []>} : vector<8x512xbf16>, vector<512x512xbf16>, vector<8x512xf32> -> vector<8x512xf32>
    %24 = arith.addf %8, %23 : vector<8x512xf32>
    %25 = vector.extract_strided_slice %5 {offsets = [0, 1024], sizes = [8, 512], strides = [1, 1]} : vector<8x2048xf32> to vector<8x512xf32>
    %26 = arith.truncf %25 : vector<8x512xf32> to vector<8x512xbf16>
    %27 = vector.extract_strided_slice %5 {offsets = [0, 1536], sizes = [8, 512], strides = [1, 1]} : vector<8x2048xf32> to vector<8x512xf32>
    %28 = arith.truncf %27 : vector<8x512xf32> to vector<8x512xbf16>
    %c0_18 = arith.constant 0 : index
    %c0_19 = arith.constant 0 : index
    %29 = vector.load %arg3[%c0_18, %c0_19] : memref<512x512xbf16, #tpu.memory_space<vmem>>, vector<512x512xbf16>
    %cst_20 = arith.constant dense<0.000000e+00> : vector<8x512xf32>
    %30 = tpu.matmul %26, %29, %cst_20 {dimension_numbers = #tpu.dot_dimension_numbers<[1], [0], [0], [1], [0, 0, 1, 1], [], []>} : vector<8x512xbf16>, vector<512x512xbf16>, vector<8x512xf32> -> vector<8x512xf32>
    %c0_21 = arith.constant 0 : index
    %c0_22 = arith.constant 0 : index
    %31 = vector.load %arg4[%c0_21, %c0_22] : memref<512x512xbf16, #tpu.memory_space<vmem>>, vector<512x512xbf16>
    %cst_23 = arith.constant dense<0.000000e+00> : vector<8x512xf32>
    %32 = tpu.matmul %28, %31, %cst_23 {dimension_numbers = #tpu.dot_dimension_numbers<[1], [0], [0], [1], [0, 0, 1, 1], [], []>} : vector<8x512xbf16>, vector<512x512xbf16>, vector<8x512xf32> -> vector<8x512xf32>
    %33 = arith.addf %30, %32 : vector<8x512xf32>
    %c0_24 = arith.constant 0 : index
    %c0_25 = arith.constant 0 : index
    %34 = vector.load %arg5[%c0_24, %c0_25] : memref<1x512xf32, #tpu.memory_space<vmem>>, vector<1x512xf32>
    %35 = vector.broadcast %34 : vector<1x512xf32> to vector<8x512xf32>
    %36 = arith.addf %33, %35 : vector<8x512xf32>
    %37 = arith.truncf %36 : vector<8x512xf32> to vector<8x512xbf16>
    %c512 = arith.constant 512 : index
    %c0_26 = arith.constant 0 : index
    %38 = vector.load %arg6[%c512, %c0_26] : memref<1024x512xbf16, #tpu.memory_space<vmem>>, vector<512x512xbf16>
    %cst_27 = arith.constant dense<0.000000e+00> : vector<8x512xf32>
    %39 = tpu.matmul %37, %38, %cst_27 {dimension_numbers = #tpu.dot_dimension_numbers<[1], [0], [0], [1], [0, 0, 1, 1], [], []>} : vector<8x512xbf16>, vector<512x512xbf16>, vector<8x512xf32> -> vector<8x512xf32>
    %40 = arith.addf %24, %39 : vector<8x512xf32>
    %cst_28 = arith.constant 0.000000e+00 : f32
    %41 = vector.broadcast %cst_28 : f32 to vector<8x512xf32>
    %42 = arith.maximumf %40, %41 : vector<8x512xf32>
    %43 = arith.truncf %42 : vector<8x512xf32> to vector<8x512xbf16>
    %c0_29 = arith.constant 0 : index
    %c0_30 = arith.constant 0 : index
    %44 = vector.load %arg8[%c0_29, %c0_30] : memref<512x256xbf16, #tpu.memory_space<vmem>>, vector<512x256xbf16>
    %cst_31 = arith.constant dense<0.000000e+00> : vector<8x256xf32>
    %45 = tpu.matmul %43, %44, %cst_31 {dimension_numbers = #tpu.dot_dimension_numbers<[1], [0], [0], [1], [0, 0, 1, 1], [], []>} : vector<8x512xbf16>, vector<512x256xbf16>, vector<8x256xf32> -> vector<8x256xf32>
    %c0_32 = arith.constant 0 : index
    %c0_33 = arith.constant 0 : index
    %46 = vector.load %arg9[%c0_32, %c0_33] : memref<1x256xf32, #tpu.memory_space<vmem>>, vector<1x256xf32>
    %47 = vector.broadcast %46 : vector<1x256xf32> to vector<8x256xf32>
    %48 = arith.addf %45, %47 : vector<8x256xf32>
    %cst_34 = arith.constant 0.000000e+00 : f32
    %49 = vector.broadcast %cst_34 : f32 to vector<8x256xf32>
    %50 = arith.maximumf %48, %49 : vector<8x256xf32>
    %51 = arith.truncf %50 : vector<8x256xf32> to vector<8x256xbf16>
    %c0_35 = arith.constant 0 : index
    %c0_36 = arith.constant 0 : index
    %52 = vector.load %arg10[%c0_35, %c0_36] : memref<256x128xbf16, #tpu.memory_space<vmem>>, vector<256x128xbf16>
    %cst_37 = arith.constant dense<0.000000e+00> : vector<8x128xf32>
    %53 = tpu.matmul %51, %52, %cst_37 {dimension_numbers = #tpu.dot_dimension_numbers<[1], [0], [0], [1], [0, 0, 1, 1], [], []>} : vector<8x256xbf16>, vector<256x128xbf16>, vector<8x128xf32> -> vector<8x128xf32>
    %c0_38 = arith.constant 0 : index
    %c0_39 = arith.constant 0 : index
    %54 = vector.load %arg11[%c0_38, %c0_39] : memref<1x128xf32, #tpu.memory_space<vmem>>, vector<1x128xf32>
    %55 = vector.broadcast %54 : vector<1x128xf32> to vector<8x128xf32>
    %56 = arith.addf %53, %55 : vector<8x128xf32>
    %c0_40 = arith.constant 0 : index
    %c0_41 = arith.constant 0 : index
    %57 = vector.load %arg12[%c0_40, %c0_41] : memref<8x128xf32, #tpu.memory_space<vmem>>, vector<8x128xf32>
    tpu.vector_store %arg12[%c0_40, %c0_41], %56 {strides = array<i32>} : memref<8x128xf32, #tpu.memory_space<vmem>>, vector<8x128xf32>,
    return
  }
}

</mosaic_0001>

<llo_original>
// kernel: classify_forward.1
$region0: #{classify_forward.1}
  #allocation0 [shape = 'u32[]', space=smem, size = 0x4, offset = 0x4, fixed_abs, tag = 'smem constant byte address 0x4 - core index']
  #allocation1 [shape = 'u32[144,128]{1,0:T(1,128)}', space=vmem, size = 0x12000, scoped, tag = 'internal scratch']
  %s0 = inlined_call_operand.vmem [shape: bf16[8,160], index: 0, kind: input, shape index: {}]
  %s1 = inlined_call_operand.hbm [shape: bf16[160,2048], index: 1, kind: input, shape index: {}]
  %s2 = inlined_call_operand.vmem [shape: f32[1,2048], index: 2, kind: input, shape index: {}]
  %s3 = inlined_call_operand.hbm [shape: bf16[512,512], index: 3, kind: input, shape index: {}]
  %s4 = inlined_call_operand.hbm [shape: bf16[512,512], index: 4, kind: input, shape index: {}]
  %s5 = inlined_call_operand.vmem [shape: f32[1,512], index: 5, kind: input, shape index: {}]
  %s6 = inlined_call_operand.hbm [shape: bf16[1024,512], index: 6, kind: input, shape index: {}]
  %s7 = inlined_call_operand.vmem [shape: f32[1,512], index: 7, kind: input, shape index: {}]
  %s8 = inlined_call_operand.hbm [shape: bf16[512,256], index: 8, kind: input, shape index: {}]
  %s9 = inlined_call_operand.vmem [shape: f32[1,256], index: 9, kind: input, shape index: {}]
  %s10 = inlined_call_operand.hbm [shape: bf16[256,128], index: 10, kind: input, shape index: {}]
  %s11 = inlined_call_operand.vmem [shape: f32[1,128], index: 11, kind: input, shape index: {}]
  %s12 = inlined_call_operand.hbm [shape: f32[8,128], index: 12, kind: output, shape index: {}]
  %s13 = sld [smem:[#allocation0]]
  $region82: #{classify_forward.1} parent=0
    _
  %s15 = ssub.s32 1, %s13
  %s16 = scalar_select 0, %s15, %s13
  $region1: #{classify_forward.1} parent=0
    #allocation2 [shape = 'u8[655360]{0}', space=vmem, size = 0xa0000, scoped, tag = 'input window, operand 1, single buffered']
    #allocation3 [shape = 's32[1]{0}', space=sflag, size = 0x4, scoped, tag = 'scoped memory for classify_forward.1']
    #allocation4 [shape = 's32[1]{0}', space=sflag, size = 0x4, scoped, tag = 'scoped memory for classify_forward.1']
    #allocation5 [shape = 'u8[524288]{0}', space=vmem, size = 0x80000, scoped, tag = 'input window, operand 3, single buffered']
    #allocation6 [shape = 's32[1]{0}', space=sflag, size = 0x4, scoped, tag = 'scoped memory for classify_forward.1']
    #allocation7 [shape = 'u8[524288]{0}', space=vmem, size = 0x80000, scoped, tag = 'input window, operand 4, single buffered']
    #allocation8 [shape = 'u8[1048576]{0}', space=vmem, size = 0x100000, scoped, tag = 'input window, operand 6, single buffered']
    #allocation9 [shape = 's32[1]{0}', space=sflag, size = 0x4, scoped, tag = 'scoped memory for classify_forward.1']
    #allocation10 [shape = 'u8[262144]{0}', space=vmem, size = 0x40000, scoped, tag = 'input window, operand 8, single buffered']
    #allocation11 [shape = 'u8[65536]{0}', space=vmem, size = 0x10000, scoped, tag = 'input window, operand 10, single buffered']
    #allocation12 [shape = 's32[1]{0}', space=sflag, size = 0x4, scoped, tag = 'scoped memory for classify_forward.1']
    #allocation13 [shape = 'u8[4096]{0}', space=vmem, size = 0x1000, scoped, tag = 'output window, operand 0, single buffered']
    %17 = vsyncpa [#allocation3], 0
    %18 = vsyncpa [#allocation6], 0
    %19 = vsyncpa [#allocation9], 0
    %20 = vsyncpa [#allocation12], 0
    %21 = vsyncpa [#allocation4], 0
    // Predicated region
    $region2: #{classify_forward.1} parent=1 // pred_check
      _
    $region3: #{classify_forward.1} parent=1 // pred_check_branch
      %23 = sbr.rel (0) target = $region5
    $region4: #{classify_forward.1} parent=1 // pred_region
      _
    $region5: #{classify_forward.1} parent=1 // pred_fallthru
      _
    // Predicated region
    $region6: #{classify_forward.1} parent=1 // pred_check
      _
    $region7: #{classify_forward.1} parent=1 // pred_check_branch
      %25 = sbr.rel (0) target = $region9
    $region8: #{classify_forward.1} parent=1 // pred_region
      %s27 = ssub.s32 20480, 20480
      %28 = vsyncadd [#allocation3], %s27
      %s29 = sshll.u32 [#allocation2], 4
      %s30 = int_to_ptr.vmem [resolvable:$true] %s29
      %35 = dma.hbm_to_vmem [thread:$0]  %s1, 20480, %s30, [#allocation3], 1024, 1024, 64
    $region9: #{classify_forward.1} parent=1 // pred_fallthru
      _
    // Predicated region
    $region10: #{classify_forward.1} parent=1 // pred_check
      _
    $region11: #{classify_forward.1} parent=1 // pred_check_branch
      %37 = sbr.rel (0) target = $region13
    $region12: #{classify_forward.1} parent=1 // pred_region
      _
    $region13: #{classify_forward.1} parent=1 // pred_fallthru
      _
    // Predicated region
    $region14: #{classify_forward.1} parent=1 // pred_check
      _
    $region15: #{classify_forward.1} parent=1 // pred_check_branch
      %39 = sbr.rel (0) target = $region17
    $region16: #{classify_forward.1} parent=1 // pred_region
      %s41 = ssub.s32 16384, 16384
      %42 = vsyncadd [#allocation6], %s41
      %s43 = sshll.u32 [#allocation5], 4
      %s44 = int_to_ptr.vmem [resolvable:$true] %s43
      %49 = dma.hbm_to_vmem [thread:$0]  %s3, 16384, %s44, [#allocation6], 256, 256, 16
    $region17: #{classify_forward.1} parent=1 // pred_fallthru
      _
    // Predicated region
    $region18: #{classify_forward.1} parent=1 // pred_check
      _
    $region19: #{classify_forward.1} parent=1 // pred_check_branch
      %51 = sbr.rel (0) target = $region21
    $region20: #{classify_forward.1} parent=1 // pred_region
      %s53 = ssub.s32 16384, 16384
      %54 = vsyncadd [#allocation6], %s53
      %s55 = sshll.u32 [#allocation7], 4
      %s56 = int_to_ptr.vmem [resolvable:$true] %s55
      %61 = dma.hbm_to_vmem [thread:$0]  %s4, 16384, %s56, [#allocation6], 256, 256, 16
    $region21: #{classify_forward.1} parent=1 // pred_fallthru
      _
    // Predicated region
    $region22: #{classify_forward.1} parent=1 // pred_check
      _
    $region23: #{classify_forward.1} parent=1 // pred_check_branch
      %63 = sbr.rel (0) target = $region25
    $region24: #{classify_forward.1} parent=1 // pred_region
      _
    $region25: #{classify_forward.1} parent=1 // pred_fallthru
      _
    // Predicated region
    $region26: #{classify_forward.1} parent=1 // pred_check
      _
    $region27: #{classify_forward.1} parent=1 // pred_check_branch
      %65 = sbr.rel (0) target = $region29
    $region28: #{classify_forward.1} parent=1 // pred_region
      %s67 = ssub.s32 32768, 32768
      %68 = vsyncadd [#allocation9], %s67
      %s69 = sshll.u32 [#allocation8], 4
      %s70 = int_to_ptr.vmem [resolvable:$true] %s69
      %75 = dma.hbm_to_vmem [thread:$0]  %s6, 32768, %s70, [#allocation9], 256, 256, 16
    $region29: #{classify_forward.1} parent=1 // pred_fallthru
      _
    // Predicated region
    $region30: #{classify_forward.1} parent=1 // pred_check
      _
    $region31: #{classify_forward.1} parent=1 // pred_check_branch
      %77 = sbr.rel (0) target = $region33
    $region32: #{classify_forward.1} parent=1 // pred_region
      _
    $region33: #{classify_forward.1} parent=1 // pred_fallthru
      _
    // Predicated region
    $region34: #{classify_forward.1} parent=1 // pred_check
      _
    $region35: #{classify_forward.1} parent=1 // pred_check_branch
      %79 = sbr.rel (0) target = $region37
    $region36: #{classify_forward.1} parent=1 // pred_region
      %s81 = ssub.s32 8192, 8192
      %82 = vsyncadd [#allocation9], %s81
      %s83 = sshll.u32 [#allocation10], 4
      %s84 = int_to_ptr.vmem [resolvable:$true] %s83
      %89 = dma.hbm_to_vmem [thread:$0]  %s8, 8192, %s84, [#allocation9], 128, 128, 8
    $region37: #{classify_forward.1} parent=1 // pred_fallthru
      _
    // Predicated region
    $region38: #{classify_forward.1} parent=1 // pred_check
      _
    $region39: #{classify_forward.1} parent=1 // pred_check_branch
      %91 = sbr.rel (0) target = $region41
    $region40: #{classify_forward.1} parent=1 // pred_region
      _
    $region41: #{classify_forward.1} parent=1 // pred_fallthru
      _
    // Predicated region
    $region42: #{classify_forward.1} parent=1 // pred_check
      _
    $region43: #{classify_forward.1} parent=1 // pred_check_branch
      %93 = sbr.rel (0) target = $region45
    $region44: #{classify_forward.1} parent=1 // pred_region
      %s95 = ssub.s32 2048, 2048
      %96 = vsyncadd [#allocation12], %s95
      %s97 = sshll.u32 [#allocation11], 4
      %s98 = int_to_ptr.vmem [resolvable:$true] %s97
      %103 = dma.hbm_to_vmem [thread:$0]  %s10, 2048, %s98, [#allocation12], 64, 64, 4
    $region45: #{classify_forward.1} parent=1 // pred_fallthru
      _
    // Predicated region
    $region46: #{classify_forward.1} parent=1 // pred_check
      _
    $region47: #{classify_forward.1} parent=1 // pred_check_branch
      %105 = sbr.rel (0) target = $region49
    $region48: #{classify_forward.1} parent=1 // pred_region
      _
    $region49: #{classify_forward.1} parent=1 // pred_fallthru
      _
    // Predicated region
    $region50: #{classify_forward.1} parent=1 // pred_check
      _
    $region51: #{classify_forward.1} parent=1 // pred_check_branch
      %107 = sbr.rel (0) target = $region53
    $region52: #{classify_forward.1} parent=1 // pred_region
      %108 = dma.done [#allocation3], 20480
    $region53: #{classify_forward.1} parent=1 // pred_fallthru
      _
    // Predicated region
    $region54: #{classify_forward.1} parent=1 // pred_check
      _
    $region55: #{classify_forward.1} parent=1 // pred_check_branch
      %110 = sbr.rel (0) target = $region57
    $region56: #{classify_forward.1} parent=1 // pred_region
      %111 = dma.done [#allocation6], 16384
    $region57: #{classify_forward.1} parent=1 // pred_fallthru
      _
    // Predicated region
    $region58: #{classify_forward.1} parent=1 // pred_check
      _
    $region59: #{classify_forward.1} parent=1 // pred_check_branch
      %113 = sbr.rel (0) target = $region61
    $region60: #{classify_forward.1} parent=1 // pred_region
      %114 = dma.done [#allocation6], 16384
    $region61: #{classify_forward.1} parent=1 // pred_fallthru
      _
    // Predicated region
    $region62: #{classify_forward.1} parent=1 // pred_check
      _
    $region63: #{classify_forward.1} parent=1 // pred_check_branch
      %116 = sbr.rel (0) target = $region65
    $region64: #{classify_forward.1} parent=1 // pred_region
      %117 = dma.done [#allocation9], 32768
    $region65: #{classify_forward.1} parent=1 // pred_fallthru
      _
    // Predicated region
    $region66: #{classify_forward.1} parent=1 // pred_check
      _
    $region67: #{classify_forward.1} parent=1 // pred_check_branch
      %119 = sbr.rel (0) target = $region69
    $region68: #{classify_forward.1} parent=1 // pred_region
      %120 = dma.done [#allocation9], 8192
    $region69: #{classify_forward.1} parent=1 // pred_fallthru
      _
    // Predicated region
    $region70: #{classify_forward.1} parent=1 // pred_check
      _
    $region71: #{classify_forward.1} parent=1 // pred_check_branch
      %122 = sbr.rel (0) target = $region73
    $region72: #{classify_forward.1} parent=1 // pred_region
      %123 = dma.done [#allocation12], 2048
    $region73: #{classify_forward.1} parent=1 // pred_fallthru
      _
    %v125 = vld [vmem:[%s0] sm:$0xff]
    %v126 = vld [vmem:[#allocation2] sm:$0xff]
    %v127 = vld [vmem:[#allocation2 + $0x8] sm:$0xff]
    %v128 = vld [vmem:[#allocation2 + $0x10] sm:$0xff]
    %v129 = vld [vmem:[#allocation2 + $0x18] sm:$0xff]
    %v130 = vld [vmem:[#allocation2 + $0x20] sm:$0xff]
    %v131 = vld [vmem:[#allocation2 + $0x28] sm:$0xff]
    %v132 = vld [vmem:[#allocation2 + $0x30] sm:$0xff]
    %v133 = vld [vmem:[#allocation2 + $0x38] sm:$0xff]
    %v134 = vld [vmem:[#allocation2 + $0x40] sm:$0xff]
    %v135 = vld [vmem:[#allocation2 + $0x48] sm:$0xff]
    %v136 = vld [vmem:[#allocation2 + $0x50] sm:$0xff]
    %v137 = vld [vmem:[#allocation2 + $0x58] sm:$0xff]
    %v138 = vld [vmem:[#allocation2 + $0x60] sm:$0xff]
    %v139 = vld [vmem:[#allocation2 + $0x68] sm:$0xff]
    %v140 = vld [vmem:[#allocation2 + $0x70] sm:$0xff]
    %v141 = vld [vmem:[#allocation2 + $0x78] sm:$0xff]
    %v142 = vld [vmem:[#allocation2 + $0x80] sm:$0xff]
    %v143 = vld [vmem:[#allocation2 + $0x88] sm:$0xff]
    %v144 = vld [vmem:[#allocation2 + $0x90] sm:$0xff]
    %v145 = vld [vmem:[#allocation2 + $0x98] sm:$0xff]
    %v146 = vld [vmem:[#allocation2 + $0xa0] sm:$0xff]
    %v147 = vld [vmem:[#allocation2 + $0xa8] sm:$0xff]
    %v148 = vld [vmem:[#allocation2 + $0xb0] sm:$0xff]
    %v149 = vld [vmem:[#allocation2 + $0xb8] sm:$0xff]
    %v150 = vld [vmem:[#allocation2 + $0xc0] sm:$0xff]
    %v151 = vld [vmem:[#allocation2 + $0xc8] sm:$0xff]
    %v152 = vld [vmem:[#allocation2 + $0xd0] sm:$0xff]
    %v153 = vld [vmem:[#allocation2 + $0xd8] sm:$0xff]
    %v154 = vld [vmem:[#allocation2 + $0xe0] sm:$0xff]
    %v155 = vld [vmem:[#allocation2 + $0xe8] sm:$0xff]
    %v156 = vld [vmem:[#allocation2 + $0xf0] sm:$0xff]
    %v157 = vld [vmem:[#allocation2 + $0xf8] sm:$0xff]
    %v158 = vld [vmem:[#allocation2 + $0x100] sm:$0xff]
    %v159 = vld [vmem:[#allocation2 + $0x108] sm:$0xff]
    %v160 = vld [vmem:[#allocation2 + $0x110] sm:$0xff]
    %v161 = vld [vmem:[#allocation2 + $0x118] sm:$0xff]
    %v162 = vld [vmem:[#allocation2 + $0x120] sm:$0xff]
    %v163 = vld [vmem:[#allocation2 + $0x128] sm:$0xff]
    %v164 = vld [vmem:[#allocation2 + $0x130] sm:$0xff]
    %v165 = vld [vmem:[#allocation2 + $0x138] sm:$0xff]
    %v166 = vld [vmem:[#allocation2 + $0x140] sm:$0xff]
    %v167 = vld [vmem:[#allocation2 + $0x148] sm:$0xff]
    %v168 = vld [vmem:[#allocation2 + $0x150] sm:$0xff]
    %v169 = vld [vmem:[#allocation2 + $0x158] sm:$0xff]
    %v170 = vld [vmem:[#allocation2 + $0x160] sm:$0xff]
    %v171 = vld [vmem:[#allocation2 + $0x168] sm:$0xff]
    %v172 = vld [vmem:[#allocation2 + $0x170] sm:$0xff]
    %v173 = vld [vmem:[#allocation2 + $0x178] sm:$0xff]
    %v174 = vld [vmem:[#allocation2 + $0x180] sm:$0xff]
    %v175 = vld [vmem:[#allocation2 + $0x188] sm:$0xff]
    %v176 = vld [vmem:[#allocation2 + $0x190] sm:$0xff]
    %v177 = vld [vmem:[#allocation2 + $0x198] sm:$0xff]
    %v178 = vld [vmem:[#allocation2 + $0x1a0] sm:$0xff]
    %v179 = vld [vmem:[#allocation2 + $0x1a8] sm:$0xff]
    %v180 = vld [vmem:[#allocation2 + $0x1b0] sm:$0xff]
    %v181 = vld [vmem:[#allocation2 + $0x1b8] sm:$0xff]
    %v182 = vld [vmem:[#allocation2 + $0x1c0] sm:$0xff]
    %v183 = vld [vmem:[#allocation2 + $0x1c8] sm:$0xff]
    %v184 = vld [vmem:[#allocation2 + $0x1d0] sm:$0xff]
    %v185 = vld [vmem:[#allocation2 + $0x1d8] sm:$0xff]
    %v186 = vld [vmem:[#allocation2 + $0x1e0] sm:$0xff]
    %v187 = vld [vmem:[#allocation2 + $0x1e8] sm:$0xff]
    %v188 = vld [vmem:[#allocation2 + $0x1f0] sm:$0xff]
    %v189 = vld [vmem:[#allocation2 + $0x1f8] sm:$0xff]
    %v190 = vld [vmem:[#allocation2 + $0x200] sm:$0xff]
    %v191 = vld [vmem:[#allocation2 + $0x208] sm:$0xff]
    %v192 = vld [vmem:[#allocation2 + $0x210] sm:$0xff]
    %v193 = vld [vmem:[#allocation2 + $0x218] sm:$0xff]
    %v194 = vld [vmem:[#allocation2 + $0x220] sm:$0xff]
    %v195 = vld [vmem:[#allocation2 + $0x228] sm:$0xff]
    %v196 = vld [vmem:[#allocation2 + $0x230] sm:$0xff]
    %v197 = vld [vmem:[#allocation2 + $0x238] sm:$0xff]
    %v198 = vld [vmem:[#allocation2 + $0x240] sm:$0xff]
    %v199 = vld [vmem:[#allocation2 + $0x248] sm:$0xff]
    %v200 = vld [vmem:[#allocation2 + $0x250] sm:$0xff]
    %v201 = vld [vmem:[#allocation2 + $0x258] sm:$0xff]
    %v202 = vld [vmem:[#allocation2 + $0x260] sm:$0xff]
    %v203 = vld [vmem:[#allocation2 + $0x268] sm:$0xff]
    %v204 = vld [vmem:[#allocation2 + $0x270] sm:$0xff]
    %v205 = vld [vmem:[#allocation2 + $0x278] sm:$0xff]
    %v206 = vld [vmem:[#allocation2 + $0x280] sm:$0xff]
    %v207 = vld [vmem:[#allocation2 + $0x288] sm:$0xff]
    %v208 = vld [vmem:[#allocation2 + $0x290] sm:$0xff]
    %v209 = vld [vmem:[#allocation2 + $0x298] sm:$0xff]
    %v210 = vld [vmem:[#allocation2 + $0x2a0] sm:$0xff]
    %v211 = vld [vmem:[#allocation2 + $0x2a8] sm:$0xff]
    %v212 = vld [vmem:[#allocation2 + $0x2b0] sm:$0xff]
    %v213 = vld [vmem:[#allocation2 + $0x2b8] sm:$0xff]
    %v214 = vld [vmem:[#allocation2 + $0x2c0] sm:$0xff]
    %v215 = vld [vmem:[#allocation2 + $0x2c8] sm:$0xff]
    %v216 = vld [vmem:[#allocation2 + $0x2d0] sm:$0xff]
    %v217 = vld [vmem:[#allocation2 + $0x2d8] sm:$0xff]
    %v218 = vld [vmem:[#allocation2 + $0x2e0] sm:$0xff]
    %v219 = vld [vmem:[#allocation2 + $0x2e8] sm:$0xff]
    %v220 = vld [vmem:[#allocation2 + $0x2f0] sm:$0xff]
    %v221 = vld [vmem:[#allocation2 + $0x2f8] sm:$0xff]
    %v222 = vld [vmem:[#allocation2 + $0x300] sm:$0xff]
    %v223 = vld [vmem:[#allocation2 + $0x308] sm:$0xff]
    %v224 = vld [vmem:[#allocation2 + $0x310] sm:$0xff]
    %v225 = vld [vmem:[#allocation2 + $0x318] sm:$0xff]
    %v226 = vld [vmem:[#allocation2 + $0x320] sm:$0xff]
    %v227 = vld [vmem:[#allocation2 + $0x328] sm:$0xff]
    %v228 = vld [vmem:[#allocation2 + $0x330] sm:$0xff]
    %v229 = vld [vmem:[#allocation2 + $0x338] sm:$0xff]
    %v230 = vld [vmem:[#allocation2 + $0x340] sm:$0xff]
    %v231 = vld [vmem:[#allocation2 + $0x348] sm:$0xff]
    %v232 = vld [vmem:[#allocation2 + $0x350] sm:$0xff]
    %v233 = vld [vmem:[#allocation2 + $0x358] sm:$0xff]
    %v234 = vld [vmem:[#allocation2 + $0x360] sm:$0xff]
    %v235 = vld [vmem:[#allocation2 + $0x368] sm:$0xff]
    %v236 = vld [vmem:[#allocation2 + $0x370] sm:$0xff]
    %v237 = vld [vmem:[#allocation2 + $0x378] sm:$0xff]
    %v238 = vld [vmem:[#allocation2 + $0x380] sm:$0xff]
    %v239 = vld [vmem:[#allocation2 + $0x388] sm:$0xff]
    %v240 = vld [vmem:[#allocation2 + $0x390] sm:$0xff]
    %v241 = vld [vmem:[#allocation2 + $0x398] sm:$0xff]
    %v242 = vld [vmem:[#allocation2 + $0x3a0] sm:$0xff]
    %v243 = vld [vmem:[#allocation2 + $0x3a8] sm:$0xff]
    %v244 = vld [vmem:[#allocation2 + $0x3b0] sm:$0xff]
    %v245 = vld [vmem:[#allocation2 + $0x3b8] sm:$0xff]
    %v246 = vld [vmem:[#allocation2 + $0x3c0] sm:$0xff]
    %v247 = vld [vmem:[#allocation2 + $0x3c8] sm:$0xff]
    %v248 = vld [vmem:[#allocation2 + $0x3d0] sm:$0xff]
    %v249 = vld [vmem:[#allocation2 + $0x3d8] sm:$0xff]
    %v250 = vld [vmem:[#allocation2 + $0x3e0] sm:$0xff]
    %v251 = vld [vmem:[#allocation2 + $0x3e8] sm:$0xff]
    %v252 = vld [vmem:[#allocation2 + $0x3f0] sm:$0xff]
    %v253 = vld [vmem:[#allocation2 + $0x3f8] sm:$0xff]
    %v254 = vld [vmem:[#allocation2 + $0x400] sm:$0xff]
    %v255 = vld [vmem:[#allocation2 + $0x408] sm:$0xff]
    %v256 = vld [vmem:[#allocation2 + $0x410] sm:$0xff]
    %v257 = vld [vmem:[#allocation2 + $0x418] sm:$0xff]
    %v258 = vld [vmem:[#allocation2 + $0x420] sm:$0xff]
    %v259 = vld [vmem:[#allocation2 + $0x428] sm:$0xff]
    %v260 = vld [vmem:[#allocation2 + $0x430] sm:$0xff]
    %v261 = vld [vmem:[#allocation2 + $0x438] sm:$0xff]
    %v262 = vld [vmem:[#allocation2 + $0x440] sm:$0xff]
    %v263 = vld [vmem:[#allocation2 + $0x448] sm:$0xff]
    %v264 = vld [vmem:[#allocation2 + $0x450] sm:$0xff]
    %v265 = vld [vmem:[#allocation2 + $0x458] sm:$0xff]
    %v266 = vld [vmem:[#allocation2 + $0x460] sm:$0xff]
    %v267 = vld [vmem:[#allocation2 + $0x468] sm:$0xff]
    %v268 = vld [vmem:[#allocation2 + $0x470] sm:$0xff]
    %v269 = vld [vmem:[#allocation2 + $0x478] sm:$0xff]
    %v270 = vld [vmem:[#allocation2 + $0x480] sm:$0xff]
    %v271 = vld [vmem:[#allocation2 + $0x488] sm:$0xff]
    %v272 = vld [vmem:[#allocation2 + $0x490] sm:$0xff]
    %v273 = vld [vmem:[#allocation2 + $0x498] sm:$0xff]
    %v274 = vld [vmem:[#allocation2 + $0x4a0] sm:$0xff]
    %v275 = vld [vmem:[#allocation2 + $0x4a8] sm:$0xff]
    %v276 = vld [vmem:[#allocation2 + $0x4b0] sm:$0xff]
    %v277 = vld [vmem:[#allocation2 + $0x4b8] sm:$0xff]
    %v278 = vld [vmem:[#allocation2 + $0x4c0] sm:$0xff]
    %v279 = vld [vmem:[#allocation2 + $0x4c8] sm:$0xff]
    %v280 = vld [vmem:[#allocation2 + $0x4d0] sm:$0xff]
    %v281 = vld [vmem:[#allocation2 + $0x4d8] sm:$0xff]
    %v282 = vld [vmem:[#allocation2 + $0x4e0] sm:$0xff]
    %v283 = vld [vmem:[#allocation2 + $0x4e8] sm:$0xff]
    %v284 = vld [vmem:[#allocation2 + $0x4f0] sm:$0xff]
    %v285 = vld [vmem:[#allocation2 + $0x4f8] sm:$0xff]
    %v286 = vld [vmem:[%s2] sm:$0xff]
    %v287 = vld [vmem:[%s2 + $0x8] sm:$0xff]
    %v290 = vlaneseq
    %v291 = vshrl.u32 %v290, 7
    %v292 = vsub.s32 0, %v291
    %v293 = vrot.slane %v286, %v292
    %v294 = vlaneseq
    %v295 = vshrl.u32 %v294, 7
    %v296 = vsub.s32 1, %v295
    %v297 = vrot.slane %v286, %v296
    %v298 = vlaneseq
    %v299 = vshrl.u32 %v298, 7
    %v300 = vsub.s32 2, %v299
    %v301 = vrot.slane %v286, %v300
    %v302 = vlaneseq
    %v303 = vshrl.u32 %v302, 7
    %v304 = vsub.s32 3, %v303
    %v305 = vrot.slane %v286, %v304
    %v306 = vlaneseq
    %v307 = vshrl.u32 %v306, 7
    %v308 = vsub.s32 4, %v307
    %v309 = vrot.slane %v286, %v308
    %v310 = vlaneseq
    %v311 = vshrl.u32 %v310, 7
    %v312 = vsub.s32 5, %v311
    %v313 = vrot.slane %v286, %v312
    %v314 = vlaneseq
    %v315 = vshrl.u32 %v314, 7
    %v316 = vsub.s32 6, %v315
    %v317 = vrot.slane %v286, %v316
    %v318 = vlaneseq
    %v319 = vshrl.u32 %v318, 7
    %v320 = vsub.s32 7, %v319
    %v321 = vrot.slane %v286, %v320
    %v322 = vlaneseq
    %v323 = vshrl.u32 %v322, 7
    %v324 = vsub.s32 0, %v323
    %v325 = vrot.slane %v287, %v324
    %v326 = vlaneseq
    %v327 = vshrl.u32 %v326, 7
    %v328 = vsub.s32 1, %v327
    %v329 = vrot.slane %v287, %v328
    %v330 = vlaneseq
    %v331 = vshrl.u32 %v330, 7
    %v332 = vsub.s32 2, %v331
    %v333 = vrot.slane %v287, %v332
    %v334 = vlaneseq
    %v335 = vshrl.u32 %v334, 7
    %v336 = vsub.s32 3, %v335
    %v337 = vrot.slane %v287, %v336
    %v338 = vlaneseq
    %v339 = vshrl.u32 %v338, 7
    %v340 = vsub.s32 4, %v339
    %v341 = vrot.slane %v287, %v340
    %v342 = vlaneseq
    %v343 = vshrl.u32 %v342, 7
    %v344 = vsub.s32 5, %v343
    %v345 = vrot.slane %v287, %v344
    %v346 = vlaneseq
    %v347 = vshrl.u32 %v346, 7
    %v348 = vsub.s32 6, %v347
    %v349 = vrot.slane %v287, %v348
    %v350 = vlaneseq
    %v351 = vshrl.u32 %v350, 7
    %v352 = vsub.s32 7, %v351
    %v353 = vrot.slane %v287, %v352
    %v371 = vunpack.c.l.b16 %v125
    %v372 = vunpack.c.h.b16 %v125
    %v373 = vpack.c.b16 %v371, %v371
    %v374 = vpack.c.b16 %v372, %v372
    %v536 = vunpack.c.l.b16 %v126
    %v537 = vunpack.c.h.b16 %v126
    %v538 = vunpack.c.l.b16 %v127
    %v539 = vunpack.c.h.b16 %v127
    %v540 = vunpack.c.l.b16 %v128
    %v541 = vunpack.c.h.b16 %v128
    %v542 = vunpack.c.l.b16 %v129
    %v543 = vunpack.c.h.b16 %v129
    %v544 = vunpack.c.l.b16 %v130
    %v545 = vunpack.c.h.b16 %v130
    %v546 = vunpack.c.l.b16 %v131
    %v547 = vunpack.c.h.b16 %v131
    %v548 = vunpack.c.l.b16 %v132
    %v549 = vunpack.c.h.b16 %v132
    %v550 = vunpack.c.l.b16 %v133
    %v551 = vunpack.c.h.b16 %v133
    %v552 = vunpack.c.l.b16 %v134
    %v553 = vunpack.c.h.b16 %v134
    %v554 = vunpack.c.l.b16 %v135
    %v555 = vunpack.c.h.b16 %v135
    %v556 = vunpack.c.l.b16 %v136
    %v557 = vunpack.c.h.b16 %v136
    %v558 = vunpack.c.l.b16 %v137
    %v559 = vunpack.c.h.b16 %v137
    %v560 = vunpack.c.l.b16 %v138
    %v561 = vunpack.c.h.b16 %v138
    %v562 = vunpack.c.l.b16 %v139
    %v563 = vunpack.c.h.b16 %v139
    %v564 = vunpack.c.l.b16 %v140
    %v565 = vunpack.c.h.b16 %v140
    %v566 = vunpack.c.l.b16 %v141
    %v567 = vunpack.c.h.b16 %v141
    %v568 = vunpack.c.l.b16 %v142
    %v569 = vunpack.c.h.b16 %v142
    %v570 = vunpack.c.l.b16 %v143
    %v571 = vunpack.c.h.b16 %v143
    %v572 = vunpack.c.l.b16 %v144
    %v573 = vunpack.c.h.b16 %v144
    %v574 = vunpack.c.l.b16 %v145
    %v575 = vunpack.c.h.b16 %v145
    %v576 = vunpack.c.l.b16 %v146
    %v577 = vunpack.c.h.b16 %v146
    %v578 = vunpack.c.l.b16 %v147
    %v579 = vunpack.c.h.b16 %v147
    %v580 = vunpack.c.l.b16 %v148
    %v581 = vunpack.c.h.b16 %v148
    %v582 = vunpack.c.l.b16 %v149
    %v583 = vunpack.c.h.b16 %v149
    %v584 = vunpack.c.l.b16 %v150
    %v585 = vunpack.c.h.b16 %v150
    %v586 = vunpack.c.l.b16 %v151
    %v587 = vunpack.c.h.b16 %v151
    %v588 = vunpack.c.l.b16 %v152
    %v589 = vunpack.c.h.b16 %v152
    %v590 = vunpack.c.l.b16 %v153
    %v591 = vunpack.c.h.b16 %v153
    %v592 = vunpack.c.l.b16 %v154
    %v593 = vunpack.c.h.b16 %v154
    %v594 = vunpack.c.l.b16 %v155
    %v595 = vunpack.c.h.b16 %v155
    %v596 = vunpack.c.l.b16 %v156
    %v597 = vunpack.c.h.b16 %v156
    %v598 = vunpack.c.l.b16 %v157
    %v599 = vunpack.c.h.b16 %v157
    %v600 = vunpack.c.l.b16 %v158
    %v601 = vunpack.c.h.b16 %v158
    %v602 = vunpack.c.l.b16 %v159
    %v603 = vunpack.c.h.b16 %v159
    %v604 = vunpack.c.l.b16 %v160
    %v605 = vunpack.c.h.b16 %v160
    %v606 = vunpack.c.l.b16 %v161
    %v607 = vunpack.c.h.b16 %v161
    %v608 = vunpack.c.l.b16 %v162
    %v609 = vunpack.c.h.b16 %v162
    %v610 = vunpack.c.l.b16 %v163
    %v611 = vunpack.c.h.b16 %v163
    %v612 = vunpack.c.l.b16 %v164
    %v613 = vunpack.c.h.b16 %v164
    %v614 = vunpack.c.l.b16 %v165
    %v615 = vunpack.c.h.b16 %v165
    %v616 = vunpack.c.l.b16 %v166
    %v617 = vunpack.c.h.b16 %v166
    %v618 = vunpack.c.l.b16 %v167
    %v619 = vunpack.c.h.b16 %v167
    %v620 = vunpack.c.l.b16 %v168
    %v621 = vunpack.c.h.b16 %v168
    %v622 = vunpack.c.l.b16 %v169
    %v623 = vunpack.c.h.b16 %v169
    %v624 = vunpack.c.l.b16 %v170
    %v625 = vunpack.c.h.b16 %v170
    %v626 = vunpack.c.l.b16 %v171
    %v627 = vunpack.c.h.b16 %v171
    %v628 = vunpack.c.l.b16 %v172
    %v629 = vunpack.c.h.b16 %v172
    %v630 = vunpack.c.l.b16 %v173
    %v631 = vunpack.c.h.b16 %v173
    %v632 = vunpack.c.l.b16 %v174
    %v633 = vunpack.c.h.b16 %v174
    %v634 = vunpack.c.l.b16 %v175
    %v635 = vunpack.c.h.b16 %v175
    %v636 = vunpack.c.l.b16 %v176
    %v637 = vunpack.c.h.b16 %v176
    %v638 = vunpack.c.l.b16 %v177
    %v639 = vunpack.c.h.b16 %v177
    %v640 = vunpack.c.l.b16 %v178
    %v641 = vunpack.c.h.b16 %v178
    %v642 = vunpack.c.l.b16 %v179
    %v643 = vunpack.c.h.b16 %v179
    %v644 = vunpack.c.l.b16 %v180
    %v645 = vunpack.c.h.b16 %v180
    %v646 = vunpack.c.l.b16 %v181
    %v647 = vunpack.c.h.b16 %v181
    %v648 = vunpack.c.l.b16 %v182
    %v649 = vunpack.c.h.b16 %v182
    %v650 = vunpack.c.l.b16 %v183
    %v651 = vunpack.c.h.b16 %v183
    %v652 = vunpack.c.l.b16 %v184
    %v653 = vunpack.c.h.b16 %v184
    %v654 = vunpack.c.l.b16 %v185
    %v655 = vunpack.c.h.b16 %v185
    %v656 = vunpack.c.l.b16 %v186
    %v657 = vunpack.c.h.b16 %v186
    %v658 = vunpack.c.l.b16 %v187
    %v659 = vunpack.c.h.b16 %v187
    %v660 = vunpack.c.l.b16 %v188
    %v661 = vunpack.c.h.b16 %v188
    %v662 = vunpack.c.l.b16 %v189
    %v663 = vunpack.c.h.b16 %v189
    %v664 = vunpack.c.l.b16 %v190
    %v665 = vunpack.c.h.b16 %v190
    %v666 = vunpack.c.l.b16 %v191
    %v667 = vunpack.c.h.b16 %v191
    %v668 = vunpack.c.l.b16 %v192
    %v669 = vunpack.c.h.b16 %v192
    %v670 = vunpack.c.l.b16 %v193
    %v671 = vunpack.c.h.b16 %v193
    %v672 = vunpack.c.l.b16 %v194
    %v673 = vunpack.c.h.b16 %v194
    %v674 = vunpack.c.l.b16 %v195
    %v675 = vunpack.c.h.b16 %v195
    %v676 = vunpack.c.l.b16 %v196
    %v677 = vunpack.c.h.b16 %v196
    %v678 = vunpack.c.l.b16 %v197
    %v679 = vunpack.c.h.b16 %v197
    %v680 = vunpack.c.l.b16 %v198
    %v681 = vunpack.c.h.b16 %v198
    %v682 = vunpack.c.l.b16 %v199
    %v683 = vunpack.c.h.b16 %v199
    %v684 = vunpack.c.l.b16 %v200
    %v685 = vunpack.c.h.b16 %v200
    %v686 = vunpack.c.l.b16 %v201
    %v687 = vunpack.c.h.b16 %v201
    %v688 = vunpack.c.l.b16 %v202
    %v689 = vunpack.c.h.b16 %v202
    %v690 = vunpack.c.l.b16 %v203
    %v691 = vunpack.c.h.b16 %v203
    %v692 = vunpack.c.l.b16 %v204
    %v693 = vunpack.c.h.b16 %v204
    %v694 = vunpack.c.l.b16 %v205
    %v695 = vunpack.c.h.b16 %v205
    %v696 = vunpack.c.l.b16 %v206
    %v697 = vunpack.c.h.b16 %v206
    %v698 = vunpack.c.l.b16 %v207
    %v699 = vunpack.c.h.b16 %v207
    %v700 = vunpack.c.l.b16 %v208
    %v701 = vunpack.c.h.b16 %v208
    %v702 = vunpack.c.l.b16 %v209
    %v703 = vunpack.c.h.b16 %v209
    %v704 = vunpack.c.l.b16 %v210
    %v705 = vunpack.c.h.b16 %v210
    %v706 = vunpack.c.l.b16 %v211
    %v707 = vunpack.c.h.b16 %v211
    %v708 = vunpack.c.l.b16 %v212
    %v709 = vunpack.c.h.b16 %v212
    %v710 = vunpack.c.l.b16 %v213
    %v711 = vunpack.c.h.b16 %v213
    %v712 = vunpack.c.l.b16 %v214
    %v713 = vunpack.c.h.b16 %v214
    %v714 = vunpack.c.l.b16 %v215
    %v715 = vunpack.c.h.b16 %v215
    %v716 = vunpack.c.l.b16 %v216
    %v717 = vunpack.c.h.b16 %v216
    %v718 = vunpack.c.l.b16 %v217
    %v719 = vunpack.c.h.b16 %v217
    %v720 = vunpack.c.l.b16 %v218
    %v721 = vunpack.c.h.b16 %v218
    %v722 = vunpack.c.l.b16 %v219
    %v723 = vunpack.c.h.b16 %v219
    %v724 = vunpack.c.l.b16 %v220
    %v725 = vunpack.c.h.b16 %v220
    %v726 = vunpack.c.l.b16 %v221
    %v727 = vunpack.c.h.b16 %v221
    %v728 = vunpack.c.l.b16 %v222
    %v729 = vunpack.c.h.b16 %v222
    %v730 = vunpack.c.l.b16 %v223
    %v731 = vunpack.c.h.b16 %v223
    %v732 = vunpack.c.l.b16 %v224
    %v733 = vunpack.c.h.b16 %v224
    %v734 = vunpack.c.l.b16 %v225
    %v735 = vunpack.c.h.b16 %v225
    %v736 = vunpack.c.l.b16 %v226
    %v737 = vunpack.c.h.b16 %v226
    %v738 = vunpack.c.l.b16 %v227
    %v739 = vunpack.c.h.b16 %v227
    %v740 = vunpack.c.l.b16 %v228
    %v741 = vunpack.c.h.b16 %v228
    %v742 = vunpack.c.l.b16 %v229
    %v743 = vunpack.c.h.b16 %v229
    %v744 = vunpack.c.l.b16 %v230
    %v745 = vunpack.c.h.b16 %v230
    %v746 = vunpack.c.l.b16 %v231
    %v747 = vunpack.c.h.b16 %v231
    %v748 = vunpack.c.l.b16 %v232
    %v749 = vunpack.c.h.b16 %v232
    %v750 = vunpack.c.l.b16 %v233
    %v751 = vunpack.c.h.b16 %v233
    %v752 = vunpack.c.l.b16 %v234
    %v753 = vunpack.c.h.b16 %v234
    %v754 = vunpack.c.l.b16 %v235
    %v755 = vunpack.c.h.b16 %v235
    %v756 = vunpack.c.l.b16 %v236
    %v757 = vunpack.c.h.b16 %v236
    %v758 = vunpack.c.l.b16 %v237
    %v759 = vunpack.c.h.b16 %v237
    %v760 = vunpack.c.l.b16 %v238
    %v761 = vunpack.c.h.b16 %v238
    %v762 = vunpack.c.l.b16 %v239
    %v763 = vunpack.c.h.b16 %v239
    %v764 = vunpack.c.l.b16 %v240
    %v765 = vunpack.c.h.b16 %v240
    %v766 = vunpack.c.l.b16 %v241
    %v767 = vunpack.c.h.b16 %v241
    %v768 = vunpack.c.l.b16 %v242
    %v769 = vunpack.c.h.b16 %v242
    %v770 = vunpack.c.l.b16 %v243
    %v771 = vunpack.c.h.b16 %v243
    %v772 = vunpack.c.l.b16 %v244
    %v773 = vunpack.c.h.b16 %v244
    %v774 = vunpack.c.l.b16 %v245
    %v775 = vunpack.c.h.b16 %v245
    %v776 = vunpack.c.l.b16 %v246
    %v777 = vunpack.c.h.b16 %v246
    %v778 = vunpack.c.l.b16 %v247
    %v779 = vunpack.c.h.b16 %v247
    %v780 = vunpack.c.l.b16 %v248
    %v781 = vunpack.c.h.b16 %v248
    %v782 = vunpack.c.l.b16 %v249
    %v783 = vunpack.c.h.b16 %v249
    %v784 = vunpack.c.l.b16 %v250
    %v785 = vunpack.c.h.b16 %v250
    %v786 = vunpack.c.l.b16 %v251
    %v787 = vunpack.c.h.b16 %v251
    %v788 = vunpack.c.l.b16 %v252
    %v789 = vunpack.c.h.b16 %v252
    %v790 = vunpack.c.l.b16 %v253
    %v791 = vunpack.c.h.b16 %v253
    %v792 = vunpack.c.l.b16 %v254
    %v793 = vunpack.c.h.b16 %v254
    %v794 = vunpack.c.l.b16 %v255
    %v795 = vunpack.c.h.b16 %v255
    %v796 = vunpack.c.l.b16 %v256
    %v797 = vunpack.c.h.b16 %v256
    %v798 = vunpack.c.l.b16 %v257
    %v799 = vunpack.c.h.b16 %v257
    %v800 = vunpack.c.l.b16 %v258
    %v801 = vunpack.c.h.b16 %v258
    %v802 = vunpack.c.l.b16 %v259
    %v803 = vunpack.c.h.b16 %v259
    %v804 = vunpack.c.l.b16 %v260
    %v805 = vunpack.c.h.b16 %v260
    %v806 = vunpack.c.l.b16 %v261
    %v807 = vunpack.c.h.b16 %v261
    %v808 = vunpack.c.l.b16 %v262
    %v809 = vunpack.c.h.b16 %v262
    %v810 = vunpack.c.l.b16 %v263
    %v811 = vunpack.c.h.b16 %v263
    %v812 = vunpack.c.l.b16 %v264
    %v813 = vunpack.c.h.b16 %v264
    %v814 = vunpack.c.l.b16 %v265
    %v815 = vunpack.c.h.b16 %v265
    %v816 = vunpack.c.l.b16 %v266
    %v817 = vunpack.c.h.b16 %v266
    %v818 = vunpack.c.l.b16 %v267
    %v819 = vunpack.c.h.b16 %v267
    %v820 = vunpack.c.l.b16 %v268
    %v821 = vunpack.c.h.b16 %v268
    %v822 = vunpack.c.l.b16 %v269
    %v823 = vunpack.c.h.b16 %v269
    %v824 = vunpack.c.l.b16 %v270
    %v825 = vunpack.c.h.b16 %v270
    %v826 = vunpack.c.l.b16 %v271
    %v827 = vunpack.c.h.b16 %v271
    %v828 = vunpack.c.l.b16 %v272
    %v829 = vunpack.c.h.b16 %v272
    %v830 = vunpack.c.l.b16 %v273
    %v831 = vunpack.c.h.b16 %v273
    %v832 = vunpack.c.l.b16 %v274
    %v833 = vunpack.c.h.b16 %v274
    %v834 = vunpack.c.l.b16 %v275
    %v835 = vunpack.c.h.b16 %v275
    %v836 = vunpack.c.l.b16 %v276
    %v837 = vunpack.c.h.b16 %v276
    %v838 = vunpack.c.l.b16 %v277
    %v839 = vunpack.c.h.b16 %v277
    %v840 = vunpack.c.l.b16 %v278
    %v841 = vunpack.c.h.b16 %v278
    %v842 = vunpack.c.l.b16 %v279
    %v843 = vunpack.c.h.b16 %v279
    %v844 = vunpack.c.l.b16 %v280
    %v845 = vunpack.c.h.b16 %v280
    %v846 = vunpack.c.l.b16 %v281
    %v847 = vunpack.c.h.b16 %v281
    %v848 = vunpack.c.l.b16 %v282
    %v849 = vunpack.c.h.b16 %v282
    %v850 = vunpack.c.l.b16 %v283
    %v851 = vunpack.c.h.b16 %v283
    %v852 = vunpack.c.l.b16 %v284
    %v853 = vunpack.c.h.b16 %v284
    %v854 = vunpack.c.l.b16 %v285
    %v855 = vunpack.c.h.b16 %v285
    %v856 = vpack.c.b16 %v552, %v536
    %v857 = vpack.c.b16 %v553, %v537
    %v858 = vpack.c.b16 %v554, %v538
    %v859 = vpack.c.b16 %v555, %v539
    %v860 = vpack.c.b16 %v556, %v540
    %v861 = vpack.c.b16 %v557, %v541
    %v862 = vpack.c.b16 %v558, %v542
    %v863 = vpack.c.b16 %v559, %v543
    %v864 = vpack.c.b16 %v560, %v544
    %v865 = vpack.c.b16 %v561, %v545
    %v866 = vpack.c.b16 %v562, %v546
    %v867 = vpack.c.b16 %v563, %v547
    %v868 = vpack.c.b16 %v564, %v548
    %v869 = vpack.c.b16 %v565, %v549
    %v870 = vpack.c.b16 %v566, %v550
    %v871 = vpack.c.b16 %v567, %v551
    %v872 = vpack.c.b16 %v584, %v568
    %v873 = vpack.c.b16 %v585, %v569
    %v874 = vpack.c.b16 %v586, %v570
    %v875 = vpack.c.b16 %v587, %v571
    %v876 = vpack.c.b16 %v588, %v572
    %v877 = vpack.c.b16 %v589, %v573
    %v878 = vpack.c.b16 %v590, %v574
    %v879 = vpack.c.b16 %v591, %v575
    %v880 = vpack.c.b16 %v592, %v576
    %v881 = vpack.c.b16 %v593, %v577
    %v882 = vpack.c.b16 %v594, %v578
    %v883 = vpack.c.b16 %v595, %v579
    %v884 = vpack.c.b16 %v596, %v580
    %v885 = vpack.c.b16 %v597, %v581
    %v886 = vpack.c.b16 %v598, %v582
    %v887 = vpack.c.b16 %v599, %v583
    %v888 = vpack.c.b16 %v616, %v600
    %v889 = vpack.c.b16 %v617, %v601
    %v890 = vpack.c.b16 %v618, %v602
    %v891 = vpack.c.b16 %v619, %v603
    %v892 = vpack.c.b16 %v620, %v604
    %v893 = vpack.c.b16 %v621, %v605
    %v894 = vpack.c.b16 %v622, %v606
    %v895 = vpack.c.b16 %v623, %v607
    %v896 = vpack.c.b16 %v624, %v608
    %v897 = vpack.c.b16 %v625, %v609
    %v898 = vpack.c.b16 %v626, %v610
    %v899 = vpack.c.b16 %v627, %v611
    %v900 = vpack.c.b16 %v628, %v612
    %v901 = vpack.c.b16 %v629, %v613
    %v902 = vpack.c.b16 %v630, %v614
    %v903 = vpack.c.b16 %v631, %v615
    %v904 = vpack.c.b16 %v648, %v632
    %v905 = vpack.c.b16 %v649, %v633
    %v906 = vpack.c.b16 %v650, %v634
    %v907 = vpack.c.b16 %v651, %v635
    %v908 = vpack.c.b16 %v652, %v636
    %v909 = vpack.c.b16 %v653, %v637
    %v910 = vpack.c.b16 %v654, %v638
    %v911 = vpack.c.b16 %v655, %v639
    %v912 = vpack.c.b16 %v656, %v640
    %v913 = vpack.c.b16 %v657, %v641
    %v914 = vpack.c.b16 %v658, %v642
    %v915 = vpack.c.b16 %v659, %v643
    %v916 = vpack.c.b16 %v660, %v644
    %v917 = vpack.c.b16 %v661, %v645
    %v918 = vpack.c.b16 %v662, %v646
    %v919 = vpack.c.b16 %v663, %v647
    %v920 = vpack.c.b16 %v680, %v664
    %v921 = vpack.c.b16 %v681, %v665
    %v922 = vpack.c.b16 %v682, %v666
    %v923 = vpack.c.b16 %v683, %v667
    %v924 = vpack.c.b16 %v684, %v668
    %v925 = vpack.c.b16 %v685, %v669
    %v926 = vpack.c.b16 %v686, %v670
    %v927 = vpack.c.b16 %v687, %v671
    %v928 = vpack.c.b16 %v688, %v672
    %v929 = vpack.c.b16 %v689, %v673
    %v930 = vpack.c.b16 %v690, %v674
    %v931 = vpack.c.b16 %v691, %v675
    %v932 = vpack.c.b16 %v692, %v676
    %v933 = vpack.c.b16 %v693, %v677
    %v934 = vpack.c.b16 %v694, %v678
    %v935 = vpack.c.b16 %v695, %v679
    %v936 = vpack.c.b16 %v712, %v696
    %v937 = vpack.c.b16 %v713, %v697
    %v938 = vpack.c.b16 %v714, %v698
    %v939 = vpack.c.b16 %v715, %v699
    %v940 = vpack.c.b16 %v716, %v700
    %v941 = vpack.c.b16 %v717, %v701
    %v942 = vpack.c.b16 %v718, %v702
    %v943 = vpack.c.b16 %v719, %v703
    %v944 = vpack.c.b16 %v720, %v704
    %v945 = vpack.c.b16 %v721, %v705
    %v946 = vpack.c.b16 %v722, %v706
    %v947 = vpack.c.b16 %v723, %v707
    %v948 = vpack.c.b16 %v724, %v708
    %v949 = vpack.c.b16 %v725, %v709
    %v950 = vpack.c.b16 %v726, %v710
    %v951 = vpack.c.b16 %v727, %v711
    %v952 = vpack.c.b16 %v744, %v728
    %v953 = vpack.c.b16 %v745, %v729
    %v954 = vpack.c.b16 %v746, %v730
    %v955 = vpack.c.b16 %v747, %v731
    %v956 = vpack.c.b16 %v748, %v732
    %v957 = vpack.c.b16 %v749, %v733
    %v958 = vpack.c.b16 %v750, %v734
    %v959 = vpack.c.b16 %v751, %v735
    %v960 = vpack.c.b16 %v752, %v736
    %v961 = vpack.c.b16 %v753, %v737
    %v962 = vpack.c.b16 %v754, %v738
    %v963 = vpack.c.b16 %v755, %v739
    %v964 = vpack.c.b16 %v756, %v740
    %v965 = vpack.c.b16 %v757, %v741
    %v966 = vpack.c.b16 %v758, %v742
    %v967 = vpack.c.b16 %v759, %v743
    %v968 = vpack.c.b16 %v776, %v760
    %v969 = vpack.c.b16 %v777, %v761
    %v970 = vpack.c.b16 %v778, %v762
    %v971 = vpack.c.b16 %v779, %v763
    %v972 = vpack.c.b16 %v780, %v764
    %v973 = vpack.c.b16 %v781, %v765
    %v974 = vpack.c.b16 %v782, %v766
    %v975 = vpack.c.b16 %v783, %v767
    %v976 = vpack.c.b16 %v784, %v768
    %v977 = vpack.c.b16 %v785, %v769
    %v978 = vpack.c.b16 %v786, %v770
    %v979 = vpack.c.b16 %v787, %v771
    %v980 = vpack.c.b16 %v788, %v772
    %v981 = vpack.c.b16 %v789, %v773
    %v982 = vpack.c.b16 %v790, %v774
    %v983 = vpack.c.b16 %v791, %v775
    %v984 = vpack.c.b16 %v808, %v792
    %v985 = vpack.c.b16 %v809, %v793
    %v986 = vpack.c.b16 %v810, %v794
    %v987 = vpack.c.b16 %v811, %v795
    %v988 = vpack.c.b16 %v812, %v796
    %v989 = vpack.c.b16 %v813, %v797
    %v990 = vpack.c.b16 %v814, %v798
    %v991 = vpack.c.b16 %v815, %v799
    %v992 = vpack.c.b16 %v816, %v800
    %v993 = vpack.c.b16 %v817, %v801
    %v994 = vpack.c.b16 %v818, %v802
    %v995 = vpack.c.b16 %v819, %v803
    %v996 = vpack.c.b16 %v820, %v804
    %v997 = vpack.c.b16 %v821, %v805
    %v998 = vpack.c.b16 %v822, %v806
    %v999 = vpack.c.b16 %v823, %v807
    %v1000 = vpack.c.b16 %v840, %v824
    %v1001 = vpack.c.b16 %v841, %v825
    %v1002 = vpack.c.b16 %v842, %v826
    %v1003 = vpack.c.b16 %v843, %v827
    %v1004 = vpack.c.b16 %v844, %v828
    %v1005 = vpack.c.b16 %v845, %v829
    %v1006 = vpack.c.b16 %v846, %v830
    %v1007 = vpack.c.b16 %v847, %v831
    %v1008 = vpack.c.b16 %v848, %v832
    %v1009 = vpack.c.b16 %v849, %v833
    %v1010 = vpack.c.b16 %v850, %v834
    %v1011 = vpack.c.b16 %v851, %v835
    %v1012 = vpack.c.b16 %v852, %v836
    %v1013 = vpack.c.b16 %v853, %v837
    %v1014 = vpack.c.b16 %v854, %v838
    %v1015 = vpack.c.b16 %v855, %v839
    %vm1176 = vcmask 261120
    %v1178 = vsel %vm1176, %v374, 0
    %1180 = vmatprep.subr.bf16.mxu0 %v857
    %1181 = vmatpush1.bf16.msra.mxu0 %v856
    %1182 = vmatprep.subr.bf16.mxu0 %v873
    %1183 = vmatpush1.bf16.msra.mxu0 %v872
    %1184 = vmatprep.subr.bf16.mxu0 %v889
    %1185 = vmatpush1.bf16.msra.mxu0 %v888
    %1186 = vmatprep.subr.bf16.mxu0 %v905
    %1187 = vmatpush1.bf16.msra.mxu0 %v904
    %1188 = vmatprep.subr.bf16.mxu0 %v921
    %1189 = vmatpush1.bf16.msra.mxu0 %v920
    %1190 = vmatprep.subr.bf16.mxu0 %v937
    %1191 = vmatpush1.bf16.msra.mxu0 %v936
    %1192 = vmatprep.subr.bf16.mxu0 %v953
    %1193 = vmatpush1.bf16.msra.mxu0 %v952
    %1194 = vmatprep.subr.bf16.mxu0 %v969
    %1195 = vmatpush1.bf16.msra.mxu0 %v968
    %1196 = vmatprep.subr.bf16.mxu0 %v985
    %1197 = vmatpush1.bf16.msra.mxu0 %v984
    %1198 = vmatprep.subr.bf16.mxu0 %v1001
    %1199 = vmatpush1.bf16.msra.mxu0 %v1000
    %1200 = vmatprep.subr.bf16.mxu0 0
    %1201 = vmatpush1.bf16.msra.mxu0 0
    %1202 = vmatprep.subr.bf16.mxu0 0
    %1203 = vmatpush1.bf16.msra.mxu0 0
    %1204 = vmatprep.subr.bf16.mxu0 0
    %1205 = vmatpush1.bf16.msra.mxu0 0
    %1206 = vmatprep.subr.bf16.mxu0 0
    %1207 = vmatpush1.bf16.msra.mxu0 0
    %1208 = vmatprep.subr.bf16.mxu0 0
    %1209 = vmatpush1.bf16.msra.mxu0 0
    %1210 = vmatprep.subr.bf16.mxu0 0
    %1211 = vmatpush1.bf16.msra.mxu0 0
    %1212 = vmatprep.mubr.bf16.mxu0 %v1178
    %1213 = vmatmul.mubr.bf16.gmra.mrb[0].mxu0 %v373
    %v1214 = vpop.f32.mrb[0].mxu0
    %v1215 = vadd.f32 %v293, %v1214
    %v1216 = vpop.f32.mrb[0].mxu0
    %v1217 = vadd.f32 %v297, %v1216
    %v1218 = vpop.f32.mrb[0].mxu0
    %v1219 = vpop.f32.mrb[0].mxu0
    %1220 = vdwg.mxu0
    %1221 = vmatprep.subr.bf16.mxu0 %v859
    %1222 = vmatpush1.bf16.msra.mxu0 %v858
    %1223 = vmatprep.subr.bf16.mxu0 %v875
    %1224 = vmatpush1.bf16.msra.mxu0 %v874
    %1225 = vmatprep.subr.bf16.mxu0 %v891
    %1226 = vmatpush1.bf16.msra.mxu0 %v890
    %1227 = vmatprep.subr.bf16.mxu0 %v907
    %1228 = vmatpush1.bf16.msra.mxu0 %v906
    %1229 = vmatprep.subr.bf16.mxu0 %v923
    %1230 = vmatpush1.bf16.msra.mxu0 %v922
    %1231 = vmatprep.subr.bf16.mxu0 %v939
    %1232 = vmatpush1.bf16.msra.mxu0 %v938
    %1233 = vmatprep.subr.bf16.mxu0 %v955
    %1234 = vmatpush1.bf16.msra.mxu0 %v954
    %1235 = vmatprep.subr.bf16.mxu0 %v971
    %1236 = vmatpush1.bf16.msra.mxu0 %v970
    %1237 = vmatprep.subr.bf16.mxu0 %v987
    %1238 = vmatpush1.bf16.msra.mxu0 %v986
    %1239 = vmatprep.subr.bf16.mxu0 %v1003
    %1240 = vmatpush1.bf16.msra.mxu0 %v1002
    %1241 = vmatprep.subr.bf16.mxu0 0
    %1242 = vmatpush1.bf16.msra.mxu0 0
    %1243 = vmatprep.subr.bf16.mxu0 0
    %1244 = vmatpush1.bf16.msra.mxu0 0
    %1245 = vmatprep.subr.bf16.mxu0 0
    %1246 = vmatpush1.bf16.msra.mxu0 0
    %1247 = vmatprep.subr.bf16.mxu0 0
    %1248 = vmatpush1.bf16.msra.mxu0 0
    %1249 = vmatprep.subr.bf16.mxu0 0
    %1250 = vmatpush1.bf16.msra.mxu0 0
    %1251 = vmatprep.subr.bf16.mxu0 0
    %1252 = vmatpush1.bf16.msra.mxu0 0
    %1253 = vmatprep.mubr.bf16.mxu0 %v1178
    %1254 = vmatmul.mubr.bf16.gmra.mrb[0].mxu0 %v373
    %v1255 = vpop.f32.mrb[0].mxu0
    %v1256 = vadd.f32 %v301, %v1255
    %v1257 = vpop.f32.mrb[0].mxu0
    %v1258 = vadd.f32 %v305, %v1257
    %v1259 = vpop.f32.mrb[0].mxu0
    %v1260 = vpop.f32.mrb[0].mxu0
    %1261 = vdwg.mxu0
    %1262 = vmatprep.subr.bf16.mxu0 %v861
    %1263 = vmatpush1.bf16.msra.mxu0 %v860
    %1264 = vmatprep.subr.bf16.mxu0 %v877
    %1265 = vmatpush1.bf16.msra.mxu0 %v876
    %1266 = vmatprep.subr.bf16.mxu0 %v893
    %1267 = vmatpush1.bf16.msra.mxu0 %v892
    %1268 = vmatprep.subr.bf16.mxu0 %v909
    %1269 = vmatpush1.bf16.msra.mxu0 %v908
    %1270 = vmatprep.subr.bf16.mxu0 %v925
    %1271 = vmatpush1.bf16.msra.mxu0 %v924
    %1272 = vmatprep.subr.bf16.mxu0 %v941
    %1273 = vmatpush1.bf16.msra.mxu0 %v940
    %1274 = vmatprep.subr.bf16.mxu0 %v957
    %1275 = vmatpush1.bf16.msra.mxu0 %v956
    %1276 = vmatprep.subr.bf16.mxu0 %v973
    %1277 = vmatpush1.bf16.msra.mxu0 %v972
    %1278 = vmatprep.subr.bf16.mxu0 %v989
    %1279 = vmatpush1.bf16.msra.mxu0 %v988
    %1280 = vmatprep.subr.bf16.mxu0 %v1005
    %1281 = vmatpush1.bf16.msra.mxu0 %v1004
    %1282 = vmatprep.subr.bf16.mxu0 0
    %1283 = vmatpush1.bf16.msra.mxu0 0
    %1284 = vmatprep.subr.bf16.mxu0 0
    %1285 = vmatpush1.bf16.msra.mxu0 0
    %1286 = vmatprep.subr.bf16.mxu0 0
    %1287 = vmatpush1.bf16.msra.mxu0 0
    %1288 = vmatprep.subr.bf16.mxu0 0
    %1289 = vmatpush1.bf16.msra.mxu0 0
    %1290 = vmatprep.subr.bf16.mxu0 0
    %1291 = vmatpush1.bf16.msra.mxu0 0
    %1292 = vmatprep.subr.bf16.mxu0 0
    %1293 = vmatpush1.bf16.msra.mxu0 0
    %1294 = vmatprep.mubr.bf16.mxu0 %v1178
    %1295 = vmatmul.mubr.bf16.gmra.mrb[0].mxu0 %v373
    %v1296 = vpop.f32.mrb[0].mxu0
    %v1297 = vadd.f32 %v309, %v1296
    %v1298 = vpop.f32.mrb[0].mxu0
    %v1299 = vadd.f32 %v313, %v1298
    %v1300 = vpop.f32.mrb[0].mxu0
    %v1301 = vpop.f32.mrb[0].mxu0
    %1302 = vdwg.mxu0
    %1303 = vmatprep.subr.bf16.mxu0 %v863
    %1304 = vmatpush1.bf16.msra.mxu0 %v862
    %1305 = vmatprep.subr.bf16.mxu0 %v879
    %1306 = vmatpush1.bf16.msra.mxu0 %v878
    %1307 = vmatprep.subr.bf16.mxu0 %v895
    %1308 = vmatpush1.bf16.msra.mxu0 %v894
    %1309 = vmatprep.subr.bf16.mxu0 %v911
    %1310 = vmatpush1.bf16.msra.mxu0 %v910
    %1311 = vmatprep.subr.bf16.mxu0 %v927
    %1312 = vmatpush1.bf16.msra.mxu0 %v926
    %1313 = vmatprep.subr.bf16.mxu0 %v943
    %1314 = vmatpush1.bf16.msra.mxu0 %v942
    %1315 = vmatprep.subr.bf16.mxu0 %v959
    %1316 = vmatpush1.bf16.msra.mxu0 %v958
    %1317 = vmatprep.subr.bf16.mxu0 %v975
    %1318 = vmatpush1.bf16.msra.mxu0 %v974
    %1319 = vmatprep.subr.bf16.mxu0 %v991
    %1320 = vmatpush1.bf16.msra.mxu0 %v990
    %1321 = vmatprep.subr.bf16.mxu0 %v1007
    %1322 = vmatpush1.bf16.msra.mxu0 %v1006
    %1323 = vmatprep.subr.bf16.mxu0 0
    %1324 = vmatpush1.bf16.msra.mxu0 0
    %1325 = vmatprep.subr.bf16.mxu0 0
    %1326 = vmatpush1.bf16.msra.mxu0 0
    %1327 = vmatprep.subr.bf16.mxu0 0
    %1328 = vmatpush1.bf16.msra.mxu0 0
    %1329 = vmatprep.subr.bf16.mxu0 0
    %1330 = vmatpush1.bf16.msra.mxu0 0
    %1331 = vmatprep.subr.bf16.mxu0 0
    %1332 = vmatpush1.bf16.msra.mxu0 0
    %1333 = vmatprep.subr.bf16.mxu0 0
    %1334 = vmatpush1.bf16.msra.mxu0 0
    %1335 = vmatprep.mubr.bf16.mxu0 %v1178
    %1336 = vmatmul.mubr.bf16.gmra.mrb[0].mxu0 %v373
    %v1337 = vpop.f32.mrb[0].mxu0
    %v1338 = vadd.f32 %v317, %v1337
    %v1339 = vpop.f32.mrb[0].mxu0
    %v1340 = vadd.f32 %v321, %v1339
    %v1341 = vpop.f32.mrb[0].mxu0
    %v1342 = vpop.f32.mrb[0].mxu0
    %1343 = vdwg.mxu0
    %1344 = vmatprep.subr.bf16.mxu0 %v865
    %1345 = vmatpush1.bf16.msra.mxu0 %v864
    %1346 = vmatprep.subr.bf16.mxu0 %v881
    %1347 = vmatpush1.bf16.msra.mxu0 %v880
    %1348 = vmatprep.subr.bf16.mxu0 %v897
    %1349 = vmatpush1.bf16.msra.mxu0 %v896
    %1350 = vmatprep.subr.bf16.mxu0 %v913
    %1351 = vmatpush1.bf16.msra.mxu0 %v912
    %1352 = vmatprep.subr.bf16.mxu0 %v929
    %1353 = vmatpush1.bf16.msra.mxu0 %v928
    %1354 = vmatprep.subr.bf16.mxu0 %v945
    %1355 = vmatpush1.bf16.msra.mxu0 %v944
    %1356 = vmatprep.subr.bf16.mxu0 %v961
    %1357 = vmatpush1.bf16.msra.mxu0 %v960
    %1358 = vmatprep.subr.bf16.mxu0 %v977
    %1359 = vmatpush1.bf16.msra.mxu0 %v976
    %1360 = vmatprep.subr.bf16.mxu0 %v993
    %1361 = vmatpush1.bf16.msra.mxu0 %v992
    %1362 = vmatprep.subr.bf16.mxu0 %v1009
    %1363 = vmatpush1.bf16.msra.mxu0 %v1008
    %1364 = vmatprep.subr.bf16.mxu0 0
    %1365 = vmatpush1.bf16.msra.mxu0 0
    %1366 = vmatprep.subr.bf16.mxu0 0
    %1367 = vmatpush1.bf16.msra.mxu0 0
    %1368 = vmatprep.subr.bf16.mxu0 0
    %1369 = vmatpush1.bf16.msra.mxu0 0
    %1370 = vmatprep.subr.bf16.mxu0 0
    %1371 = vmatpush1.bf16.msra.mxu0 0
    %1372 = vmatprep.subr.bf16.mxu0 0
    %1373 = vmatpush1.bf16.msra.mxu0 0
    %1374 = vmatprep.subr.bf16.mxu0 0
    %1375 = vmatpush1.bf16.msra.mxu0 0
    %1376 = vmatprep.mubr.bf16.mxu0 %v1178
    %1377 = vmatmul.mubr.bf16.gmra.mrb[0].mxu0 %v373
    %v1378 = vpop.f32.mrb[0].mxu0
    %v1379 = vadd.f32 %v325, %v1378
    %v1380 = vpop.f32.mrb[0].mxu0
    %v1381 = vadd.f32 %v329, %v1380
    %v1382 = vpop.f32.mrb[0].mxu0
    %v1383 = vpop.f32.mrb[0].mxu0
    %1384 = vdwg.mxu0
    %1385 = vmatprep.subr.bf16.mxu0 %v867
    %1386 = vmatpush1.bf16.msra.mxu0 %v866
    %1387 = vmatprep.subr.bf16.mxu0 %v883
    %1388 = vmatpush1.bf16.msra.mxu0 %v882
    %1389 = vmatprep.subr.bf16.mxu0 %v899
    %1390 = vmatpush1.bf16.msra.mxu0 %v898
    %1391 = vmatprep.subr.bf16.mxu0 %v915
    %1392 = vmatpush1.bf16.msra.mxu0 %v914
    %1393 = vmatprep.subr.bf16.mxu0 %v931
    %1394 = vmatpush1.bf16.msra.mxu0 %v930
    %1395 = vmatprep.subr.bf16.mxu0 %v947
    %1396 = vmatpush1.bf16.msra.mxu0 %v946
    %1397 = vmatprep.subr.bf16.mxu0 %v963
    %1398 = vmatpush1.bf16.msra.mxu0 %v962
    %1399 = vmatprep.subr.bf16.mxu0 %v979
    %1400 = vmatpush1.bf16.msra.mxu0 %v978
    %1401 = vmatprep.subr.bf16.mxu0 %v995
    %1402 = vmatpush1.bf16.msra.mxu0 %v994
    %1403 = vmatprep.subr.bf16.mxu0 %v1011
    %1404 = vmatpush1.bf16.msra.mxu0 %v1010
    %1405 = vmatprep.subr.bf16.mxu0 0
    %1406 = vmatpush1.bf16.msra.mxu0 0
    %1407 = vmatprep.subr.bf16.mxu0 0
    %1408 = vmatpush1.bf16.msra.mxu0 0
    %1409 = vmatprep.subr.bf16.mxu0 0
    %1410 = vmatpush1.bf16.msra.mxu0 0
    %1411 = vmatprep.subr.bf16.mxu0 0
    %1412 = vmatpush1.bf16.msra.mxu0 0
    %1413 = vmatprep.subr.bf16.mxu0 0
    %1414 = vmatpush1.bf16.msra.mxu0 0
    %1415 = vmatprep.subr.bf16.mxu0 0
    %1416 = vmatpush1.bf16.msra.mxu0 0
    %1417 = vmatprep.mubr.bf16.mxu0 %v1178
    %1418 = vmatmul.mubr.bf16.gmra.mrb[0].mxu0 %v373
    %v1419 = vpop.f32.mrb[0].mxu0
    %v1420 = vadd.f32 %v333, %v1419
    %v1421 = vpop.f32.mrb[0].mxu0
    %v1422 = vadd.f32 %v337, %v1421
    %v1423 = vpop.f32.mrb[0].mxu0
    %v1424 = vpop.f32.mrb[0].mxu0
    %1425 = vdwg.mxu0
    %1426 = vmatprep.subr.bf16.mxu0 %v869
    %1427 = vmatpush1.bf16.msra.mxu0 %v868
    %1428 = vmatprep.subr.bf16.mxu0 %v885
    %1429 = vmatpush1.bf16.msra.mxu0 %v884
    %1430 = vmatprep.subr.bf16.mxu0 %v901
    %1431 = vmatpush1.bf16.msra.mxu0 %v900
    %1432 = vmatprep.subr.bf16.mxu0 %v917
    %1433 = vmatpush1.bf16.msra.mxu0 %v916
    %1434 = vmatprep.subr.bf16.mxu0 %v933
    %1435 = vmatpush1.bf16.msra.mxu0 %v932
    %1436 = vmatprep.subr.bf16.mxu0 %v949
    %1437 = vmatpush1.bf16.msra.mxu0 %v948
    %1438 = vmatprep.subr.bf16.mxu0 %v965
    %1439 = vmatpush1.bf16.msra.mxu0 %v964
    %1440 = vmatprep.subr.bf16.mxu0 %v981
    %1441 = vmatpush1.bf16.msra.mxu0 %v980
    %1442 = vmatprep.subr.bf16.mxu0 %v997
    %1443 = vmatpush1.bf16.msra.mxu0 %v996
    %1444 = vmatprep.subr.bf16.mxu0 %v1013
    %1445 = vmatpush1.bf16.msra.mxu0 %v1012
    %1446 = vmatprep.subr.bf16.mxu0 0
    %1447 = vmatpush1.bf16.msra.mxu0 0
    %1448 = vmatprep.subr.bf16.mxu0 0
    %1449 = vmatpush1.bf16.msra.mxu0 0
    %1450 = vmatprep.subr.bf16.mxu0 0
    %1451 = vmatpush1.bf16.msra.mxu0 0
    %1452 = vmatprep.subr.bf16.mxu0 0
    %1453 = vmatpush1.bf16.msra.mxu0 0
    %1454 = vmatprep.subr.bf16.mxu0 0
    %1455 = vmatpush1.bf16.msra.mxu0 0
    %1456 = vmatprep.subr.bf16.mxu0 0
    %1457 = vmatpush1.bf16.msra.mxu0 0
    %1458 = vmatprep.mubr.bf16.mxu0 %v1178
    %1459 = vmatmul.mubr.bf16.gmra.mrb[0].mxu0 %v373
    %v1460 = vpop.f32.mrb[0].mxu0
    %v1461 = vadd.f32 %v341, %v1460
    %v1462 = vpop.f32.mrb[0].mxu0
    %v1463 = vadd.f32 %v345, %v1462
    %v1464 = vpop.f32.mrb[0].mxu0
    %v1465 = vpop.f32.mrb[0].mxu0
    %1466 = vdwg.mxu0
    %1467 = vmatprep.subr.bf16.mxu0 %v871
    %1468 = vmatpush1.bf16.msra.mxu0 %v870
    %1469 = vmatprep.subr.bf16.mxu0 %v887
    %1470 = vmatpush1.bf16.msra.mxu0 %v886
    %1471 = vmatprep.subr.bf16.mxu0 %v903
    %1472 = vmatpush1.bf16.msra.mxu0 %v902
    %1473 = vmatprep.subr.bf16.mxu0 %v919
    %1474 = vmatpush1.bf16.msra.mxu0 %v918
    %1475 = vmatprep.subr.bf16.mxu0 %v935
    %1476 = vmatpush1.bf16.msra.mxu0 %v934
    %1477 = vmatprep.subr.bf16.mxu0 %v951
    %1478 = vmatpush1.bf16.msra.mxu0 %v950
    %1479 = vmatprep.subr.bf16.mxu0 %v967
    %1480 = vmatpush1.bf16.msra.mxu0 %v966
    %1481 = vmatprep.subr.bf16.mxu0 %v983
    %1482 = vmatpush1.bf16.msra.mxu0 %v982
    %1483 = vmatprep.subr.bf16.mxu0 %v999
    %1484 = vmatpush1.bf16.msra.mxu0 %v998
    %1485 = vmatprep.subr.bf16.mxu0 %v1015
    %1486 = vmatpush1.bf16.msra.mxu0 %v1014
    %1487 = vmatprep.subr.bf16.mxu0 0
    %1488 = vmatpush1.bf16.msra.mxu0 0
    %1489 = vmatprep.subr.bf16.mxu0 0
    %1490 = vmatpush1.bf16.msra.mxu0 0
    %1491 = vmatprep.subr.bf16.mxu0 0
    %1492 = vmatpush1.bf16.msra.mxu0 0
    %1493 = vmatprep.subr.bf16.mxu0 0
    %1494 = vmatpush1.bf16.msra.mxu0 0
    %1495 = vmatprep.subr.bf16.mxu0 0
    %1496 = vmatpush1.bf16.msra.mxu0 0
    %1497 = vmatprep.subr.bf16.mxu0 0
    %1498 = vmatpush1.bf16.msra.mxu0 0
    %1499 = vmatprep.mubr.bf16.mxu0 %v1178
    %1500 = vmatmul.mubr.bf16.gmra.mrb[0].mxu0 %v373
    %v1501 = vpop.f32.mrb[0].mxu0
    %v1502 = vadd.f32 %v349, %v1501
    %v1503 = vpop.f32.mrb[0].mxu0
    %v1504 = vadd.f32 %v353, %v1503
    %v1505 = vpop.f32.mrb[0].mxu0
    %v1506 = vpop.f32.mrb[0].mxu0
    %1507 = vdwg.mxu0
    %v1508 = vld [vmem:[%s7] sm:$0xf]
    %v1510 = vlaneseq
    %v1511 = vshrl.u32 %v1510, 7
    %v1512 = vsub.s32 0, %v1511
    %v1513 = vrot.slane %v1508, %v1512
    %v1514 = vlaneseq
    %v1515 = vshrl.u32 %v1514, 7
    %v1516 = vsub.s32 1, %v1515
    %v1517 = vrot.slane %v1508, %v1516
    %v1518 = vlaneseq
    %v1519 = vshrl.u32 %v1518, 7
    %v1520 = vsub.s32 2, %v1519
    %v1521 = vrot.slane %v1508, %v1520
    %v1522 = vlaneseq
    %v1523 = vshrl.u32 %v1522, 7
    %v1524 = vsub.s32 3, %v1523
    %v1525 = vrot.slane %v1508, %v1524
    %v1530 = vpack.c.bf16 %v1215, %v1215
    %v1531 = vpack.c.bf16 %v1217, %v1217
    %v1532 = vpack.c.bf16 %v1256, %v1256
    %v1533 = vpack.c.bf16 %v1258, %v1258
    %v1534 = vpack.c.bf16 %v1297, %v1297
    %v1535 = vpack.c.bf16 %v1299, %v1299
    %v1536 = vpack.c.bf16 %v1338, %v1338
    %v1537 = vpack.c.bf16 %v1340, %v1340
    %v1538 = vld [vmem:[#allocation5] sm:$0xff]
    %v1539 = vld [vmem:[#allocation5 + $0x8] sm:$0xff]
    %v1540 = vld [vmem:[#allocation5 + $0x10] sm:$0xff]
    %v1541 = vld [vmem:[#allocation5 + $0x18] sm:$0xff]
    %v1542 = vld [vmem:[#allocation5 + $0x20] sm:$0xff]
    %v1543 = vld [vmem:[#allocation5 + $0x28] sm:$0xff]
    %v1544 = vld [vmem:[#allocation5 + $0x30] sm:$0xff]
    %v1545 = vld [vmem:[#allocation5 + $0x38] sm:$0xff]
    %v1546 = vld [vmem:[#allocation5 + $0x40] sm:$0xff]
    %v1547 = vld [vmem:[#allocation5 + $0x48] sm:$0xff]
    %v1548 = vld [vmem:[#allocation5 + $0x50] sm:$0xff]
    %v1549 = vld [vmem:[#allocation5 + $0x58] sm:$0xff]
    %v1550 = vld [vmem:[#allocation5 + $0x60] sm:$0xff]
    %v1551 = vld [vmem:[#allocation5 + $0x68] sm:$0xff]
    %v1552 = vld [vmem:[#allocation5 + $0x70] sm:$0xff]
    %v1553 = vld [vmem:[#allocation5 + $0x78] sm:$0xff]
    %v1554 = vld [vmem:[#allocation5 + $0x80] sm:$0xff]
    %v1555 = vld [vmem:[#allocation5 + $0x88] sm:$0xff]
    %v1556 = vld [vmem:[#allocation5 + $0x90] sm:$0xff]
    %v1557 = vld [vmem:[#allocation5 + $0x98] sm:$0xff]
    %v1558 = vld [vmem:[#allocation5 + $0xa0] sm:$0xff]
    %v1559 = vld [vmem:[#allocation5 + $0xa8] sm:$0xff]
    %v1560 = vld [vmem:[#allocation5 + $0xb0] sm:$0xff]
    %v1561 = vld [vmem:[#allocation5 + $0xb8] sm:$0xff]
    %v1562 = vld [vmem:[#allocation5 + $0xc0] sm:$0xff]
    %v1563 = vld [vmem:[#allocation5 + $0xc8] sm:$0xff]
    %v1564 = vld [vmem:[#allocation5 + $0xd0] sm:$0xff]
    %v1565 = vld [vmem:[#allocation5 + $0xd8] sm:$0xff]
    %v1566 = vld [vmem:[#allocation5 + $0xe0] sm:$0xff]
    %v1567 = vld [vmem:[#allocation5 + $0xe8] sm:$0xff]
    %v1568 = vld [vmem:[#allocation5 + $0xf0] sm:$0xff]
    %v1569 = vld [vmem:[#allocation5 + $0xf8] sm:$0xff]
    %v1570 = vld [vmem:[#allocation5 + $0x100] sm:$0xff]
    %v1571 = vld [vmem:[#allocation5 + $0x108] sm:$0xff]
    %v1572 = vld [vmem:[#allocation5 + $0x110] sm:$0xff]
    %v1573 = vld [vmem:[#allocation5 + $0x118] sm:$0xff]
    %v1574 = vld [vmem:[#allocation5 + $0x120] sm:$0xff]
    %v1575 = vld [vmem:[#allocation5 + $0x128] sm:$0xff]
    %v1576 = vld [vmem:[#allocation5 + $0x130] sm:$0xff]
    %v1577 = vld [vmem:[#allocation5 + $0x138] sm:$0xff]
    %v1578 = vld [vmem:[#allocation5 + $0x140] sm:$0xff]
    %v1579 = vld [vmem:[#allocation5 + $0x148] sm:$0xff]
    %v1580 = vld [vmem:[#allocation5 + $0x150] sm:$0xff]
    %v1581 = vld [vmem:[#allocation5 + $0x158] sm:$0xff]
    %v1582 = vld [vmem:[#allocation5 + $0x160] sm:$0xff]
    %v1583 = vld [vmem:[#allocation5 + $0x168] sm:$0xff]
    %v1584 = vld [vmem:[#allocation5 + $0x170] sm:$0xff]
    %v1585 = vld [vmem:[#allocation5 + $0x178] sm:$0xff]
    %v1586 = vld [vmem:[#allocation5 + $0x180] sm:$0xff]
    %v1587 = vld [vmem:[#allocation5 + $0x188] sm:$0xff]
    %v1588 = vld [vmem:[#allocation5 + $0x190] sm:$0xff]
    %v1589 = vld [vmem:[#allocation5 + $0x198] sm:$0xff]
    %v1590 = vld [vmem:[#allocation5 + $0x1a0] sm:$0xff]
    %v1591 = vld [vmem:[#allocation5 + $0x1a8] sm:$0xff]
    %v1592 = vld [vmem:[#allocation5 + $0x1b0] sm:$0xff]
    %v1593 = vld [vmem:[#allocation5 + $0x1b8] sm:$0xff]
    %v1594 = vld [vmem:[#allocation5 + $0x1c0] sm:$0xff]
    %v1595 = vld [vmem:[#allocation5 + $0x1c8] sm:$0xff]
    %v1596 = vld [vmem:[#allocation5 + $0x1d0] sm:$0xff]
    %v1597 = vld [vmem:[#allocation5 + $0x1d8] sm:$0xff]
    %v1598 = vld [vmem:[#allocation5 + $0x1e0] sm:$0xff]
    %v1599 = vld [vmem:[#allocation5 + $0x1e8] sm:$0xff]
    %v1600 = vld [vmem:[#allocation5 + $0x1f0] sm:$0xff]
    %v1601 = vld [vmem:[#allocation5 + $0x1f8] sm:$0xff]
    %v1602 = vld [vmem:[#allocation5 + $0x200] sm:$0xff]
    %v1603 = vld [vmem:[#allocation5 + $0x208] sm:$0xff]
    %v1604 = vld [vmem:[#allocation5 + $0x210] sm:$0xff]
    %v1605 = vld [vmem:[#allocation5 + $0x218] sm:$0xff]
    %v1606 = vld [vmem:[#allocation5 + $0x220] sm:$0xff]
    %v1607 = vld [vmem:[#allocation5 + $0x228] sm:$0xff]
    %v1608 = vld [vmem:[#allocation5 + $0x230] sm:$0xff]
    %v1609 = vld [vmem:[#allocation5 + $0x238] sm:$0xff]
    %v1610 = vld [vmem:[#allocation5 + $0x240] sm:$0xff]
    %v1611 = vld [vmem:[#allocation5 + $0x248] sm:$0xff]
    %v1612 = vld [vmem:[#allocation5 + $0x250] sm:$0xff]
    %v1613 = vld [vmem:[#allocation5 + $0x258] sm:$0xff]
    %v1614 = vld [vmem:[#allocation5 + $0x260] sm:$0xff]
    %v1615 = vld [vmem:[#allocation5 + $0x268] sm:$0xff]
    %v1616 = vld [vmem:[#allocation5 + $0x270] sm:$0xff]
    %v1617 = vld [vmem:[#allocation5 + $0x278] sm:$0xff]
    %v1618 = vld [vmem:[#allocation5 + $0x280] sm:$0xff]
    %v1619 = vld [vmem:[#allocation5 + $0x288] sm:$0xff]
    %v1620 = vld [vmem:[#allocation5 + $0x290] sm:$0xff]
    %v1621 = vld [vmem:[#allocation5 + $0x298] sm:$0xff]
    %v1622 = vld [vmem:[#allocation5 + $0x2a0] sm:$0xff]
    %v1623 = vld [vmem:[#allocation5 + $0x2a8] sm:$0xff]
    %v1624 = vld [vmem:[#allocation5 + $0x2b0] sm:$0xff]
    %v1625 = vld [vmem:[#allocation5 + $0x2b8] sm:$0xff]
    %v1626 = vld [vmem:[#allocation5 + $0x2c0] sm:$0xff]
    %v1627 = vld [vmem:[#allocation5 + $0x2c8] sm:$0xff]
    %v1628 = vld [vmem:[#allocation5 + $0x2d0] sm:$0xff]
    %v1629 = vld [vmem:[#allocation5 + $0x2d8] sm:$0xff]
    %v1630 = vld [vmem:[#allocation5 + $0x2e0] sm:$0xff]
    %v1631 = vld [vmem:[#allocation5 + $0x2e8] sm:$0xff]
    %v1632 = vld [vmem:[#allocation5 + $0x2f0] sm:$0xff]
    %v1633 = vld [vmem:[#allocation5 + $0x2f8] sm:$0xff]
    %v1634 = vld [vmem:[#allocation5 + $0x300] sm:$0xff]
    %v1635 = vld [vmem:[#allocation5 + $0x308] sm:$0xff]
    %v1636 = vld [vmem:[#allocation5 + $0x310] sm:$0xff]
    %v1637 = vld [vmem:[#allocation5 + $0x318] sm:$0xff]
    %v1638 = vld [vmem:[#allocation5 + $0x320] sm:$0xff]
    %v1639 = vld [vmem:[#allocation5 + $0x328] sm:$0xff]
    %v1640 = vld [vmem:[#allocation5 + $0x330] sm:$0xff]
    %v1641 = vld [vmem:[#allocation5 + $0x338] sm:$0xff]
    %v1642 = vld [vmem:[#allocation5 + $0x340] sm:$0xff]
    %v1643 = vld [vmem:[#allocation5 + $0x348] sm:$0xff]
    %v1644 = vld [vmem:[#allocation5 + $0x350] sm:$0xff]
    %v1645 = vld [vmem:[#allocation5 + $0x358] sm:$0xff]
    %v1646 = vld [vmem:[#allocation5 + $0x360] sm:$0xff]
    %v1647 = vld [vmem:[#allocation5 + $0x368] sm:$0xff]
    %v1648 = vld [vmem:[#allocation5 + $0x370] sm:$0xff]
    %v1649 = vld [vmem:[#allocation5 + $0x378] sm:$0xff]
    %v1650 = vld [vmem:[#allocation5 + $0x380] sm:$0xff]
    %v1651 = vld [vmem:[#allocation5 + $0x388] sm:$0xff]
    %v1652 = vld [vmem:[#allocation5 + $0x390] sm:$0xff]
    %v1653 = vld [vmem:[#allocation5 + $0x398] sm:$0xff]
    %v1654 = vld [vmem:[#allocation5 + $0x3a0] sm:$0xff]
    %v1655 = vld [vmem:[#allocation5 + $0x3a8] sm:$0xff]
    %v1656 = vld [vmem:[#allocation5 + $0x3b0] sm:$0xff]
    %v1657 = vld [vmem:[#allocation5 + $0x3b8] sm:$0xff]
    %v1658 = vld [vmem:[#allocation5 + $0x3c0] sm:$0xff]
    %v1659 = vld [vmem:[#allocation5 + $0x3c8] sm:$0xff]
    %v1660 = vld [vmem:[#allocation5 + $0x3d0] sm:$0xff]
    %v1661 = vld [vmem:[#allocation5 + $0x3d8] sm:$0xff]
    %v1662 = vld [vmem:[#allocation5 + $0x3e0] sm:$0xff]
    %v1663 = vld [vmem:[#allocation5 + $0x3e8] sm:$0xff]
    %v1664 = vld [vmem:[#allocation5 + $0x3f0] sm:$0xff]
    %v1665 = vld [vmem:[#allocation5 + $0x3f8] sm:$0xff]
    %v1666 = vld [vmem:[#allocation7] sm:$0xff]
    %v1667 = vld [vmem:[#allocation7 + $0x8] sm:$0xff]
    %v1668 = vld [vmem:[#allocation7 + $0x10] sm:$0xff]
    %v1669 = vld [vmem:[#allocation7 + $0x18] sm:$0xff]
    %v1670 = vld [vmem:[#allocation7 + $0x20] sm:$0xff]
    %v1671 = vld [vmem:[#allocation7 + $0x28] sm:$0xff]
    %v1672 = vld [vmem:[#allocation7 + $0x30] sm:$0xff]
    %v1673 = vld [vmem:[#allocation7 + $0x38] sm:$0xff]
    %v1674 = vld [vmem:[#allocation7 + $0x40] sm:$0xff]
    %v1675 = vld [vmem:[#allocation7 + $0x48] sm:$0xff]
    %v1676 = vld [vmem:[#allocation7 + $0x50] sm:$0xff]
    %v1677 = vld [vmem:[#allocation7 + $0x58] sm:$0xff]
    %v1678 = vld [vmem:[#allocation7 + $0x60] sm:$0xff]
    %v1679 = vld [vmem:[#allocation7 + $0x68] sm:$0xff]
    %v1680 = vld [vmem:[#allocation7 + $0x70] sm:$0xff]
    %v1681 = vld [vmem:[#allocation7 + $0x78] sm:$0xff]
    %v1682 = vld [vmem:[#allocation7 + $0x80] sm:$0xff]
    %v1683 = vld [vmem:[#allocation7 + $0x88] sm:$0xff]
    %v1684 = vld [vmem:[#allocation7 + $0x90] sm:$0xff]
    %v1685 = vld [vmem:[#allocation7 + $0x98] sm:$0xff]
    %v1686 = vld [vmem:[#allocation7 + $0xa0] sm:$0xff]
    %v1687 = vld [vmem:[#allocation7 + $0xa8] sm:$0xff]
    %v1688 = vld [vmem:[#allocation7 + $0xb0] sm:$0xff]
    %v1689 = vld [vmem:[#allocation7 + $0xb8] sm:$0xff]
    %v1690 = vld [vmem:[#allocation7 + $0xc0] sm:$0xff]
    %v1691 = vld [vmem:[#allocation7 + $0xc8] sm:$0xff]
    %v1692 = vld [vmem:[#allocation7 + $0xd0] sm:$0xff]
    %v1693 = vld [vmem:[#allocation7 + $0xd8] sm:$0xff]
    %v1694 = vld [vmem:[#allocation7 + $0xe0] sm:$0xff]
    %v1695 = vld [vmem:[#allocation7 + $0xe8] sm:$0xff]
    %v1696 = vld [vmem:[#allocation7 + $0xf0] sm:$0xff]
    %v1697 = vld [vmem:[#allocation7 + $0xf8] sm:$0xff]
    %v1698 = vld [vmem:[#allocation7 + $0x100] sm:$0xff]
    %v1699 = vld [vmem:[#allocation7 + $0x108] sm:$0xff]
    %v1700 = vld [vmem:[#allocation7 + $0x110] sm:$0xff]
    %v1701 = vld [vmem:[#allocation7 + $0x118] sm:$0xff]
    %v1702 = vld [vmem:[#allocation7 + $0x120] sm:$0xff]
    %v1703 = vld [vmem:[#allocation7 + $0x128] sm:$0xff]
    %v1704 = vld [vmem:[#allocation7 + $0x130] sm:$0xff]
    %v1705 = vld [vmem:[#allocation7 + $0x138] sm:$0xff]
    %v1706 = vld [vmem:[#allocation7 + $0x140] sm:$0xff]
    %v1707 = vld [vmem:[#allocation7 + $0x148] sm:$0xff]
    %v1708 = vld [vmem:[#allocation7 + $0x150] sm:$0xff]
    %v1709 = vld [vmem:[#allocation7 + $0x158] sm:$0xff]
    %v1710 = vld [vmem:[#allocation7 + $0x160] sm:$0xff]
    %v1711 = vld [vmem:[#allocation7 + $0x168] sm:$0xff]
    %v1712 = vld [vmem:[#allocation7 + $0x170] sm:$0xff]
    %v1713 = vld [vmem:[#allocation7 + $0x178] sm:$0xff]
    %v1714 = vld [vmem:[#allocation7 + $0x180] sm:$0xff]
    %v1715 = vld [vmem:[#allocation7 + $0x188] sm:$0xff]
    %v1716 = vld [vmem:[#allocation7 + $0x190] sm:$0xff]
    %v1717 = vld [vmem:[#allocation7 + $0x198] sm:$0xff]
    %v1718 = vld [vmem:[#allocation7 + $0x1a0] sm:$0xff]
    %v1719 = vld [vmem:[#allocation7 + $0x1a8] sm:$0xff]
    %v1720 = vld [vmem:[#allocation7 + $0x1b0] sm:$0xff]
    %v1721 = vld [vmem:[#allocation7 + $0x1b8] sm:$0xff]
    %v1722 = vld [vmem:[#allocation7 + $0x1c0] sm:$0xff]
    %v1723 = vld [vmem:[#allocation7 + $0x1c8] sm:$0xff]
    %v1724 = vld [vmem:[#allocation7 + $0x1d0] sm:$0xff]
    %v1725 = vld [vmem:[#allocation7 + $0x1d8] sm:$0xff]
    %v1726 = vld [vmem:[#allocation7 + $0x1e0] sm:$0xff]
    %v1727 = vld [vmem:[#allocation7 + $0x1e8] sm:$0xff]
    %v1728 = vld [vmem:[#allocation7 + $0x1f0] sm:$0xff]
    %v1729 = vld [vmem:[#allocation7 + $0x1f8] sm:$0xff]
    %v1730 = vld [vmem:[#allocation7 + $0x200] sm:$0xff]
    %v1731 = vld [vmem:[#allocation7 + $0x208] sm:$0xff]
    %v1732 = vld [vmem:[#allocation7 + $0x210] sm:$0xff]
    %v1733 = vld [vmem:[#allocation7 + $0x218] sm:$0xff]
    %v1734 = vld [vmem:[#allocation7 + $0x220] sm:$0xff]
    %v1735 = vld [vmem:[#allocation7 + $0x228] sm:$0xff]
    %v1736 = vld [vmem:[#allocation7 + $0x230] sm:$0xff]
    %v1737 = vld [vmem:[#allocation7 + $0x238] sm:$0xff]
    %v1738 = vld [vmem:[#allocation7 + $0x240] sm:$0xff]
    %v1739 = vld [vmem:[#allocation7 + $0x248] sm:$0xff]
    %v1740 = vld [vmem:[#allocation7 + $0x250] sm:$0xff]
    %v1741 = vld [vmem:[#allocation7 + $0x258] sm:$0xff]
    %v1742 = vld [vmem:[#allocation7 + $0x260] sm:$0xff]
    %v1743 = vld [vmem:[#allocation7 + $0x268] sm:$0xff]
    %v1744 = vld [vmem:[#allocation7 + $0x270] sm:$0xff]
    %v1745 = vld [vmem:[#allocation7 + $0x278] sm:$0xff]
    %v1746 = vld [vmem:[#allocation7 + $0x280] sm:$0xff]
    %v1747 = vld [vmem:[#allocation7 + $0x288] sm:$0xff]
    %v1748 = vld [vmem:[#allocation7 + $0x290] sm:$0xff]
    %v1749 = vld [vmem:[#allocation7 + $0x298] sm:$0xff]
    %v1750 = vld [vmem:[#allocation7 + $0x2a0] sm:$0xff]
    %v1751 = vld [vmem:[#allocation7 + $0x2a8] sm:$0xff]
    %v1752 = vld [vmem:[#allocation7 + $0x2b0] sm:$0xff]
    %v1753 = vld [vmem:[#allocation7 + $0x2b8] sm:$0xff]
    %v1754 = vld [vmem:[#allocation7 + $0x2c0] sm:$0xff]
    %v1755 = vld [vmem:[#allocation7 + $0x2c8] sm:$0xff]
    %v1756 = vld [vmem:[#allocation7 + $0x2d0] sm:$0xff]
    %v1757 = vld [vmem:[#allocation7 + $0x2d8] sm:$0xff]
    %v1758 = vld [vmem:[#allocation7 + $0x2e0] sm:$0xff]
    %v1759 = vld [vmem:[#allocation7 + $0x2e8] sm:$0xff]
    %v1760 = vld [vmem:[#allocation7 + $0x2f0] sm:$0xff]
    %v1761 = vld [vmem:[#allocation7 + $0x2f8] sm:$0xff]
    %v1762 = vld [vmem:[#allocation7 + $0x300] sm:$0xff]
    %v1763 = vld [vmem:[#allocation7 + $0x308] sm:$0xff]
    %v1764 = vld [vmem:[#allocation7 + $0x310] sm:$0xff]
    %v1765 = vld [vmem:[#allocation7 + $0x318] sm:$0xff]
    %v1766 = vld [vmem:[#allocation7 + $0x320] sm:$0xff]
    %v1767 = vld [vmem:[#allocation7 + $0x328] sm:$0xff]
    %v1768 = vld [vmem:[#allocation7 + $0x330] sm:$0xff]
    %v1769 = vld [vmem:[#allocation7 + $0x338] sm:$0xff]
    %v1770 = vld [vmem:[#allocation7 + $0x340] sm:$0xff]
    %v1771 = vld [vmem:[#allocation7 + $0x348] sm:$0xff]
    %v1772 = vld [vmem:[#allocation7 + $0x350] sm:$0xff]
    %v1773 = vld [vmem:[#allocation7 + $0x358] sm:$0xff]
    %v1774 = vld [vmem:[#allocation7 + $0x360] sm:$0xff]
    %v1775 = vld [vmem:[#allocation7 + $0x368] sm:$0xff]
    %v1776 = vld [vmem:[#allocation7 + $0x370] sm:$0xff]
    %v1777 = vld [vmem:[#allocation7 + $0x378] sm:$0xff]
    %v1778 = vld [vmem:[#allocation7 + $0x380] sm:$0xff]
    %v1779 = vld [vmem:[#allocation7 + $0x388] sm:$0xff]
    %v1780 = vld [vmem:[#allocation7 + $0x390] sm:$0xff]
    %v1781 = vld [vmem:[#allocation7 + $0x398] sm:$0xff]
    %v1782 = vld [vmem:[#allocation7 + $0x3a0] sm:$0xff]
    %v1783 = vld [vmem:[#allocation7 + $0x3a8] sm:$0xff]
    %v1784 = vld [vmem:[#allocation7 + $0x3b0] sm:$0xff]
    %v1785 = vld [vmem:[#allocation7 + $0x3b8] sm:$0xff]
    %v1786 = vld [vmem:[#allocation7 + $0x3c0] sm:$0xff]
    %v1787 = vld [vmem:[#allocation7 + $0x3c8] sm:$0xff]
    %v1788 = vld [vmem:[#allocation7 + $0x3d0] sm:$0xff]
    %v1789 = vld [vmem:[#allocation7 + $0x3d8] sm:$0xff]
    %v1790 = vld [vmem:[#allocation7 + $0x3e0] sm:$0xff]
    %v1791 = vld [vmem:[#allocation7 + $0x3e8] sm:$0xff]
    %v1792 = vld [vmem:[#allocation7 + $0x3f0] sm:$0xff]
    %v1793 = vld [vmem:[#allocation7 + $0x3f8] sm:$0xff]
    %v1922 = vunpack.c.l.b16 %v1666
    %v1923 = vunpack.c.h.b16 %v1666
    %v1924 = vunpack.c.l.b16 %v1667
    %v1925 = vunpack.c.h.b16 %v1667
    %v1926 = vunpack.c.l.b16 %v1668
    %v1927 = vunpack.c.h.b16 %v1668
    %v1928 = vunpack.c.l.b16 %v1669
    %v1929 = vunpack.c.h.b16 %v1669
    %v1930 = vunpack.c.l.b16 %v1670
    %v1931 = vunpack.c.h.b16 %v1670
    %v1932 = vunpack.c.l.b16 %v1671
    %v1933 = vunpack.c.h.b16 %v1671
    %v1934 = vunpack.c.l.b16 %v1672
    %v1935 = vunpack.c.h.b16 %v1672
    %v1936 = vunpack.c.l.b16 %v1673
    %v1937 = vunpack.c.h.b16 %v1673
    %v1938 = vunpack.c.l.b16 %v1674
    %v1939 = vunpack.c.h.b16 %v1674
    %v1940 = vunpack.c.l.b16 %v1675
    %v1941 = vunpack.c.h.b16 %v1675
    %v1942 = vunpack.c.l.b16 %v1676
    %v1943 = vunpack.c.h.b16 %v1676
    %v1944 = vunpack.c.l.b16 %v1677
    %v1945 = vunpack.c.h.b16 %v1677
    %v1946 = vunpack.c.l.b16 %v1678
    %v1947 = vunpack.c.h.b16 %v1678
    %v1948 = vunpack.c.l.b16 %v1679
    %v1949 = vunpack.c.h.b16 %v1679
    %v1950 = vunpack.c.l.b16 %v1680
    %v1951 = vunpack.c.h.b16 %v1680
    %v1952 = vunpack.c.l.b16 %v1681
    %v1953 = vunpack.c.h.b16 %v1681
    %v1954 = vunpack.c.l.b16 %v1682
    %v1955 = vunpack.c.h.b16 %v1682
    %v1956 = vunpack.c.l.b16 %v1683
    %v1957 = vunpack.c.h.b16 %v1683
    %v1958 = vunpack.c.l.b16 %v1684
    %v1959 = vunpack.c.h.b16 %v1684
    %v1960 = vunpack.c.l.b16 %v1685
    %v1961 = vunpack.c.h.b16 %v1685
    %v1962 = vunpack.c.l.b16 %v1686
    %v1963 = vunpack.c.h.b16 %v1686
    %v1964 = vunpack.c.l.b16 %v1687
    %v1965 = vunpack.c.h.b16 %v1687
    %v1966 = vunpack.c.l.b16 %v1688
    %v1967 = vunpack.c.h.b16 %v1688
    %v1968 = vunpack.c.l.b16 %v1689
    %v1969 = vunpack.c.h.b16 %v1689
    %v1970 = vunpack.c.l.b16 %v1690
    %v1971 = vunpack.c.h.b16 %v1690
    %v1972 = vunpack.c.l.b16 %v1691
    %v1973 = vunpack.c.h.b16 %v1691
    %v1974 = vunpack.c.l.b16 %v1692
    %v1975 = vunpack.c.h.b16 %v1692
    %v1976 = vunpack.c.l.b16 %v1693
    %v1977 = vunpack.c.h.b16 %v1693
    %v1978 = vunpack.c.l.b16 %v1694
    %v1979 = vunpack.c.h.b16 %v1694
    %v1980 = vunpack.c.l.b16 %v1695
    %v1981 = vunpack.c.h.b16 %v1695
    %v1982 = vunpack.c.l.b16 %v1696
    %v1983 = vunpack.c.h.b16 %v1696
    %v1984 = vunpack.c.l.b16 %v1697
    %v1985 = vunpack.c.h.b16 %v1697
    %v1986 = vunpack.c.l.b16 %v1698
    %v1987 = vunpack.c.h.b16 %v1698
    %v1988 = vunpack.c.l.b16 %v1699
    %v1989 = vunpack.c.h.b16 %v1699
    %v1990 = vunpack.c.l.b16 %v1700
    %v1991 = vunpack.c.h.b16 %v1700
    %v1992 = vunpack.c.l.b16 %v1701
    %v1993 = vunpack.c.h.b16 %v1701
    %v1994 = vunpack.c.l.b16 %v1702
    %v1995 = vunpack.c.h.b16 %v1702
    %v1996 = vunpack.c.l.b16 %v1703
    %v1997 = vunpack.c.h.b16 %v1703
    %v1998 = vunpack.c.l.b16 %v1704
    %v1999 = vunpack.c.h.b16 %v1704
    %v2000 = vunpack.c.l.b16 %v1705
    %v2001 = vunpack.c.h.b16 %v1705
    %v2002 = vunpack.c.l.b16 %v1706
    %v2003 = vunpack.c.h.b16 %v1706
    %v2004 = vunpack.c.l.b16 %v1707
    %v2005 = vunpack.c.h.b16 %v1707
    %v2006 = vunpack.c.l.b16 %v1708
    %v2007 = vunpack.c.h.b16 %v1708
    %v2008 = vunpack.c.l.b16 %v1709
    %v2009 = vunpack.c.h.b16 %v1709
    %v2010 = vunpack.c.l.b16 %v1710
    %v2011 = vunpack.c.h.b16 %v1710
    %v2012 = vunpack.c.l.b16 %v1711
    %v2013 = vunpack.c.h.b16 %v1711
    %v2014 = vunpack.c.l.b16 %v1712
    %v2015 = vunpack.c.h.b16 %v1712
    %v2016 = vunpack.c.l.b16 %v1713
    %v2017 = vunpack.c.h.b16 %v1713
    %v2018 = vunpack.c.l.b16 %v1714
    %v2019 = vunpack.c.h.b16 %v1714
    %v2020 = vunpack.c.l.b16 %v1715
    %v2021 = vunpack.c.h.b16 %v1715
    %v2022 = vunpack.c.l.b16 %v1716
    %v2023 = vunpack.c.h.b16 %v1716
    %v2024 = vunpack.c.l.b16 %v1717
    %v2025 = vunpack.c.h.b16 %v1717
    %v2026 = vunpack.c.l.b16 %v1718
    %v2027 = vunpack.c.h.b16 %v1718
    %v2028 = vunpack.c.l.b16 %v1719
    %v2029 = vunpack.c.h.b16 %v1719
    %v2030 = vunpack.c.l.b16 %v1720
    %v2031 = vunpack.c.h.b16 %v1720
    %v2032 = vunpack.c.l.b16 %v1721
    %v2033 = vunpack.c.h.b16 %v1721
    %v2034 = vunpack.c.l.b16 %v1722
    %v2035 = vunpack.c.h.b16 %v1722
    %v2036 = vunpack.c.l.b16 %v1723
    %v2037 = vunpack.c.h.b16 %v1723
    %v2038 = vunpack.c.l.b16 %v1724
    %v2039 = vunpack.c.h.b16 %v1724
    %v2040 = vunpack.c.l.b16 %v1725
    %v2041 = vunpack.c.h.b16 %v1725
    %v2042 = vunpack.c.l.b16 %v1726
    %v2043 = vunpack.c.h.b16 %v1726
    %v2044 = vunpack.c.l.b16 %v1727
    %v2045 = vunpack.c.h.b16 %v1727
    %v2046 = vunpack.c.l.b16 %v1728
    %v2047 = vunpack.c.h.b16 %v1728
    %v2048 = vunpack.c.l.b16 %v1729
    %v2049 = vunpack.c.h.b16 %v1729
    %v2050 = vunpack.c.l.b16 %v1730
    %v2051 = vunpack.c.h.b16 %v1730
    %v2052 = vunpack.c.l.b16 %v1731
    %v2053 = vunpack.c.h.b16 %v1731
    %v2054 = vunpack.c.l.b16 %v1732
    %v2055 = vunpack.c.h.b16 %v1732
    %v2056 = vunpack.c.l.b16 %v1733
    %v2057 = vunpack.c.h.b16 %v1733
    %v2058 = vunpack.c.l.b16 %v1734
    %v2059 = vunpack.c.h.b16 %v1734
    %v2060 = vunpack.c.l.b16 %v1735
    %v2061 = vunpack.c.h.b16 %v1735
    %v2062 = vunpack.c.l.b16 %v1736
    %v2063 = vunpack.c.h.b16 %v1736
    %v2064 = vunpack.c.l.b16 %v1737
    %v2065 = vunpack.c.h.b16 %v1737
    %v2066 = vunpack.c.l.b16 %v1738
    %v2067 = vunpack.c.h.b16 %v1738
    %v2068 = vunpack.c.l.b16 %v1739
    %v2069 = vunpack.c.h.b16 %v1739
    %v2070 = vunpack.c.l.b16 %v1740
    %v2071 = vunpack.c.h.b16 %v1740
    %v2072 = vunpack.c.l.b16 %v1741
    %v2073 = vunpack.c.h.b16 %v1741
    %v2074 = vunpack.c.l.b16 %v1742
    %v2075 = vunpack.c.h.b16 %v1742
    %v2076 = vunpack.c.l.b16 %v1743
    %v2077 = vunpack.c.h.b16 %v1743
    %v2078 = vunpack.c.l.b16 %v1744
    %v2079 = vunpack.c.h.b16 %v1744
    %v2080 = vunpack.c.l.b16 %v1745
    %v2081 = vunpack.c.h.b16 %v1745
    %v2082 = vunpack.c.l.b16 %v1746
    %v2083 = vunpack.c.h.b16 %v1746
    %v2084 = vunpack.c.l.b16 %v1747
    %v2085 = vunpack.c.h.b16 %v1747
    %v2086 = vunpack.c.l.b16 %v1748
    %v2087 = vunpack.c.h.b16 %v1748
    %v2088 = vunpack.c.l.b16 %v1749
    %v2089 = vunpack.c.h.b16 %v1749
    %v2090 = vunpack.c.l.b16 %v1750
    %v2091 = vunpack.c.h.b16 %v1750
    %v2092 = vunpack.c.l.b16 %v1751
    %v2093 = vunpack.c.h.b16 %v1751
    %v2094 = vunpack.c.l.b16 %v1752
    %v2095 = vunpack.c.h.b16 %v1752
    %v2096 = vunpack.c.l.b16 %v1753
    %v2097 = vunpack.c.h.b16 %v1753
    %v2098 = vunpack.c.l.b16 %v1754
    %v2099 = vunpack.c.h.b16 %v1754
    %v2100 = vunpack.c.l.b16 %v1755
    %v2101 = vunpack.c.h.b16 %v1755
    %v2102 = vunpack.c.l.b16 %v1756
    %v2103 = vunpack.c.h.b16 %v1756
    %v2104 = vunpack.c.l.b16 %v1757
    %v2105 = vunpack.c.h.b16 %v1757
    %v2106 = vunpack.c.l.b16 %v1758
    %v2107 = vunpack.c.h.b16 %v1758
    %v2108 = vunpack.c.l.b16 %v1759
    %v2109 = vunpack.c.h.b16 %v1759
    %v2110 = vunpack.c.l.b16 %v1760
    %v2111 = vunpack.c.h.b16 %v1760
    %v2112 = vunpack.c.l.b16 %v1761
    %v2113 = vunpack.c.h.b16 %v1761
    %v2114 = vunpack.c.l.b16 %v1762
    %v2115 = vunpack.c.h.b16 %v1762
    %v2116 = vunpack.c.l.b16 %v1763
    %v2117 = vunpack.c.h.b16 %v1763
    %v2118 = vunpack.c.l.b16 %v1764
    %v2119 = vunpack.c.h.b16 %v1764
    %v2120 = vunpack.c.l.b16 %v1765
    %v2121 = vunpack.c.h.b16 %v1765
    %v2122 = vunpack.c.l.b16 %v1766
    %v2123 = vunpack.c.h.b16 %v1766
    %v2124 = vunpack.c.l.b16 %v1767
    %v2125 = vunpack.c.h.b16 %v1767
    %v2126 = vunpack.c.l.b16 %v1768
    %v2127 = vunpack.c.h.b16 %v1768
    %v2128 = vunpack.c.l.b16 %v1769
    %v2129 = vunpack.c.h.b16 %v1769
    %v2130 = vunpack.c.l.b16 %v1770
    %v2131 = vunpack.c.h.b16 %v1770
    %v2132 = vunpack.c.l.b16 %v1771
    %v2133 = vunpack.c.h.b16 %v1771
    %v2134 = vunpack.c.l.b16 %v1772
    %v2135 = vunpack.c.h.b16 %v1772
    %v2136 = vunpack.c.l.b16 %v1773
    %v2137 = vunpack.c.h.b16 %v1773
    %v2138 = vunpack.c.l.b16 %v1774
    %v2139 = vunpack.c.h.b16 %v1774
    %v2140 = vunpack.c.l.b16 %v1775
    %v2141 = vunpack.c.h.b16 %v1775
    %v2142 = vunpack.c.l.b16 %v1776
    %v2143 = vunpack.c.h.b16 %v1776
    %v2144 = vunpack.c.l.b16 %v1777
    %v2145 = vunpack.c.h.b16 %v1777
    %v2146 = vunpack.c.l.b16 %v1778
    %v2147 = vunpack.c.h.b16 %v1778
    %v2148 = vunpack.c.l.b16 %v1779
    %v2149 = vunpack.c.h.b16 %v1779
    %v2150 = vunpack.c.l.b16 %v1780
    %v2151 = vunpack.c.h.b16 %v1780
    %v2152 = vunpack.c.l.b16 %v1781
    %v2153 = vunpack.c.h.b16 %v1781
    %v2154 = vunpack.c.l.b16 %v1782
    %v2155 = vunpack.c.h.b16 %v1782
    %v2156 = vunpack.c.l.b16 %v1783
    %v2157 = vunpack.c.h.b16 %v1783
    %v2158 = vunpack.c.l.b16 %v1784
    %v2159 = vunpack.c.h.b16 %v1784
    %v2160 = vunpack.c.l.b16 %v1785
    %v2161 = vunpack.c.h.b16 %v1785
    %v2162 = vunpack.c.l.b16 %v1786
    %v2163 = vunpack.c.h.b16 %v1786
    %v2164 = vunpack.c.l.b16 %v1787
    %v2165 = vunpack.c.h.b16 %v1787
    %v2166 = vunpack.c.l.b16 %v1788
    %v2167 = vunpack.c.h.b16 %v1788
    %v2168 = vunpack.c.l.b16 %v1789
    %v2169 = vunpack.c.h.b16 %v1789
    %v2170 = vunpack.c.l.b16 %v1790
    %v2171 = vunpack.c.h.b16 %v1790
    %v2172 = vunpack.c.l.b16 %v1791
    %v2173 = vunpack.c.h.b16 %v1791
    %v2174 = vunpack.c.l.b16 %v1792
    %v2175 = vunpack.c.h.b16 %v1792
    %v2176 = vunpack.c.l.b16 %v1793
    %v2177 = vunpack.c.h.b16 %v1793
    %v2178 = vpack.c.b16 %v1926, %v1922
    %v2179 = vpack.c.b16 %v1927, %v1923
    %v2180 = vpack.c.b16 %v1928, %v1924
    %v2181 = vpack.c.b16 %v1929, %v1925
    %v2182 = vpack.c.b16 %v1934, %v1930
    %v2183 = vpack.c.b16 %v1935, %v1931
    %v2184 = vpack.c.b16 %v1936, %v1932
    %v2185 = vpack.c.b16 %v1937, %v1933
    %v2186 = vpack.c.b16 %v1942, %v1938
    %v2187 = vpack.c.b16 %v1943, %v1939
    %v2188 = vpack.c.b16 %v1944, %v1940
    %v2189 = vpack.c.b16 %v1945, %v1941
    %v2190 = vpack.c.b16 %v1950, %v1946
    %v2191 = vpack.c.b16 %v1951, %v1947
    %v2192 = vpack.c.b16 %v1952, %v1948
    %v2193 = vpack.c.b16 %v1953, %v1949
    %v2194 = vpack.c.b16 %v1958, %v1954
    %v2195 = vpack.c.b16 %v1959, %v1955
    %v2196 = vpack.c.b16 %v1960, %v1956
    %v2197 = vpack.c.b16 %v1961, %v1957
    %v2198 = vpack.c.b16 %v1966, %v1962
    %v2199 = vpack.c.b16 %v1967, %v1963
    %v2200 = vpack.c.b16 %v1968, %v1964
    %v2201 = vpack.c.b16 %v1969, %v1965
    %v2202 = vpack.c.b16 %v1974, %v1970
    %v2203 = vpack.c.b16 %v1975, %v1971
    %v2204 = vpack.c.b16 %v1976, %v1972
    %v2205 = vpack.c.b16 %v1977, %v1973
    %v2206 = vpack.c.b16 %v1982, %v1978
    %v2207 = vpack.c.b16 %v1983, %v1979
    %v2208 = vpack.c.b16 %v1984, %v1980
    %v2209 = vpack.c.b16 %v1985, %v1981
    %v2210 = vpack.c.b16 %v1990, %v1986
    %v2211 = vpack.c.b16 %v1991, %v1987
    %v2212 = vpack.c.b16 %v1992, %v1988
    %v2213 = vpack.c.b16 %v1993, %v1989
    %v2214 = vpack.c.b16 %v1998, %v1994
    %v2215 = vpack.c.b16 %v1999, %v1995
    %v2216 = vpack.c.b16 %v2000, %v1996
    %v2217 = vpack.c.b16 %v2001, %v1997
    %v2218 = vpack.c.b16 %v2006, %v2002
    %v2219 = vpack.c.b16 %v2007, %v2003
    %v2220 = vpack.c.b16 %v2008, %v2004
    %v2221 = vpack.c.b16 %v2009, %v2005
    %v2222 = vpack.c.b16 %v2014, %v2010
    %v2223 = vpack.c.b16 %v2015, %v2011
    %v2224 = vpack.c.b16 %v2016, %v2012
    %v2225 = vpack.c.b16 %v2017, %v2013
    %v2226 = vpack.c.b16 %v2022, %v2018
    %v2227 = vpack.c.b16 %v2023, %v2019
    %v2228 = vpack.c.b16 %v2024, %v2020
    %v2229 = vpack.c.b16 %v2025, %v2021
    %v2230 = vpack.c.b16 %v2030, %v2026
    %v2231 = vpack.c.b16 %v2031, %v2027
    %v2232 = vpack.c.b16 %v2032, %v2028
    %v2233 = vpack.c.b16 %v2033, %v2029
    %v2234 = vpack.c.b16 %v2038, %v2034
    %v2235 = vpack.c.b16 %v2039, %v2035
    %v2236 = vpack.c.b16 %v2040, %v2036
    %v2237 = vpack.c.b16 %v2041, %v2037
    %v2238 = vpack.c.b16 %v2046, %v2042
    %v2239 = vpack.c.b16 %v2047, %v2043
    %v2240 = vpack.c.b16 %v2048, %v2044
    %v2241 = vpack.c.b16 %v2049, %v2045
    %v2242 = vpack.c.b16 %v2054, %v2050
    %v2243 = vpack.c.b16 %v2055, %v2051
    %v2244 = vpack.c.b16 %v2056, %v2052
    %v2245 = vpack.c.b16 %v2057, %v2053
    %v2246 = vpack.c.b16 %v2062, %v2058
    %v2247 = vpack.c.b16 %v2063, %v2059
    %v2248 = vpack.c.b16 %v2064, %v2060
    %v2249 = vpack.c.b16 %v2065, %v2061
    %v2250 = vpack.c.b16 %v2070, %v2066
    %v2251 = vpack.c.b16 %v2071, %v2067
    %v2252 = vpack.c.b16 %v2072, %v2068
    %v2253 = vpack.c.b16 %v2073, %v2069
    %v2254 = vpack.c.b16 %v2078, %v2074
    %v2255 = vpack.c.b16 %v2079, %v2075
    %v2256 = vpack.c.b16 %v2080, %v2076
    %v2257 = vpack.c.b16 %v2081, %v2077
    %v2258 = vpack.c.b16 %v2086, %v2082
    %v2259 = vpack.c.b16 %v2087, %v2083
    %v2260 = vpack.c.b16 %v2088, %v2084
    %v2261 = vpack.c.b16 %v2089, %v2085
    %v2262 = vpack.c.b16 %v2094, %v2090
    %v2263 = vpack.c.b16 %v2095, %v2091
    %v2264 = vpack.c.b16 %v2096, %v2092
    %v2265 = vpack.c.b16 %v2097, %v2093
    %v2266 = vpack.c.b16 %v2102, %v2098
    %v2267 = vpack.c.b16 %v2103, %v2099
    %v2268 = vpack.c.b16 %v2104, %v2100
    %v2269 = vpack.c.b16 %v2105, %v2101
    %v2270 = vpack.c.b16 %v2110, %v2106
    %v2271 = vpack.c.b16 %v2111, %v2107
    %v2272 = vpack.c.b16 %v2112, %v2108
    %v2273 = vpack.c.b16 %v2113, %v2109
    %v2274 = vpack.c.b16 %v2118, %v2114
    %v2275 = vpack.c.b16 %v2119, %v2115
    %v2276 = vpack.c.b16 %v2120, %v2116
    %v2277 = vpack.c.b16 %v2121, %v2117
    %v2278 = vpack.c.b16 %v2126, %v2122
    %v2279 = vpack.c.b16 %v2127, %v2123
    %v2280 = vpack.c.b16 %v2128, %v2124
    %v2281 = vpack.c.b16 %v2129, %v2125
    %v2282 = vpack.c.b16 %v2134, %v2130
    %v2283 = vpack.c.b16 %v2135, %v2131
    %v2284 = vpack.c.b16 %v2136, %v2132
    %v2285 = vpack.c.b16 %v2137, %v2133
    %v2286 = vpack.c.b16 %v2142, %v2138
    %v2287 = vpack.c.b16 %v2143, %v2139
    %v2288 = vpack.c.b16 %v2144, %v2140
    %v2289 = vpack.c.b16 %v2145, %v2141
    %v2290 = vpack.c.b16 %v2150, %v2146
    %v2291 = vpack.c.b16 %v2151, %v2147
    %v2292 = vpack.c.b16 %v2152, %v2148
    %v2293 = vpack.c.b16 %v2153, %v2149
    %v2294 = vpack.c.b16 %v2158, %v2154
    %v2295 = vpack.c.b16 %v2159, %v2155
    %v2296 = vpack.c.b16 %v2160, %v2156
    %v2297 = vpack.c.b16 %v2161, %v2157
    %v2298 = vpack.c.b16 %v2166, %v2162
    %v2299 = vpack.c.b16 %v2167, %v2163
    %v2300 = vpack.c.b16 %v2168, %v2164
    %v2301 = vpack.c.b16 %v2169, %v2165
    %v2302 = vpack.c.b16 %v2174, %v2170
    %v2303 = vpack.c.b16 %v2175, %v2171
    %v2304 = vpack.c.b16 %v2176, %v2172
    %v2305 = vpack.c.b16 %v2177, %v2173
    %2434 = vmatprep.subr.bf16.mxu0 %v2179
    %2435 = vmatpush1.bf16.msra.mxu0 %v2178
    %2436 = vmatprep.subr.bf16.mxu0 %v2183
    %2437 = vmatpush1.bf16.msra.mxu0 %v2182
    %2438 = vmatprep.subr.bf16.mxu0 %v2187
    %2439 = vmatpush1.bf16.msra.mxu0 %v2186
    %2440 = vmatprep.subr.bf16.mxu0 %v2191
    %2441 = vmatpush1.bf16.msra.mxu0 %v2190
    %2442 = vmatprep.subr.bf16.mxu0 %v2195
    %2443 = vmatpush1.bf16.msra.mxu0 %v2194
    %2444 = vmatprep.subr.bf16.mxu0 %v2199
    %2445 = vmatpush1.bf16.msra.mxu0 %v2198
    %2446 = vmatprep.subr.bf16.mxu0 %v2203
    %2447 = vmatpush1.bf16.msra.mxu0 %v2202
    %2448 = vmatprep.subr.bf16.mxu0 %v2207
    %2449 = vmatpush1.bf16.msra.mxu0 %v2206
    %2450 = vmatprep.subr.bf16.mxu0 %v2211
    %2451 = vmatpush1.bf16.msra.mxu0 %v2210
    %2452 = vmatprep.subr.bf16.mxu0 %v2215
    %2453 = vmatpush1.bf16.msra.mxu0 %v2214
    %2454 = vmatprep.subr.bf16.mxu0 %v2219
    %2455 = vmatpush1.bf16.msra.mxu0 %v2218
    %2456 = vmatprep.subr.bf16.mxu0 %v2223
    %2457 = vmatpush1.bf16.msra.mxu0 %v2222
    %2458 = vmatprep.subr.bf16.mxu0 %v2227
    %2459 = vmatpush1.bf16.msra.mxu0 %v2226
    %2460 = vmatprep.subr.bf16.mxu0 %v2231
    %2461 = vmatpush1.bf16.msra.mxu0 %v2230
    %2462 = vmatprep.subr.bf16.mxu0 %v2235
    %2463 = vmatpush1.bf16.msra.mxu0 %v2234
    %2464 = vmatprep.subr.bf16.mxu0 %v2239
    %2465 = vmatpush1.bf16.msra.mxu0 %v2238
    %2466 = vmatprep.mubr.bf16.mxu0 %v1535
    %2467 = vmatmul.mubr.bf16.gmra.mrb[0].mxu0 %v1534
    %v2468 = vpop.f32.mrb[0].mxu0
    %v2469 = vadd.f32 0.0, %v2468
    %v2470 = vpop.f32.mrb[0].mxu0
    %v2471 = vadd.f32 0.0, %v2470
    %v2472 = vpop.f32.mrb[0].mxu0
    %v2473 = vpop.f32.mrb[0].mxu0
    %2474 = vdwg.mxu0
    %2475 = vmatprep.subr.bf16.mxu0 %v2243
    %2476 = vmatpush1.bf16.msra.mxu0 %v2242
    %2477 = vmatprep.subr.bf16.mxu0 %v2247
    %2478 = vmatpush1.bf16.msra.mxu0 %v2246
    %2479 = vmatprep.subr.bf16.mxu0 %v2251
    %2480 = vmatpush1.bf16.msra.mxu0 %v2250
    %2481 = vmatprep.subr.bf16.mxu0 %v2255
    %2482 = vmatpush1.bf16.msra.mxu0 %v2254
    %2483 = vmatprep.subr.bf16.mxu0 %v2259
    %2484 = vmatpush1.bf16.msra.mxu0 %v2258
    %2485 = vmatprep.subr.bf16.mxu0 %v2263
    %2486 = vmatpush1.bf16.msra.mxu0 %v2262
    %2487 = vmatprep.subr.bf16.mxu0 %v2267
    %2488 = vmatpush1.bf16.msra.mxu0 %v2266
    %2489 = vmatprep.subr.bf16.mxu0 %v2271
    %2490 = vmatpush1.bf16.msra.mxu0 %v2270
    %2491 = vmatprep.subr.bf16.mxu0 %v2275
    %2492 = vmatpush1.bf16.msra.mxu0 %v2274
    %2493 = vmatprep.subr.bf16.mxu0 %v2279
    %2494 = vmatpush1.bf16.msra.mxu0 %v2278
    %2495 = vmatprep.subr.bf16.mxu0 %v2283
    %2496 = vmatpush1.bf16.msra.mxu0 %v2282
    %2497 = vmatprep.subr.bf16.mxu0 %v2287
    %2498 = vmatpush1.bf16.msra.mxu0 %v2286
    %2499 = vmatprep.subr.bf16.mxu0 %v2291
    %2500 = vmatpush1.bf16.msra.mxu0 %v2290
    %2501 = vmatprep.subr.bf16.mxu0 %v2295
    %2502 = vmatpush1.bf16.msra.mxu0 %v2294
    %2503 = vmatprep.subr.bf16.mxu0 %v2299
    %2504 = vmatpush1.bf16.msra.mxu0 %v2298
    %2505 = vmatprep.subr.bf16.mxu0 %v2303
    %2506 = vmatpush1.bf16.msra.mxu0 %v2302
    %2507 = vmatprep.mubr.bf16.mxu0 %v1537
    %2508 = vmatmul.mubr.bf16.gmra.mrb[0].mxu0 %v1536
    %v2509 = vpop.f32.mrb[0].mxu0
    %v2510 = vadd.f32 %v2469, %v2509
    %v2511 = vpop.f32.mrb[0].mxu0
    %v2512 = vadd.f32 %v2471, %v2511
    %v2513 = vpop.f32.mrb[0].mxu0
    %v2514 = vpop.f32.mrb[0].mxu0
    %2515 = vdwg.mxu0
    %2516 = vmatprep.subr.bf16.mxu0 %v2181
    %2517 = vmatpush1.bf16.msra.mxu0 %v2180
    %2518 = vmatprep.subr.bf16.mxu0 %v2185
    %2519 = vmatpush1.bf16.msra.mxu0 %v2184
    %2520 = vmatprep.subr.bf16.mxu0 %v2189
    %2521 = vmatpush1.bf16.msra.mxu0 %v2188
    %2522 = vmatprep.subr.bf16.mxu0 %v2193
    %2523 = vmatpush1.bf16.msra.mxu0 %v2192
    %2524 = vmatprep.subr.bf16.mxu0 %v2197
    %2525 = vmatpush1.bf16.msra.mxu0 %v2196
    %2526 = vmatprep.subr.bf16.mxu0 %v2201
    %2527 = vmatpush1.bf16.msra.mxu0 %v2200
    %2528 = vmatprep.subr.bf16.mxu0 %v2205
    %2529 = vmatpush1.bf16.msra.mxu0 %v2204
    %2530 = vmatprep.subr.bf16.mxu0 %v2209
    %2531 = vmatpush1.bf16.msra.mxu0 %v2208
    %2532 = vmatprep.subr.bf16.mxu0 %v2213
    %2533 = vmatpush1.bf16.msra.mxu0 %v2212
    %2534 = vmatprep.subr.bf16.mxu0 %v2217
    %2535 = vmatpush1.bf16.msra.mxu0 %v2216
    %2536 = vmatprep.subr.bf16.mxu0 %v2221
    %2537 = vmatpush1.bf16.msra.mxu0 %v2220
    %2538 = vmatprep.subr.bf16.mxu0 %v2225
    %2539 = vmatpush1.bf16.msra.mxu0 %v2224
    %2540 = vmatprep.subr.bf16.mxu0 %v2229
    %2541 = vmatpush1.bf16.msra.mxu0 %v2228
    %2542 = vmatprep.subr.bf16.mxu0 %v2233
    %2543 = vmatpush1.bf16.msra.mxu0 %v2232
    %2544 = vmatprep.subr.bf16.mxu0 %v2237
    %2545 = vmatpush1.bf16.msra.mxu0 %v2236
    %2546 = vmatprep.subr.bf16.mxu0 %v2241
    %2547 = vmatpush1.bf16.msra.mxu0 %v2240
    %2548 = vmatprep.mubr.bf16.mxu0 %v1535
    %2549 = vmatmul.mubr.bf16.gmra.mrb[0].mxu0 %v1534
    %v2550 = vpop.f32.mrb[0].mxu0
    %v2551 = vadd.f32 0.0, %v2550
    %v2552 = vpop.f32.mrb[0].mxu0
    %v2553 = vadd.f32 0.0, %v2552
    %v2554 = vpop.f32.mrb[0].mxu0
    %v2555 = vpop.f32.mrb[0].mxu0
    %2556 = vdwg.mxu0
    %2557 = vmatprep.subr.bf16.mxu0 %v2245
    %2558 = vmatpush1.bf16.msra.mxu0 %v2244
    %2559 = vmatprep.subr.bf16.mxu0 %v2249
    %2560 = vmatpush1.bf16.msra.mxu0 %v2248
    %2561 = vmatprep.subr.bf16.mxu0 %v2253
    %2562 = vmatpush1.bf16.msra.mxu0 %v2252
    %2563 = vmatprep.subr.bf16.mxu0 %v2257
    %2564 = vmatpush1.bf16.msra.mxu0 %v2256
    %2565 = vmatprep.subr.bf16.mxu0 %v2261
    %2566 = vmatpush1.bf16.msra.mxu0 %v2260
    %2567 = vmatprep.subr.bf16.mxu0 %v2265
    %2568 = vmatpush1.bf16.msra.mxu0 %v2264
    %2569 = vmatprep.subr.bf16.mxu0 %v2269
    %2570 = vmatpush1.bf16.msra.mxu0 %v2268
    %2571 = vmatprep.subr.bf16.mxu0 %v2273
    %2572 = vmatpush1.bf16.msra.mxu0 %v2272
    %2573 = vmatprep.subr.bf16.mxu0 %v2277
    %2574 = vmatpush1.bf16.msra.mxu0 %v2276
    %2575 = vmatprep.subr.bf16.mxu0 %v2281
    %2576 = vmatpush1.bf16.msra.mxu0 %v2280
    %2577 = vmatprep.subr.bf16.mxu0 %v2285
    %2578 = vmatpush1.bf16.msra.mxu0 %v2284
    %2579 = vmatprep.subr.bf16.mxu0 %v2289
    %2580 = vmatpush1.bf16.msra.mxu0 %v2288
    %2581 = vmatprep.subr.bf16.mxu0 %v2293
    %2582 = vmatpush1.bf16.msra.mxu0 %v2292
    %2583 = vmatprep.subr.bf16.mxu0 %v2297
    %2584 = vmatpush1.bf16.msra.mxu0 %v2296
    %2585 = vmatprep.subr.bf16.mxu0 %v2301
    %2586 = vmatpush1.bf16.msra.mxu0 %v2300
    %2587 = vmatprep.subr.bf16.mxu0 %v2305
    %2588 = vmatpush1.bf16.msra.mxu0 %v2304
    %2589 = vmatprep.mubr.bf16.mxu0 %v1537
    %2590 = vmatmul.mubr.bf16.gmra.mrb[0].mxu0 %v1536
    %v2591 = vpop.f32.mrb[0].mxu0
    %v2592 = vadd.f32 %v2551, %v2591
    %v2593 = vpop.f32.mrb[0].mxu0
    %v2594 = vadd.f32 %v2553, %v2593
    %v2595 = vpop.f32.mrb[0].mxu0
    %v2596 = vpop.f32.mrb[0].mxu0
    %2597 = vdwg.mxu0
    %v2726 = vunpack.c.l.b16 %v1538
    %v2727 = vunpack.c.h.b16 %v1538
    %v2728 = vunpack.c.l.b16 %v1539
    %v2729 = vunpack.c.h.b16 %v1539
    %v2730 = vunpack.c.l.b16 %v1540
    %v2731 = vunpack.c.h.b16 %v1540
    %v2732 = vunpack.c.l.b16 %v1541
    %v2733 = vunpack.c.h.b16 %v1541
    %v2734 = vunpack.c.l.b16 %v1542
    %v2735 = vunpack.c.h.b16 %v1542
    %v2736 = vunpack.c.l.b16 %v1543
    %v2737 = vunpack.c.h.b16 %v1543
    %v2738 = vunpack.c.l.b16 %v1544
    %v2739 = vunpack.c.h.b16 %v1544
    %v2740 = vunpack.c.l.b16 %v1545
    %v2741 = vunpack.c.h.b16 %v1545
    %v2742 = vunpack.c.l.b16 %v1546
    %v2743 = vunpack.c.h.b16 %v1546
    %v2744 = vunpack.c.l.b16 %v1547
    %v2745 = vunpack.c.h.b16 %v1547
    %v2746 = vunpack.c.l.b16 %v1548
    %v2747 = vunpack.c.h.b16 %v1548
    %v2748 = vunpack.c.l.b16 %v1549
    %v2749 = vunpack.c.h.b16 %v1549
    %v2750 = vunpack.c.l.b16 %v1550
    %v2751 = vunpack.c.h.b16 %v1550
    %v2752 = vunpack.c.l.b16 %v1551
    %v2753 = vunpack.c.h.b16 %v1551
    %v2754 = vunpack.c.l.b16 %v1552
    %v2755 = vunpack.c.h.b16 %v1552
    %v2756 = vunpack.c.l.b16 %v1553
    %v2757 = vunpack.c.h.b16 %v1553
    %v2758 = vunpack.c.l.b16 %v1554
    %v2759 = vunpack.c.h.b16 %v1554
    %v2760 = vunpack.c.l.b16 %v1555
    %v2761 = vunpack.c.h.b16 %v1555
    %v2762 = vunpack.c.l.b16 %v1556
    %v2763 = vunpack.c.h.b16 %v1556
    %v2764 = vunpack.c.l.b16 %v1557
    %v2765 = vunpack.c.h.b16 %v1557
    %v2766 = vunpack.c.l.b16 %v1558
    %v2767 = vunpack.c.h.b16 %v1558
    %v2768 = vunpack.c.l.b16 %v1559
    %v2769 = vunpack.c.h.b16 %v1559
    %v2770 = vunpack.c.l.b16 %v1560
    %v2771 = vunpack.c.h.b16 %v1560
    %v2772 = vunpack.c.l.b16 %v1561
    %v2773 = vunpack.c.h.b16 %v1561
    %v2774 = vunpack.c.l.b16 %v1562
    %v2775 = vunpack.c.h.b16 %v1562
    %v2776 = vunpack.c.l.b16 %v1563
    %v2777 = vunpack.c.h.b16 %v1563
    %v2778 = vunpack.c.l.b16 %v1564
    %v2779 = vunpack.c.h.b16 %v1564
    %v2780 = vunpack.c.l.b16 %v1565
    %v2781 = vunpack.c.h.b16 %v1565
    %v2782 = vunpack.c.l.b16 %v1566
    %v2783 = vunpack.c.h.b16 %v1566
    %v2784 = vunpack.c.l.b16 %v1567
    %v2785 = vunpack.c.h.b16 %v1567
    %v2786 = vunpack.c.l.b16 %v1568
    %v2787 = vunpack.c.h.b16 %v1568
    %v2788 = vunpack.c.l.b16 %v1569
    %v2789 = vunpack.c.h.b16 %v1569
    %v2790 = vunpack.c.l.b16 %v1570
    %v2791 = vunpack.c.h.b16 %v1570
    %v2792 = vunpack.c.l.b16 %v1571
    %v2793 = vunpack.c.h.b16 %v1571
    %v2794 = vunpack.c.l.b16 %v1572
    %v2795 = vunpack.c.h.b16 %v1572
    %v2796 = vunpack.c.l.b16 %v1573
    %v2797 = vunpack.c.h.b16 %v1573
    %v2798 = vunpack.c.l.b16 %v1574
    %v2799 = vunpack.c.h.b16 %v1574
    %v2800 = vunpack.c.l.b16 %v1575
    %v2801 = vunpack.c.h.b16 %v1575
    %v2802 = vunpack.c.l.b16 %v1576
    %v2803 = vunpack.c.h.b16 %v1576
    %v2804 = vunpack.c.l.b16 %v1577
    %v2805 = vunpack.c.h.b16 %v1577
    %v2806 = vunpack.c.l.b16 %v1578
    %v2807 = vunpack.c.h.b16 %v1578
    %v2808 = vunpack.c.l.b16 %v1579
    %v2809 = vunpack.c.h.b16 %v1579
    %v2810 = vunpack.c.l.b16 %v1580
    %v2811 = vunpack.c.h.b16 %v1580
    %v2812 = vunpack.c.l.b16 %v1581
    %v2813 = vunpack.c.h.b16 %v1581
    %v2814 = vunpack.c.l.b16 %v1582
    %v2815 = vunpack.c.h.b16 %v1582
    %v2816 = vunpack.c.l.b16 %v1583
    %v2817 = vunpack.c.h.b16 %v1583
    %v2818 = vunpack.c.l.b16 %v1584
    %v2819 = vunpack.c.h.b16 %v1584
    %v2820 = vunpack.c.l.b16 %v1585
    %v2821 = vunpack.c.h.b16 %v1585
    %v2822 = vunpack.c.l.b16 %v1586
    %v2823 = vunpack.c.h.b16 %v1586
    %v2824 = vunpack.c.l.b16 %v1587
    %v2825 = vunpack.c.h.b16 %v1587
    %v2826 = vunpack.c.l.b16 %v1588
    %v2827 = vunpack.c.h.b16 %v1588
    %v2828 = vunpack.c.l.b16 %v1589
    %v2829 = vunpack.c.h.b16 %v1589
    %v2830 = vunpack.c.l.b16 %v1590
    %v2831 = vunpack.c.h.b16 %v1590
    %v2832 = vunpack.c.l.b16 %v1591
    %v2833 = vunpack.c.h.b16 %v1591
    %v2834 = vunpack.c.l.b16 %v1592
    %v2835 = vunpack.c.h.b16 %v1592
    %v2836 = vunpack.c.l.b16 %v1593
    %v2837 = vunpack.c.h.b16 %v1593
    %v2838 = vunpack.c.l.b16 %v1594
    %v2839 = vunpack.c.h.b16 %v1594
    %v2840 = vunpack.c.l.b16 %v1595
    %v2841 = vunpack.c.h.b16 %v1595
    %v2842 = vunpack.c.l.b16 %v1596
    %v2843 = vunpack.c.h.b16 %v1596
    %v2844 = vunpack.c.l.b16 %v1597
    %v2845 = vunpack.c.h.b16 %v1597
    %v2846 = vunpack.c.l.b16 %v1598
    %v2847 = vunpack.c.h.b16 %v1598
    %v2848 = vunpack.c.l.b16 %v1599
    %v2849 = vunpack.c.h.b16 %v1599
    %v2850 = vunpack.c.l.b16 %v1600
    %v2851 = vunpack.c.h.b16 %v1600
    %v2852 = vunpack.c.l.b16 %v1601
    %v2853 = vunpack.c.h.b16 %v1601
    %v2854 = vunpack.c.l.b16 %v1602
    %v2855 = vunpack.c.h.b16 %v1602
    %v2856 = vunpack.c.l.b16 %v1603
    %v2857 = vunpack.c.h.b16 %v1603
    %v2858 = vunpack.c.l.b16 %v1604
    %v2859 = vunpack.c.h.b16 %v1604
    %v2860 = vunpack.c.l.b16 %v1605
    %v2861 = vunpack.c.h.b16 %v1605
    %v2862 = vunpack.c.l.b16 %v1606
    %v2863 = vunpack.c.h.b16 %v1606
    %v2864 = vunpack.c.l.b16 %v1607
    %v2865 = vunpack.c.h.b16 %v1607
    %v2866 = vunpack.c.l.b16 %v1608
    %v2867 = vunpack.c.h.b16 %v1608
    %v2868 = vunpack.c.l.b16 %v1609
    %v2869 = vunpack.c.h.b16 %v1609
    %v2870 = vunpack.c.l.b16 %v1610
    %v2871 = vunpack.c.h.b16 %v1610
    %v2872 = vunpack.c.l.b16 %v1611
    %v2873 = vunpack.c.h.b16 %v1611
    %v2874 = vunpack.c.l.b16 %v1612
    %v2875 = vunpack.c.h.b16 %v1612
    %v2876 = vunpack.c.l.b16 %v1613
    %v2877 = vunpack.c.h.b16 %v1613
    %v2878 = vunpack.c.l.b16 %v1614
    %v2879 = vunpack.c.h.b16 %v1614
    %v2880 = vunpack.c.l.b16 %v1615
    %v2881 = vunpack.c.h.b16 %v1615
    %v2882 = vunpack.c.l.b16 %v1616
    %v2883 = vunpack.c.h.b16 %v1616
    %v2884 = vunpack.c.l.b16 %v1617
    %v2885 = vunpack.c.h.b16 %v1617
    %v2886 = vunpack.c.l.b16 %v1618
    %v2887 = vunpack.c.h.b16 %v1618
    %v2888 = vunpack.c.l.b16 %v1619
    %v2889 = vunpack.c.h.b16 %v1619
    %v2890 = vunpack.c.l.b16 %v1620
    %v2891 = vunpack.c.h.b16 %v1620
    %v2892 = vunpack.c.l.b16 %v1621
    %v2893 = vunpack.c.h.b16 %v1621
    %v2894 = vunpack.c.l.b16 %v1622
    %v2895 = vunpack.c.h.b16 %v1622
    %v2896 = vunpack.c.l.b16 %v1623
    %v2897 = vunpack.c.h.b16 %v1623
    %v2898 = vunpack.c.l.b16 %v1624
    %v2899 = vunpack.c.h.b16 %v1624
    %v2900 = vunpack.c.l.b16 %v1625
    %v2901 = vunpack.c.h.b16 %v1625
    %v2902 = vunpack.c.l.b16 %v1626
    %v2903 = vunpack.c.h.b16 %v1626
    %v2904 = vunpack.c.l.b16 %v1627
    %v2905 = vunpack.c.h.b16 %v1627
    %v2906 = vunpack.c.l.b16 %v1628
    %v2907 = vunpack.c.h.b16 %v1628
    %v2908 = vunpack.c.l.b16 %v1629
    %v2909 = vunpack.c.h.b16 %v1629
    %v2910 = vunpack.c.l.b16 %v1630
    %v2911 = vunpack.c.h.b16 %v1630
    %v2912 = vunpack.c.l.b16 %v1631
    %v2913 = vunpack.c.h.b16 %v1631
    %v2914 = vunpack.c.l.b16 %v1632
    %v2915 = vunpack.c.h.b16 %v1632
    %v2916 = vunpack.c.l.b16 %v1633
    %v2917 = vunpack.c.h.b16 %v1633
    %v2918 = vunpack.c.l.b16 %v1634
    %v2919 = vunpack.c.h.b16 %v1634
    %v2920 = vunpack.c.l.b16 %v1635
    %v2921 = vunpack.c.h.b16 %v1635
    %v2922 = vunpack.c.l.b16 %v1636
    %v2923 = vunpack.c.h.b16 %v1636
    %v2924 = vunpack.c.l.b16 %v1637
    %v2925 = vunpack.c.h.b16 %v1637
    %v2926 = vunpack.c.l.b16 %v1638
    %v2927 = vunpack.c.h.b16 %v1638
    %v2928 = vunpack.c.l.b16 %v1639
    %v2929 = vunpack.c.h.b16 %v1639
    %v2930 = vunpack.c.l.b16 %v1640
    %v2931 = vunpack.c.h.b16 %v1640
    %v2932 = vunpack.c.l.b16 %v1641
    %v2933 = vunpack.c.h.b16 %v1641
    %v2934 = vunpack.c.l.b16 %v1642
    %v2935 = vunpack.c.h.b16 %v1642
    %v2936 = vunpack.c.l.b16 %v1643
    %v2937 = vunpack.c.h.b16 %v1643
    %v2938 = vunpack.c.l.b16 %v1644
    %v2939 = vunpack.c.h.b16 %v1644
    %v2940 = vunpack.c.l.b16 %v1645
    %v2941 = vunpack.c.h.b16 %v1645
    %v2942 = vunpack.c.l.b16 %v1646
    %v2943 = vunpack.c.h.b16 %v1646
    %v2944 = vunpack.c.l.b16 %v1647
    %v2945 = vunpack.c.h.b16 %v1647
    %v2946 = vunpack.c.l.b16 %v1648
    %v2947 = vunpack.c.h.b16 %v1648
    %v2948 = vunpack.c.l.b16 %v1649
    %v2949 = vunpack.c.h.b16 %v1649
    %v2950 = vunpack.c.l.b16 %v1650
    %v2951 = vunpack.c.h.b16 %v1650
    %v2952 = vunpack.c.l.b16 %v1651
    %v2953 = vunpack.c.h.b16 %v1651
    %v2954 = vunpack.c.l.b16 %v1652
    %v2955 = vunpack.c.h.b16 %v1652
    %v2956 = vunpack.c.l.b16 %v1653
    %v2957 = vunpack.c.h.b16 %v1653
    %v2958 = vunpack.c.l.b16 %v1654
    %v2959 = vunpack.c.h.b16 %v1654
    %v2960 = vunpack.c.l.b16 %v1655
    %v2961 = vunpack.c.h.b16 %v1655
    %v2962 = vunpack.c.l.b16 %v1656
    %v2963 = vunpack.c.h.b16 %v1656
    %v2964 = vunpack.c.l.b16 %v1657
    %v2965 = vunpack.c.h.b16 %v1657
    %v2966 = vunpack.c.l.b16 %v1658
    %v2967 = vunpack.c.h.b16 %v1658
    %v2968 = vunpack.c.l.b16 %v1659
    %v2969 = vunpack.c.h.b16 %v1659
    %v2970 = vunpack.c.l.b16 %v1660
    %v2971 = vunpack.c.h.b16 %v1660
    %v2972 = vunpack.c.l.b16 %v1661
    %v2973 = vunpack.c.h.b16 %v1661
    %v2974 = vunpack.c.l.b16 %v1662
    %v2975 = vunpack.c.h.b16 %v1662
    %v2976 = vunpack.c.l.b16 %v1663
    %v2977 = vunpack.c.h.b16 %v1663
    %v2978 = vunpack.c.l.b16 %v1664
    %v2979 = vunpack.c.h.b16 %v1664
    %v2980 = vunpack.c.l.b16 %v1665
    %v2981 = vunpack.c.h.b16 %v1665
    %v2982 = vpack.c.b16 %v2730, %v2726
    %v2983 = vpack.c.b16 %v2731, %v2727
    %v2984 = vpack.c.b16 %v2732, %v2728
    %v2985 = vpack.c.b16 %v2733, %v2729
    %v2986 = vpack.c.b16 %v2738, %v2734
    %v2987 = vpack.c.b16 %v2739, %v2735
    %v2988 = vpack.c.b16 %v2740, %v2736
    %v2989 = vpack.c.b16 %v2741, %v2737
    %v2990 = vpack.c.b16 %v2746, %v2742
    %v2991 = vpack.c.b16 %v2747, %v2743
    %v2992 = vpack.c.b16 %v2748, %v2744
    %v2993 = vpack.c.b16 %v2749, %v2745
    %v2994 = vpack.c.b16 %v2754, %v2750
    %v2995 = vpack.c.b16 %v2755, %v2751
    %v2996 = vpack.c.b16 %v2756, %v2752
    %v2997 = vpack.c.b16 %v2757, %v2753
    %v2998 = vpack.c.b16 %v2762, %v2758
    %v2999 = vpack.c.b16 %v2763, %v2759
    %v3000 = vpack.c.b16 %v2764, %v2760
    %v3001 = vpack.c.b16 %v2765, %v2761
    %v3002 = vpack.c.b16 %v2770, %v2766
    %v3003 = vpack.c.b16 %v2771, %v2767
    %v3004 = vpack.c.b16 %v2772, %v2768
    %v3005 = vpack.c.b16 %v2773, %v2769
    %v3006 = vpack.c.b16 %v2778, %v2774
    %v3007 = vpack.c.b16 %v2779, %v2775
    %v3008 = vpack.c.b16 %v2780, %v2776
    %v3009 = vpack.c.b16 %v2781, %v2777
    %v3010 = vpack.c.b16 %v2786, %v2782
    %v3011 = vpack.c.b16 %v2787, %v2783
    %v3012 = vpack.c.b16 %v2788, %v2784
    %v3013 = vpack.c.b16 %v2789, %v2785
    %v3014 = vpack.c.b16 %v2794, %v2790
    %v3015 = vpack.c.b16 %v2795, %v2791
    %v3016 = vpack.c.b16 %v2796, %v2792
    %v3017 = vpack.c.b16 %v2797, %v2793
    %v3018 = vpack.c.b16 %v2802, %v2798
    %v3019 = vpack.c.b16 %v2803, %v2799
    %v3020 = vpack.c.b16 %v2804, %v2800
    %v3021 = vpack.c.b16 %v2805, %v2801
    %v3022 = vpack.c.b16 %v2810, %v2806
    %v3023 = vpack.c.b16 %v2811, %v2807
    %v3024 = vpack.c.b16 %v2812, %v2808
    %v3025 = vpack.c.b16 %v2813, %v2809
    %v3026 = vpack.c.b16 %v2818, %v2814
    %v3027 = vpack.c.b16 %v2819, %v2815
    %v3028 = vpack.c.b16 %v2820, %v2816
    %v3029 = vpack.c.b16 %v2821, %v2817
    %v3030 = vpack.c.b16 %v2826, %v2822
    %v3031 = vpack.c.b16 %v2827, %v2823
    %v3032 = vpack.c.b16 %v2828, %v2824
    %v3033 = vpack.c.b16 %v2829, %v2825
    %v3034 = vpack.c.b16 %v2834, %v2830
    %v3035 = vpack.c.b16 %v2835, %v2831
    %v3036 = vpack.c.b16 %v2836, %v2832
    %v3037 = vpack.c.b16 %v2837, %v2833
    %v3038 = vpack.c.b16 %v2842, %v2838
    %v3039 = vpack.c.b16 %v2843, %v2839
    %v3040 = vpack.c.b16 %v2844, %v2840
    %v3041 = vpack.c.b16 %v2845, %v2841
    %v3042 = vpack.c.b16 %v2850, %v2846
    %v3043 = vpack.c.b16 %v2851, %v2847
    %v3044 = vpack.c.b16 %v2852, %v2848
    %v3045 = vpack.c.b16 %v2853, %v2849
    %v3046 = vpack.c.b16 %v2858, %v2854
    %v3047 = vpack.c.b16 %v2859, %v2855
    %v3048 = vpack.c.b16 %v2860, %v2856
    %v3049 = vpack.c.b16 %v2861, %v2857
    %v3050 = vpack.c.b16 %v2866, %v2862
    %v3051 = vpack.c.b16 %v2867, %v2863
    %v3052 = vpack.c.b16 %v2868, %v2864
    %v3053 = vpack.c.b16 %v2869, %v2865
    %v3054 = vpack.c.b16 %v2874, %v2870
    %v3055 = vpack.c.b16 %v2875, %v2871
    %v3056 = vpack.c.b16 %v2876, %v2872
    %v3057 = vpack.c.b16 %v2877, %v2873
    %v3058 = vpack.c.b16 %v2882, %v2878
    %v3059 = vpack.c.b16 %v2883, %v2879
    %v3060 = vpack.c.b16 %v2884, %v2880
    %v3061 = vpack.c.b16 %v2885, %v2881
    %v3062 = vpack.c.b16 %v2890, %v2886
    %v3063 = vpack.c.b16 %v2891, %v2887
    %v3064 = vpack.c.b16 %v2892, %v2888
    %v3065 = vpack.c.b16 %v2893, %v2889
    %v3066 = vpack.c.b16 %v2898, %v2894
    %v3067 = vpack.c.b16 %v2899, %v2895
    %v3068 = vpack.c.b16 %v2900, %v2896
    %v3069 = vpack.c.b16 %v2901, %v2897
    %v3070 = vpack.c.b16 %v2906, %v2902
    %v3071 = vpack.c.b16 %v2907, %v2903
    %v3072 = vpack.c.b16 %v2908, %v2904
    %v3073 = vpack.c.b16 %v2909, %v2905
    %v3074 = vpack.c.b16 %v2914, %v2910
    %v3075 = vpack.c.b16 %v2915, %v2911
    %v3076 = vpack.c.b16 %v2916, %v2912
    %v3077 = vpack.c.b16 %v2917, %v2913
    %v3078 = vpack.c.b16 %v2922, %v2918
    %v3079 = vpack.c.b16 %v2923, %v2919
    %v3080 = vpack.c.b16 %v2924, %v2920
    %v3081 = vpack.c.b16 %v2925, %v2921
    %v3082 = vpack.c.b16 %v2930, %v2926
    %v3083 = vpack.c.b16 %v2931, %v2927
    %v3084 = vpack.c.b16 %v2932, %v2928
    %v3085 = vpack.c.b16 %v2933, %v2929
    %v3086 = vpack.c.b16 %v2938, %v2934
    %v3087 = vpack.c.b16 %v2939, %v2935
    %v3088 = vpack.c.b16 %v2940, %v2936
    %v3089 = vpack.c.b16 %v2941, %v2937
    %v3090 = vpack.c.b16 %v2946, %v2942
    %v3091 = vpack.c.b16 %v2947, %v2943
    %v3092 = vpack.c.b16 %v2948, %v2944
    %v3093 = vpack.c.b16 %v2949, %v2945
    %v3094 = vpack.c.b16 %v2954, %v2950
    %v3095 = vpack.c.b16 %v2955, %v2951
    %v3096 = vpack.c.b16 %v2956, %v2952
    %v3097 = vpack.c.b16 %v2957, %v2953
    %v3098 = vpack.c.b16 %v2962, %v2958
    %v3099 = vpack.c.b16 %v2963, %v2959
    %v3100 = vpack.c.b16 %v2964, %v2960
    %v3101 = vpack.c.b16 %v2965, %v2961
    %v3102 = vpack.c.b16 %v2970, %v2966
    %v3103 = vpack.c.b16 %v2971, %v2967
    %v3104 = vpack.c.b16 %v2972, %v2968
    %v3105 = vpack.c.b16 %v2973, %v2969
    %v3106 = vpack.c.b16 %v2978, %v2974
    %v3107 = vpack.c.b16 %v2979, %v2975
    %v3108 = vpack.c.b16 %v2980, %v2976
    %v3109 = vpack.c.b16 %v2981, %v2977
    %3238 = vmatprep.subr.bf16.mxu0 %v2983
    %3239 = vmatpush1.bf16.msra.mxu0 %v2982
    %3240 = vmatprep.subr.bf16.mxu0 %v2987
    %3241 = vmatpush1.bf16.msra.mxu0 %v2986
    %3242 = vmatprep.subr.bf16.mxu0 %v2991
    %3243 = vmatpush1.bf16.msra.mxu0 %v2990
    %3244 = vmatprep.subr.bf16.mxu0 %v2995
    %3245 = vmatpush1.bf16.msra.mxu0 %v2994
    %3246 = vmatprep.subr.bf16.mxu0 %v2999
    %3247 = vmatpush1.bf16.msra.mxu0 %v2998
    %3248 = vmatprep.subr.bf16.mxu0 %v3003
    %3249 = vmatpush1.bf16.msra.mxu0 %v3002
    %3250 = vmatprep.subr.bf16.mxu0 %v3007
    %3251 = vmatpush1.bf16.msra.mxu0 %v3006
    %3252 = vmatprep.subr.bf16.mxu0 %v3011
    %3253 = vmatpush1.bf16.msra.mxu0 %v3010
    %3254 = vmatprep.subr.bf16.mxu0 %v3015
    %3255 = vmatpush1.bf16.msra.mxu0 %v3014
    %3256 = vmatprep.subr.bf16.mxu0 %v3019
    %3257 = vmatpush1.bf16.msra.mxu0 %v3018
    %3258 = vmatprep.subr.bf16.mxu0 %v3023
    %3259 = vmatpush1.bf16.msra.mxu0 %v3022
    %3260 = vmatprep.subr.bf16.mxu0 %v3027
    %3261 = vmatpush1.bf16.msra.mxu0 %v3026
    %3262 = vmatprep.subr.bf16.mxu0 %v3031
    %3263 = vmatpush1.bf16.msra.mxu0 %v3030
    %3264 = vmatprep.subr.bf16.mxu0 %v3035
    %3265 = vmatpush1.bf16.msra.mxu0 %v3034
    %3266 = vmatprep.subr.bf16.mxu0 %v3039
    %3267 = vmatpush1.bf16.msra.mxu0 %v3038
    %3268 = vmatprep.subr.bf16.mxu0 %v3043
    %3269 = vmatpush1.bf16.msra.mxu0 %v3042
    %3270 = vmatprep.mubr.bf16.mxu0 %v1531
    %3271 = vmatmul.mubr.bf16.gmra.mrb[0].mxu0 %v1530
    %v3272 = vpop.f32.mrb[0].mxu0
    %v3273 = vadd.f32 %v2510, %v3272
    %v3274 = vpop.f32.mrb[0].mxu0
    %v3275 = vadd.f32 %v2512, %v3274
    %v3276 = vpop.f32.mrb[0].mxu0
    %v3277 = vpop.f32.mrb[0].mxu0
    %3278 = vdwg.mxu0
    %3279 = vmatprep.subr.bf16.mxu0 %v3047
    %3280 = vmatpush1.bf16.msra.mxu0 %v3046
    %3281 = vmatprep.subr.bf16.mxu0 %v3051
    %3282 = vmatpush1.bf16.msra.mxu0 %v3050
    %3283 = vmatprep.subr.bf16.mxu0 %v3055
    %3284 = vmatpush1.bf16.msra.mxu0 %v3054
    %3285 = vmatprep.subr.bf16.mxu0 %v3059
    %3286 = vmatpush1.bf16.msra.mxu0 %v3058
    %3287 = vmatprep.subr.bf16.mxu0 %v3063
    %3288 = vmatpush1.bf16.msra.mxu0 %v3062
    %3289 = vmatprep.subr.bf16.mxu0 %v3067
    %3290 = vmatpush1.bf16.msra.mxu0 %v3066
    %3291 = vmatprep.subr.bf16.mxu0 %v3071
    %3292 = vmatpush1.bf16.msra.mxu0 %v3070
    %3293 = vmatprep.subr.bf16.mxu0 %v3075
    %3294 = vmatpush1.bf16.msra.mxu0 %v3074
    %3295 = vmatprep.subr.bf16.mxu0 %v3079
    %3296 = vmatpush1.bf16.msra.mxu0 %v3078
    %3297 = vmatprep.subr.bf16.mxu0 %v3083
    %3298 = vmatpush1.bf16.msra.mxu0 %v3082
    %3299 = vmatprep.subr.bf16.mxu0 %v3087
    %3300 = vmatpush1.bf16.msra.mxu0 %v3086
    %3301 = vmatprep.subr.bf16.mxu0 %v3091
    %3302 = vmatpush1.bf16.msra.mxu0 %v3090
    %3303 = vmatprep.subr.bf16.mxu0 %v3095
    %3304 = vmatpush1.bf16.msra.mxu0 %v3094
    %3305 = vmatprep.subr.bf16.mxu0 %v3099
    %3306 = vmatpush1.bf16.msra.mxu0 %v3098
    %3307 = vmatprep.subr.bf16.mxu0 %v3103
    %3308 = vmatpush1.bf16.msra.mxu0 %v3102
    %3309 = vmatprep.subr.bf16.mxu0 %v3107
    %3310 = vmatpush1.bf16.msra.mxu0 %v3106
    %3311 = vmatprep.mubr.bf16.mxu0 %v1533
    %3312 = vmatmul.mubr.bf16.gmra.mrb[0].mxu0 %v1532
    %v3313 = vpop.f32.mrb[0].mxu0
    %v3314 = vadd.f32 %v3273, %v3313
    %v3315 = vpop.f32.mrb[0].mxu0
    %v3316 = vadd.f32 %v3275, %v3315
    %v3317 = vpop.f32.mrb[0].mxu0
    %v3318 = vpop.f32.mrb[0].mxu0
    %3319 = vdwg.mxu0
    %3320 = vmatprep.subr.bf16.mxu0 %v2985
    %3321 = vmatpush1.bf16.msra.mxu0 %v2984
    %3322 = vmatprep.subr.bf16.mxu0 %v2989
    %3323 = vmatpush1.bf16.msra.mxu0 %v2988
    %3324 = vmatprep.subr.bf16.mxu0 %v2993
    %3325 = vmatpush1.bf16.msra.mxu0 %v2992
    %3326 = vmatprep.subr.bf16.mxu0 %v2997
    %3327 = vmatpush1.bf16.msra.mxu0 %v2996
    %3328 = vmatprep.subr.bf16.mxu0 %v3001
    %3329 = vmatpush1.bf16.msra.mxu0 %v3000
    %3330 = vmatprep.subr.bf16.mxu0 %v3005
    %3331 = vmatpush1.bf16.msra.mxu0 %v3004
    %3332 = vmatprep.subr.bf16.mxu0 %v3009
    %3333 = vmatpush1.bf16.msra.mxu0 %v3008
    %3334 = vmatprep.subr.bf16.mxu0 %v3013
    %3335 = vmatpush1.bf16.msra.mxu0 %v3012
    %3336 = vmatprep.subr.bf16.mxu0 %v3017
    %3337 = vmatpush1.bf16.msra.mxu0 %v3016
    %3338 = vmatprep.subr.bf16.mxu0 %v3021
    %3339 = vmatpush1.bf16.msra.mxu0 %v3020
    %3340 = vmatprep.subr.bf16.mxu0 %v3025
    %3341 = vmatpush1.bf16.msra.mxu0 %v3024
    %3342 = vmatprep.subr.bf16.mxu0 %v3029
    %3343 = vmatpush1.bf16.msra.mxu0 %v3028
    %3344 = vmatprep.subr.bf16.mxu0 %v3033
    %3345 = vmatpush1.bf16.msra.mxu0 %v3032
    %3346 = vmatprep.subr.bf16.mxu0 %v3037
    %3347 = vmatpush1.bf16.msra.mxu0 %v3036
    %3348 = vmatprep.subr.bf16.mxu0 %v3041
    %3349 = vmatpush1.bf16.msra.mxu0 %v3040
    %3350 = vmatprep.subr.bf16.mxu0 %v3045
    %3351 = vmatpush1.bf16.msra.mxu0 %v3044
    %3352 = vmatprep.mubr.bf16.mxu0 %v1531
    %3353 = vmatmul.mubr.bf16.gmra.mrb[0].mxu0 %v1530
    %v3354 = vpop.f32.mrb[0].mxu0
    %v3355 = vadd.f32 %v2592, %v3354
    %v3356 = vpop.f32.mrb[0].mxu0
    %v3357 = vadd.f32 %v2594, %v3356
    %v3358 = vpop.f32.mrb[0].mxu0
    %v3359 = vpop.f32.mrb[0].mxu0
    %3360 = vdwg.mxu0
    %3361 = vmatprep.subr.bf16.mxu0 %v3049
    %3362 = vmatpush1.bf16.msra.mxu0 %v3048
    %3363 = vmatprep.subr.bf16.mxu0 %v3053
    %3364 = vmatpush1.bf16.msra.mxu0 %v3052
    %3365 = vmatprep.subr.bf16.mxu0 %v3057
    %3366 = vmatpush1.bf16.msra.mxu0 %v3056
    %3367 = vmatprep.subr.bf16.mxu0 %v3061
    %3368 = vmatpush1.bf16.msra.mxu0 %v3060
    %3369 = vmatprep.subr.bf16.mxu0 %v3065
    %3370 = vmatpush1.bf16.msra.mxu0 %v3064
    %3371 = vmatprep.subr.bf16.mxu0 %v3069
    %3372 = vmatpush1.bf16.msra.mxu0 %v3068
    %3373 = vmatprep.subr.bf16.mxu0 %v3073
    %3374 = vmatpush1.bf16.msra.mxu0 %v3072
    %3375 = vmatprep.subr.bf16.mxu0 %v3077
    %3376 = vmatpush1.bf16.msra.mxu0 %v3076
    %3377 = vmatprep.subr.bf16.mxu0 %v3081
    %3378 = vmatpush1.bf16.msra.mxu0 %v3080
    %3379 = vmatprep.subr.bf16.mxu0 %v3085
    %3380 = vmatpush1.bf16.msra.mxu0 %v3084
    %3381 = vmatprep.subr.bf16.mxu0 %v3089
    %3382 = vmatpush1.bf16.msra.mxu0 %v3088
    %3383 = vmatprep.subr.bf16.mxu0 %v3093
    %3384 = vmatpush1.bf16.msra.mxu0 %v3092
    %3385 = vmatprep.subr.bf16.mxu0 %v3097
    %3386 = vmatpush1.bf16.msra.mxu0 %v3096
    %3387 = vmatprep.subr.bf16.mxu0 %v3101
    %3388 = vmatpush1.bf16.msra.mxu0 %v3100
    %3389 = vmatprep.subr.bf16.mxu0 %v3105
    %3390 = vmatpush1.bf16.msra.mxu0 %v3104
    %3391 = vmatprep.subr.bf16.mxu0 %v3109
    %3392 = vmatpush1.bf16.msra.mxu0 %v3108
    %3393 = vmatprep.mubr.bf16.mxu0 %v1533
    %3394 = vmatmul.mubr.bf16.gmra.mrb[0].mxu0 %v1532
    %v3395 = vpop.f32.mrb[0].mxu0
    %v3396 = vadd.f32 %v3355, %v3395
    %v3397 = vpop.f32.mrb[0].mxu0
    %v3398 = vadd.f32 %v3357, %v3397
    %v3399 = vpop.f32.mrb[0].mxu0
    %v3400 = vpop.f32.mrb[0].mxu0
    %3401 = vdwg.mxu0
    %v3402 = vld [vmem:[%s5] sm:$0xf]
    %v3404 = vlaneseq
    %v3405 = vshrl.u32 %v3404, 7
    %v3406 = vsub.s32 0, %v3405
    %v3407 = vrot.slane %v3402, %v3406
    %v3408 = vlaneseq
    %v3409 = vshrl.u32 %v3408, 7
    %v3410 = vsub.s32 1, %v3409
    %v3411 = vrot.slane %v3402, %v3410
    %v3412 = vlaneseq
    %v3413 = vshrl.u32 %v3412, 7
    %v3414 = vsub.s32 2, %v3413
    %v3415 = vrot.slane %v3402, %v3414
    %v3416 = vlaneseq
    %v3417 = vshrl.u32 %v3416, 7
    %v3418 = vsub.s32 3, %v3417
    %v3419 = vrot.slane %v3402, %v3418
    %v3424 = vadd.f32 %v3314, %v3407
    %v3425 = vadd.f32 %v3316, %v3411
    %v3426 = vadd.f32 %v3396, %v3415
    %v3427 = vadd.f32 %v3398, %v3419
    %v3428 = vpack.c.bf16 %v3424, %v3424
    %v3429 = vpack.c.bf16 %v3425, %v3425
    %v3430 = vpack.c.bf16 %v3426, %v3426
    %v3431 = vpack.c.bf16 %v3427, %v3427
    %v3432 = vld [vmem:[#allocation8] sm:$0xff]
    %v3433 = vld [vmem:[#allocation8 + $0x8] sm:$0xff]
    %v3434 = vld [vmem:[#allocation8 + $0x10] sm:$0xff]
    %v3435 = vld [vmem:[#allocation8 + $0x18] sm:$0xff]
    %v3436 = vld [vmem:[#allocation8 + $0x20] sm:$0xff]
    %v3437 = vld [vmem:[#allocation8 + $0x28] sm:$0xff]
    %v3438 = vld [vmem:[#allocation8 + $0x30] sm:$0xff]
    %v3439 = vld [vmem:[#allocation8 + $0x38] sm:$0xff]
    %v3440 = vld [vmem:[#allocation8 + $0x40] sm:$0xff]
    %v3441 = vld [vmem:[#allocation8 + $0x48] sm:$0xff]
    %v3442 = vld [vmem:[#allocation8 + $0x50] sm:$0xff]
    %v3443 = vld [vmem:[#allocation8 + $0x58] sm:$0xff]
    %v3444 = vld [vmem:[#allocation8 + $0x60] sm:$0xff]
    %v3445 = vld [vmem:[#allocation8 + $0x68] sm:$0xff]
    %v3446 = vld [vmem:[#allocation8 + $0x70] sm:$0xff]
    %v3447 = vld [vmem:[#allocation8 + $0x78] sm:$0xff]
    %v3448 = vld [vmem:[#allocation8 + $0x80] sm:$0xff]
    %v3449 = vld [vmem:[#allocation8 + $0x88] sm:$0xff]
    %v3450 = vld [vmem:[#allocation8 + $0x90] sm:$0xff]
    %v3451 = vld [vmem:[#allocation8 + $0x98] sm:$0xff]
    %v3452 = vld [vmem:[#allocation8 + $0xa0] sm:$0xff]
    %v3453 = vld [vmem:[#allocation8 + $0xa8] sm:$0xff]
    %v3454 = vld [vmem:[#allocation8 + $0xb0] sm:$0xff]
    %v3455 = vld [vmem:[#allocation8 + $0xb8] sm:$0xff]
    %v3456 = vld [vmem:[#allocation8 + $0xc0] sm:$0xff]
    %v3457 = vld [vmem:[#allocation8 + $0xc8] sm:$0xff]
    %v3458 = vld [vmem:[#allocation8 + $0xd0] sm:$0xff]
    %v3459 = vld [vmem:[#allocation8 + $0xd8] sm:$0xff]
    %v3460 = vld [vmem:[#allocation8 + $0xe0] sm:$0xff]
    %v3461 = vld [vmem:[#allocation8 + $0xe8] sm:$0xff]
    %v3462 = vld [vmem:[#allocation8 + $0xf0] sm:$0xff]
    %v3463 = vld [vmem:[#allocation8 + $0xf8] sm:$0xff]
    %v3464 = vld [vmem:[#allocation8 + $0x100] sm:$0xff]
    %v3465 = vld [vmem:[#allocation8 + $0x108] sm:$0xff]
    %v3466 = vld [vmem:[#allocation8 + $0x110] sm:$0xff]
    %v3467 = vld [vmem:[#allocation8 + $0x118] sm:$0xff]
    %v3468 = vld [vmem:[#allocation8 + $0x120] sm:$0xff]
    %v3469 = vld [vmem:[#allocation8 + $0x128] sm:$0xff]
    %v3470 = vld [vmem:[#allocation8 + $0x130] sm:$0xff]
    %v3471 = vld [vmem:[#allocation8 + $0x138] sm:$0xff]
    %v3472 = vld [vmem:[#allocation8 + $0x140] sm:$0xff]
    %v3473 = vld [vmem:[#allocation8 + $0x148] sm:$0xff]
    %v3474 = vld [vmem:[#allocation8 + $0x150] sm:$0xff]
    %v3475 = vld [vmem:[#allocation8 + $0x158] sm:$0xff]
    %v3476 = vld [vmem:[#allocation8 + $0x160] sm:$0xff]
    %v3477 = vld [vmem:[#allocation8 + $0x168] sm:$0xff]
    %v3478 = vld [vmem:[#allocation8 + $0x170] sm:$0xff]
    %v3479 = vld [vmem:[#allocation8 + $0x178] sm:$0xff]
    %v3480 = vld [vmem:[#allocation8 + $0x180] sm:$0xff]
    %v3481 = vld [vmem:[#allocation8 + $0x188] sm:$0xff]
    %v3482 = vld [vmem:[#allocation8 + $0x190] sm:$0xff]
    %v3483 = vld [vmem:[#allocation8 + $0x198] sm:$0xff]
    %v3484 = vld [vmem:[#allocation8 + $0x1a0] sm:$0xff]
    %v3485 = vld [vmem:[#allocation8 + $0x1a8] sm:$0xff]
    %v3486 = vld [vmem:[#allocation8 + $0x1b0] sm:$0xff]
    %v3487 = vld [vmem:[#allocation8 + $0x1b8] sm:$0xff]
    %v3488 = vld [vmem:[#allocation8 + $0x1c0] sm:$0xff]
    %v3489 = vld [vmem:[#allocation8 + $0x1c8] sm:$0xff]
    %v3490 = vld [vmem:[#allocation8 + $0x1d0] sm:$0xff]
    %v3491 = vld [vmem:[#allocation8 + $0x1d8] sm:$0xff]
    %v3492 = vld [vmem:[#allocation8 + $0x1e0] sm:$0xff]
    %v3493 = vld [vmem:[#allocation8 + $0x1e8] sm:$0xff]
    %v3494 = vld [vmem:[#allocation8 + $0x1f0] sm:$0xff]
    %v3495 = vld [vmem:[#allocation8 + $0x1f8] sm:$0xff]
    %v3496 = vld [vmem:[#allocation8 + $0x200] sm:$0xff]
    %v3497 = vld [vmem:[#allocation8 + $0x208] sm:$0xff]
    %v3498 = vld [vmem:[#allocation8 + $0x210] sm:$0xff]
    %v3499 = vld [vmem:[#allocation8 + $0x218] sm:$0xff]
    %v3500 = vld [vmem:[#allocation8 + $0x220] sm:$0xff]
    %v3501 = vld [vmem:[#allocation8 + $0x228] sm:$0xff]
    %v3502 = vld [vmem:[#allocation8 + $0x230] sm:$0xff]
    %v3503 = vld [vmem:[#allocation8 + $0x238] sm:$0xff]
    %v3504 = vld [vmem:[#allocation8 + $0x240] sm:$0xff]
    %v3505 = vld [vmem:[#allocation8 + $0x248] sm:$0xff]
    %v3506 = vld [vmem:[#allocation8 + $0x250] sm:$0xff]
    %v3507 = vld [vmem:[#allocation8 + $0x258] sm:$0xff]
    %v3508 = vld [vmem:[#allocation8 + $0x260] sm:$0xff]
    %v3509 = vld [vmem:[#allocation8 + $0x268] sm:$0xff]
    %v3510 = vld [vmem:[#allocation8 + $0x270] sm:$0xff]
    %v3511 = vld [vmem:[#allocation8 + $0x278] sm:$0xff]
    %v3512 = vld [vmem:[#allocation8 + $0x280] sm:$0xff]
    %v3513 = vld [vmem:[#allocation8 + $0x288] sm:$0xff]
    %v3514 = vld [vmem:[#allocation8 + $0x290] sm:$0xff]
    %v3515 = vld [vmem:[#allocation8 + $0x298] sm:$0xff]
    %v3516 = vld [vmem:[#allocation8 + $0x2a0] sm:$0xff]
    %v3517 = vld [vmem:[#allocation8 + $0x2a8] sm:$0xff]
    %v3518 = vld [vmem:[#allocation8 + $0x2b0] sm:$0xff]
    %v3519 = vld [vmem:[#allocation8 + $0x2b8] sm:$0xff]
    %v3520 = vld [vmem:[#allocation8 + $0x2c0] sm:$0xff]
    %v3521 = vld [vmem:[#allocation8 + $0x2c8] sm:$0xff]
    %v3522 = vld [vmem:[#allocation8 + $0x2d0] sm:$0xff]
    %v3523 = vld [vmem:[#allocation8 + $0x2d8] sm:$0xff]
    %v3524 = vld [vmem:[#allocation8 + $0x2e0] sm:$0xff]
    %v3525 = vld [vmem:[#allocation8 + $0x2e8] sm:$0xff]
    %v3526 = vld [vmem:[#allocation8 + $0x2f0] sm:$0xff]
    %v3527 = vld [vmem:[#allocation8 + $0x2f8] sm:$0xff]
    %v3528 = vld [vmem:[#allocation8 + $0x300] sm:$0xff]
    %v3529 = vld [vmem:[#allocation8 + $0x308] sm:$0xff]
    %v3530 = vld [vmem:[#allocation8 + $0x310] sm:$0xff]
    %v3531 = vld [vmem:[#allocation8 + $0x318] sm:$0xff]
    %v3532 = vld [vmem:[#allocation8 + $0x320] sm:$0xff]
    %v3533 = vld [vmem:[#allocation8 + $0x328] sm:$0xff]
    %v3534 = vld [vmem:[#allocation8 + $0x330] sm:$0xff]
    %v3535 = vld [vmem:[#allocation8 + $0x338] sm:$0xff]
    %v3536 = vld [vmem:[#allocation8 + $0x340] sm:$0xff]
    %v3537 = vld [vmem:[#allocation8 + $0x348] sm:$0xff]
    %v3538 = vld [vmem:[#allocation8 + $0x350] sm:$0xff]
    %v3539 = vld [vmem:[#allocation8 + $0x358] sm:$0xff]
    %v3540 = vld [vmem:[#allocation8 + $0x360] sm:$0xff]
    %v3541 = vld [vmem:[#allocation8 + $0x368] sm:$0xff]
    %v3542 = vld [vmem:[#allocation8 + $0x370] sm:$0xff]
    %v3543 = vld [vmem:[#allocation8 + $0x378] sm:$0xff]
    %v3544 = vld [vmem:[#allocation8 + $0x380] sm:$0xff]
    %v3545 = vld [vmem:[#allocation8 + $0x388] sm:$0xff]
    %v3546 = vld [vmem:[#allocation8 + $0x390] sm:$0xff]
    %v3547 = vld [vmem:[#allocation8 + $0x398] sm:$0xff]
    %v3548 = vld [vmem:[#allocation8 + $0x3a0] sm:$0xff]
    %v3549 = vld [vmem:[#allocation8 + $0x3a8] sm:$0xff]
    %v3550 = vld [vmem:[#allocation8 + $0x3b0] sm:$0xff]
    %v3551 = vld [vmem:[#allocation8 + $0x3b8] sm:$0xff]
    %v3552 = vld [vmem:[#allocation8 + $0x3c0] sm:$0xff]
    %v3553 = vld [vmem:[#allocation8 + $0x3c8] sm:$0xff]
    %v3554 = vld [vmem:[#allocation8 + $0x3d0] sm:$0xff]
    %v3555 = vld [vmem:[#allocation8 + $0x3d8] sm:$0xff]
    %v3556 = vld [vmem:[#allocation8 + $0x3e0] sm:$0xff]
    %v3557 = vld [vmem:[#allocation8 + $0x3e8] sm:$0xff]
    %v3558 = vld [vmem:[#allocation8 + $0x3f0] sm:$0xff]
    %v3559 = vld [vmem:[#allocation8 + $0x3f8] sm:$0xff]
    %v3688 = vunpack.c.l.b16 %v3432
    %v3689 = vunpack.c.h.b16 %v3432
    %v3690 = vunpack.c.l.b16 %v3433
    %v3691 = vunpack.c.h.b16 %v3433
    %v3692 = vunpack.c.l.b16 %v3434
    %v3693 = vunpack.c.h.b16 %v3434
    %v3694 = vunpack.c.l.b16 %v3435
    %v3695 = vunpack.c.h.b16 %v3435
    %v3696 = vunpack.c.l.b16 %v3436
    %v3697 = vunpack.c.h.b16 %v3436
    %v3698 = vunpack.c.l.b16 %v3437
    %v3699 = vunpack.c.h.b16 %v3437
    %v3700 = vunpack.c.l.b16 %v3438
    %v3701 = vunpack.c.h.b16 %v3438
    %v3702 = vunpack.c.l.b16 %v3439
    %v3703 = vunpack.c.h.b16 %v3439
    %v3704 = vunpack.c.l.b16 %v3440
    %v3705 = vunpack.c.h.b16 %v3440
    %v3706 = vunpack.c.l.b16 %v3441
    %v3707 = vunpack.c.h.b16 %v3441
    %v3708 = vunpack.c.l.b16 %v3442
    %v3709 = vunpack.c.h.b16 %v3442
    %v3710 = vunpack.c.l.b16 %v3443
    %v3711 = vunpack.c.h.b16 %v3443
    %v3712 = vunpack.c.l.b16 %v3444
    %v3713 = vunpack.c.h.b16 %v3444
    %v3714 = vunpack.c.l.b16 %v3445
    %v3715 = vunpack.c.h.b16 %v3445
    %v3716 = vunpack.c.l.b16 %v3446
    %v3717 = vunpack.c.h.b16 %v3446
    %v3718 = vunpack.c.l.b16 %v3447
    %v3719 = vunpack.c.h.b16 %v3447
    %v3720 = vunpack.c.l.b16 %v3448
    %v3721 = vunpack.c.h.b16 %v3448
    %v3722 = vunpack.c.l.b16 %v3449
    %v3723 = vunpack.c.h.b16 %v3449
    %v3724 = vunpack.c.l.b16 %v3450
    %v3725 = vunpack.c.h.b16 %v3450
    %v3726 = vunpack.c.l.b16 %v3451
    %v3727 = vunpack.c.h.b16 %v3451
    %v3728 = vunpack.c.l.b16 %v3452
    %v3729 = vunpack.c.h.b16 %v3452
    %v3730 = vunpack.c.l.b16 %v3453
    %v3731 = vunpack.c.h.b16 %v3453
    %v3732 = vunpack.c.l.b16 %v3454
    %v3733 = vunpack.c.h.b16 %v3454
    %v3734 = vunpack.c.l.b16 %v3455
    %v3735 = vunpack.c.h.b16 %v3455
    %v3736 = vunpack.c.l.b16 %v3456
    %v3737 = vunpack.c.h.b16 %v3456
    %v3738 = vunpack.c.l.b16 %v3457
    %v3739 = vunpack.c.h.b16 %v3457
    %v3740 = vunpack.c.l.b16 %v3458
    %v3741 = vunpack.c.h.b16 %v3458
    %v3742 = vunpack.c.l.b16 %v3459
    %v3743 = vunpack.c.h.b16 %v3459
    %v3744 = vunpack.c.l.b16 %v3460
    %v3745 = vunpack.c.h.b16 %v3460
    %v3746 = vunpack.c.l.b16 %v3461
    %v3747 = vunpack.c.h.b16 %v3461
    %v3748 = vunpack.c.l.b16 %v3462
    %v3749 = vunpack.c.h.b16 %v3462
    %v3750 = vunpack.c.l.b16 %v3463
    %v3751 = vunpack.c.h.b16 %v3463
    %v3752 = vunpack.c.l.b16 %v3464
    %v3753 = vunpack.c.h.b16 %v3464
    %v3754 = vunpack.c.l.b16 %v3465
    %v3755 = vunpack.c.h.b16 %v3465
    %v3756 = vunpack.c.l.b16 %v3466
    %v3757 = vunpack.c.h.b16 %v3466
    %v3758 = vunpack.c.l.b16 %v3467
    %v3759 = vunpack.c.h.b16 %v3467
    %v3760 = vunpack.c.l.b16 %v3468
    %v3761 = vunpack.c.h.b16 %v3468
    %v3762 = vunpack.c.l.b16 %v3469
    %v3763 = vunpack.c.h.b16 %v3469
    %v3764 = vunpack.c.l.b16 %v3470
    %v3765 = vunpack.c.h.b16 %v3470
    %v3766 = vunpack.c.l.b16 %v3471
    %v3767 = vunpack.c.h.b16 %v3471
    %v3768 = vunpack.c.l.b16 %v3472
    %v3769 = vunpack.c.h.b16 %v3472
    %v3770 = vunpack.c.l.b16 %v3473
    %v3771 = vunpack.c.h.b16 %v3473
    %v3772 = vunpack.c.l.b16 %v3474
    %v3773 = vunpack.c.h.b16 %v3474
    %v3774 = vunpack.c.l.b16 %v3475
    %v3775 = vunpack.c.h.b16 %v3475
    %v3776 = vunpack.c.l.b16 %v3476
    %v3777 = vunpack.c.h.b16 %v3476
    %v3778 = vunpack.c.l.b16 %v3477
    %v3779 = vunpack.c.h.b16 %v3477
    %v3780 = vunpack.c.l.b16 %v3478
    %v3781 = vunpack.c.h.b16 %v3478
    %v3782 = vunpack.c.l.b16 %v3479
    %v3783 = vunpack.c.h.b16 %v3479
    %v3784 = vunpack.c.l.b16 %v3480
    %v3785 = vunpack.c.h.b16 %v3480
    %v3786 = vunpack.c.l.b16 %v3481
    %v3787 = vunpack.c.h.b16 %v3481
    %v3788 = vunpack.c.l.b16 %v3482
    %v3789 = vunpack.c.h.b16 %v3482
    %v3790 = vunpack.c.l.b16 %v3483
    %v3791 = vunpack.c.h.b16 %v3483
    %v3792 = vunpack.c.l.b16 %v3484
    %v3793 = vunpack.c.h.b16 %v3484
    %v3794 = vunpack.c.l.b16 %v3485
    %v3795 = vunpack.c.h.b16 %v3485
    %v3796 = vunpack.c.l.b16 %v3486
    %v3797 = vunpack.c.h.b16 %v3486
    %v3798 = vunpack.c.l.b16 %v3487
    %v3799 = vunpack.c.h.b16 %v3487
    %v3800 = vunpack.c.l.b16 %v3488
    %v3801 = vunpack.c.h.b16 %v3488
    %v3802 = vunpack.c.l.b16 %v3489
    %v3803 = vunpack.c.h.b16 %v3489
    %v3804 = vunpack.c.l.b16 %v3490
    %v3805 = vunpack.c.h.b16 %v3490
    %v3806 = vunpack.c.l.b16 %v3491
    %v3807 = vunpack.c.h.b16 %v3491
    %v3808 = vunpack.c.l.b16 %v3492
    %v3809 = vunpack.c.h.b16 %v3492
    %v3810 = vunpack.c.l.b16 %v3493
    %v3811 = vunpack.c.h.b16 %v3493
    %v3812 = vunpack.c.l.b16 %v3494
    %v3813 = vunpack.c.h.b16 %v3494
    %v3814 = vunpack.c.l.b16 %v3495
    %v3815 = vunpack.c.h.b16 %v3495
    %v3816 = vunpack.c.l.b16 %v3496
    %v3817 = vunpack.c.h.b16 %v3496
    %v3818 = vunpack.c.l.b16 %v3497
    %v3819 = vunpack.c.h.b16 %v3497
    %v3820 = vunpack.c.l.b16 %v3498
    %v3821 = vunpack.c.h.b16 %v3498
    %v3822 = vunpack.c.l.b16 %v3499
    %v3823 = vunpack.c.h.b16 %v3499
    %v3824 = vunpack.c.l.b16 %v3500
    %v3825 = vunpack.c.h.b16 %v3500
    %v3826 = vunpack.c.l.b16 %v3501
    %v3827 = vunpack.c.h.b16 %v3501
    %v3828 = vunpack.c.l.b16 %v3502
    %v3829 = vunpack.c.h.b16 %v3502
    %v3830 = vunpack.c.l.b16 %v3503
    %v3831 = vunpack.c.h.b16 %v3503
    %v3832 = vunpack.c.l.b16 %v3504
    %v3833 = vunpack.c.h.b16 %v3504
    %v3834 = vunpack.c.l.b16 %v3505
    %v3835 = vunpack.c.h.b16 %v3505
    %v3836 = vunpack.c.l.b16 %v3506
    %v3837 = vunpack.c.h.b16 %v3506
    %v3838 = vunpack.c.l.b16 %v3507
    %v3839 = vunpack.c.h.b16 %v3507
    %v3840 = vunpack.c.l.b16 %v3508
    %v3841 = vunpack.c.h.b16 %v3508
    %v3842 = vunpack.c.l.b16 %v3509
    %v3843 = vunpack.c.h.b16 %v3509
    %v3844 = vunpack.c.l.b16 %v3510
    %v3845 = vunpack.c.h.b16 %v3510
    %v3846 = vunpack.c.l.b16 %v3511
    %v3847 = vunpack.c.h.b16 %v3511
    %v3848 = vunpack.c.l.b16 %v3512
    %v3849 = vunpack.c.h.b16 %v3512
    %v3850 = vunpack.c.l.b16 %v3513
    %v3851 = vunpack.c.h.b16 %v3513
    %v3852 = vunpack.c.l.b16 %v3514
    %v3853 = vunpack.c.h.b16 %v3514
    %v3854 = vunpack.c.l.b16 %v3515
    %v3855 = vunpack.c.h.b16 %v3515
    %v3856 = vunpack.c.l.b16 %v3516
    %v3857 = vunpack.c.h.b16 %v3516
    %v3858 = vunpack.c.l.b16 %v3517
    %v3859 = vunpack.c.h.b16 %v3517
    %v3860 = vunpack.c.l.b16 %v3518
    %v3861 = vunpack.c.h.b16 %v3518
    %v3862 = vunpack.c.l.b16 %v3519
    %v3863 = vunpack.c.h.b16 %v3519
    %v3864 = vunpack.c.l.b16 %v3520
    %v3865 = vunpack.c.h.b16 %v3520
    %v3866 = vunpack.c.l.b16 %v3521
    %v3867 = vunpack.c.h.b16 %v3521
    %v3868 = vunpack.c.l.b16 %v3522
    %v3869 = vunpack.c.h.b16 %v3522
    %v3870 = vunpack.c.l.b16 %v3523
    %v3871 = vunpack.c.h.b16 %v3523
    %v3872 = vunpack.c.l.b16 %v3524
    %v3873 = vunpack.c.h.b16 %v3524
    %v3874 = vunpack.c.l.b16 %v3525
    %v3875 = vunpack.c.h.b16 %v3525
    %v3876 = vunpack.c.l.b16 %v3526
    %v3877 = vunpack.c.h.b16 %v3526
    %v3878 = vunpack.c.l.b16 %v3527
    %v3879 = vunpack.c.h.b16 %v3527
    %v3880 = vunpack.c.l.b16 %v3528
    %v3881 = vunpack.c.h.b16 %v3528
    %v3882 = vunpack.c.l.b16 %v3529
    %v3883 = vunpack.c.h.b16 %v3529
    %v3884 = vunpack.c.l.b16 %v3530
    %v3885 = vunpack.c.h.b16 %v3530
    %v3886 = vunpack.c.l.b16 %v3531
    %v3887 = vunpack.c.h.b16 %v3531
    %v3888 = vunpack.c.l.b16 %v3532
    %v3889 = vunpack.c.h.b16 %v3532
    %v3890 = vunpack.c.l.b16 %v3533
    %v3891 = vunpack.c.h.b16 %v3533
    %v3892 = vunpack.c.l.b16 %v3534
    %v3893 = vunpack.c.h.b16 %v3534
    %v3894 = vunpack.c.l.b16 %v3535
    %v3895 = vunpack.c.h.b16 %v3535
    %v3896 = vunpack.c.l.b16 %v3536
    %v3897 = vunpack.c.h.b16 %v3536
    %v3898 = vunpack.c.l.b16 %v3537
    %v3899 = vunpack.c.h.b16 %v3537
    %v3900 = vunpack.c.l.b16 %v3538
    %v3901 = vunpack.c.h.b16 %v3538
    %v3902 = vunpack.c.l.b16 %v3539
    %v3903 = vunpack.c.h.b16 %v3539
    %v3904 = vunpack.c.l.b16 %v3540
    %v3905 = vunpack.c.h.b16 %v3540
    %v3906 = vunpack.c.l.b16 %v3541
    %v3907 = vunpack.c.h.b16 %v3541
    %v3908 = vunpack.c.l.b16 %v3542
    %v3909 = vunpack.c.h.b16 %v3542
    %v3910 = vunpack.c.l.b16 %v3543
    %v3911 = vunpack.c.h.b16 %v3543
    %v3912 = vunpack.c.l.b16 %v3544
    %v3913 = vunpack.c.h.b16 %v3544
    %v3914 = vunpack.c.l.b16 %v3545
    %v3915 = vunpack.c.h.b16 %v3545
    %v3916 = vunpack.c.l.b16 %v3546
    %v3917 = vunpack.c.h.b16 %v3546
    %v3918 = vunpack.c.l.b16 %v3547
    %v3919 = vunpack.c.h.b16 %v3547
    %v3920 = vunpack.c.l.b16 %v3548
    %v3921 = vunpack.c.h.b16 %v3548
    %v3922 = vunpack.c.l.b16 %v3549
    %v3923 = vunpack.c.h.b16 %v3549
    %v3924 = vunpack.c.l.b16 %v3550
    %v3925 = vunpack.c.h.b16 %v3550
    %v3926 = vunpack.c.l.b16 %v3551
    %v3927 = vunpack.c.h.b16 %v3551
    %v3928 = vunpack.c.l.b16 %v3552
    %v3929 = vunpack.c.h.b16 %v3552
    %v3930 = vunpack.c.l.b16 %v3553
    %v3931 = vunpack.c.h.b16 %v3553
    %v3932 = vunpack.c.l.b16 %v3554
    %v3933 = vunpack.c.h.b16 %v3554
    %v3934 = vunpack.c.l.b16 %v3555
    %v3935 = vunpack.c.h.b16 %v3555
    %v3936 = vunpack.c.l.b16 %v3556
    %v3937 = vunpack.c.h.b16 %v3556
    %v3938 = vunpack.c.l.b16 %v3557
    %v3939 = vunpack.c.h.b16 %v3557
    %v3940 = vunpack.c.l.b16 %v3558
    %v3941 = vunpack.c.h.b16 %v3558
    %v3942 = vunpack.c.l.b16 %v3559
    %v3943 = vunpack.c.h.b16 %v3559
    %v3944 = vpack.c.b16 %v3692, %v3688
    %v3945 = vpack.c.b16 %v3693, %v3689
    %v3946 = vpack.c.b16 %v3694, %v3690
    %v3947 = vpack.c.b16 %v3695, %v3691
    %v3948 = vpack.c.b16 %v3700, %v3696
    %v3949 = vpack.c.b16 %v3701, %v3697
    %v3950 = vpack.c.b16 %v3702, %v3698
    %v3951 = vpack.c.b16 %v3703, %v3699
    %v3952 = vpack.c.b16 %v3708, %v3704
    %v3953 = vpack.c.b16 %v3709, %v3705
    %v3954 = vpack.c.b16 %v3710, %v3706
    %v3955 = vpack.c.b16 %v3711, %v3707
    %v3956 = vpack.c.b16 %v3716, %v3712
    %v3957 = vpack.c.b16 %v3717, %v3713
    %v3958 = vpack.c.b16 %v3718, %v3714
    %v3959 = vpack.c.b16 %v3719, %v3715
    %v3960 = vpack.c.b16 %v3724, %v3720
    %v3961 = vpack.c.b16 %v3725, %v3721
    %v3962 = vpack.c.b16 %v3726, %v3722
    %v3963 = vpack.c.b16 %v3727, %v3723
    %v3964 = vpack.c.b16 %v3732, %v3728
    %v3965 = vpack.c.b16 %v3733, %v3729
    %v3966 = vpack.c.b16 %v3734, %v3730
    %v3967 = vpack.c.b16 %v3735, %v3731
    %v3968 = vpack.c.b16 %v3740, %v3736
    %v3969 = vpack.c.b16 %v3741, %v3737
    %v3970 = vpack.c.b16 %v3742, %v3738
    %v3971 = vpack.c.b16 %v3743, %v3739
    %v3972 = vpack.c.b16 %v3748, %v3744
    %v3973 = vpack.c.b16 %v3749, %v3745
    %v3974 = vpack.c.b16 %v3750, %v3746
    %v3975 = vpack.c.b16 %v3751, %v3747
    %v3976 = vpack.c.b16 %v3756, %v3752
    %v3977 = vpack.c.b16 %v3757, %v3753
    %v3978 = vpack.c.b16 %v3758, %v3754
    %v3979 = vpack.c.b16 %v3759, %v3755
    %v3980 = vpack.c.b16 %v3764, %v3760
    %v3981 = vpack.c.b16 %v3765, %v3761
    %v3982 = vpack.c.b16 %v3766, %v3762
    %v3983 = vpack.c.b16 %v3767, %v3763
    %v3984 = vpack.c.b16 %v3772, %v3768
    %v3985 = vpack.c.b16 %v3773, %v3769
    %v3986 = vpack.c.b16 %v3774, %v3770
    %v3987 = vpack.c.b16 %v3775, %v3771
    %v3988 = vpack.c.b16 %v3780, %v3776
    %v3989 = vpack.c.b16 %v3781, %v3777
    %v3990 = vpack.c.b16 %v3782, %v3778
    %v3991 = vpack.c.b16 %v3783, %v3779
    %v3992 = vpack.c.b16 %v3788, %v3784
    %v3993 = vpack.c.b16 %v3789, %v3785
    %v3994 = vpack.c.b16 %v3790, %v3786
    %v3995 = vpack.c.b16 %v3791, %v3787
    %v3996 = vpack.c.b16 %v3796, %v3792
    %v3997 = vpack.c.b16 %v3797, %v3793
    %v3998 = vpack.c.b16 %v3798, %v3794
    %v3999 = vpack.c.b16 %v3799, %v3795
    %v4000 = vpack.c.b16 %v3804, %v3800
    %v4001 = vpack.c.b16 %v3805, %v3801
    %v4002 = vpack.c.b16 %v3806, %v3802
    %v4003 = vpack.c.b16 %v3807, %v3803
    %v4004 = vpack.c.b16 %v3812, %v3808
    %v4005 = vpack.c.b16 %v3813, %v3809
    %v4006 = vpack.c.b16 %v3814, %v3810
    %v4007 = vpack.c.b16 %v3815, %v3811
    %v4008 = vpack.c.b16 %v3820, %v3816
    %v4009 = vpack.c.b16 %v3821, %v3817
    %v4010 = vpack.c.b16 %v3822, %v3818
    %v4011 = vpack.c.b16 %v3823, %v3819
    %v4012 = vpack.c.b16 %v3828, %v3824
    %v4013 = vpack.c.b16 %v3829, %v3825
    %v4014 = vpack.c.b16 %v3830, %v3826
    %v4015 = vpack.c.b16 %v3831, %v3827
    %v4016 = vpack.c.b16 %v3836, %v3832
    %v4017 = vpack.c.b16 %v3837, %v3833
    %v4018 = vpack.c.b16 %v3838, %v3834
    %v4019 = vpack.c.b16 %v3839, %v3835
    %v4020 = vpack.c.b16 %v3844, %v3840
    %v4021 = vpack.c.b16 %v3845, %v3841
    %v4022 = vpack.c.b16 %v3846, %v3842
    %v4023 = vpack.c.b16 %v3847, %v3843
    %v4024 = vpack.c.b16 %v3852, %v3848
    %v4025 = vpack.c.b16 %v3853, %v3849
    %v4026 = vpack.c.b16 %v3854, %v3850
    %v4027 = vpack.c.b16 %v3855, %v3851
    %v4028 = vpack.c.b16 %v3860, %v3856
    %v4029 = vpack.c.b16 %v3861, %v3857
    %v4030 = vpack.c.b16 %v3862, %v3858
    %v4031 = vpack.c.b16 %v3863, %v3859
    %v4032 = vpack.c.b16 %v3868, %v3864
    %v4033 = vpack.c.b16 %v3869, %v3865
    %v4034 = vpack.c.b16 %v3870, %v3866
    %v4035 = vpack.c.b16 %v3871, %v3867
    %v4036 = vpack.c.b16 %v3876, %v3872
    %v4037 = vpack.c.b16 %v3877, %v3873
    %v4038 = vpack.c.b16 %v3878, %v3874
    %v4039 = vpack.c.b16 %v3879, %v3875
    %v4040 = vpack.c.b16 %v3884, %v3880
    %v4041 = vpack.c.b16 %v3885, %v3881
    %v4042 = vpack.c.b16 %v3886, %v3882
    %v4043 = vpack.c.b16 %v3887, %v3883
    %v4044 = vpack.c.b16 %v3892, %v3888
    %v4045 = vpack.c.b16 %v3893, %v3889
    %v4046 = vpack.c.b16 %v3894, %v3890
    %v4047 = vpack.c.b16 %v3895, %v3891
    %v4048 = vpack.c.b16 %v3900, %v3896
    %v4049 = vpack.c.b16 %v3901, %v3897
    %v4050 = vpack.c.b16 %v3902, %v3898
    %v4051 = vpack.c.b16 %v3903, %v3899
    %v4052 = vpack.c.b16 %v3908, %v3904
    %v4053 = vpack.c.b16 %v3909, %v3905
    %v4054 = vpack.c.b16 %v3910, %v3906
    %v4055 = vpack.c.b16 %v3911, %v3907
    %v4056 = vpack.c.b16 %v3916, %v3912
    %v4057 = vpack.c.b16 %v3917, %v3913
    %v4058 = vpack.c.b16 %v3918, %v3914
    %v4059 = vpack.c.b16 %v3919, %v3915
    %v4060 = vpack.c.b16 %v3924, %v3920
    %v4061 = vpack.c.b16 %v3925, %v3921
    %v4062 = vpack.c.b16 %v3926, %v3922
    %v4063 = vpack.c.b16 %v3927, %v3923
    %v4064 = vpack.c.b16 %v3932, %v3928
    %v4065 = vpack.c.b16 %v3933, %v3929
    %v4066 = vpack.c.b16 %v3934, %v3930
    %v4067 = vpack.c.b16 %v3935, %v3931
    %v4068 = vpack.c.b16 %v3940, %v3936
    %v4069 = vpack.c.b16 %v3941, %v3937
    %v4070 = vpack.c.b16 %v3942, %v3938
    %v4071 = vpack.c.b16 %v3943, %v3939
    %4200 = vmatprep.subr.bf16.mxu0 %v3945
    %4201 = vmatpush1.bf16.msra.mxu0 %v3944
    %4202 = vmatprep.subr.bf16.mxu0 %v3949
    %4203 = vmatpush1.bf16.msra.mxu0 %v3948
    %4204 = vmatprep.subr.bf16.mxu0 %v3953
    %4205 = vmatpush1.bf16.msra.mxu0 %v3952
    %4206 = vmatprep.subr.bf16.mxu0 %v3957
    %4207 = vmatpush1.bf16.msra.mxu0 %v3956
    %4208 = vmatprep.subr.bf16.mxu0 %v3961
    %4209 = vmatpush1.bf16.msra.mxu0 %v3960
    %4210 = vmatprep.subr.bf16.mxu0 %v3965
    %4211 = vmatpush1.bf16.msra.mxu0 %v3964
    %4212 = vmatprep.subr.bf16.mxu0 %v3969
    %4213 = vmatpush1.bf16.msra.mxu0 %v3968
    %4214 = vmatprep.subr.bf16.mxu0 %v3973
    %4215 = vmatpush1.bf16.msra.mxu0 %v3972
    %4216 = vmatprep.subr.bf16.mxu0 %v3977
    %4217 = vmatpush1.bf16.msra.mxu0 %v3976
    %4218 = vmatprep.subr.bf16.mxu0 %v3981
    %4219 = vmatpush1.bf16.msra.mxu0 %v3980
    %4220 = vmatprep.subr.bf16.mxu0 %v3985
    %4221 = vmatpush1.bf16.msra.mxu0 %v3984
    %4222 = vmatprep.subr.bf16.mxu0 %v3989
    %4223 = vmatpush1.bf16.msra.mxu0 %v3988
    %4224 = vmatprep.subr.bf16.mxu0 %v3993
    %4225 = vmatpush1.bf16.msra.mxu0 %v3992
    %4226 = vmatprep.subr.bf16.mxu0 %v3997
    %4227 = vmatpush1.bf16.msra.mxu0 %v3996
    %4228 = vmatprep.subr.bf16.mxu0 %v4001
    %4229 = vmatpush1.bf16.msra.mxu0 %v4000
    %4230 = vmatprep.subr.bf16.mxu0 %v4005
    %4231 = vmatpush1.bf16.msra.mxu0 %v4004
    %4232 = vmatprep.mubr.bf16.mxu0 %v3429
    %4233 = vmatmul.mubr.bf16.gmra.mrb[0].mxu0 %v3428
    %v4234 = vpop.f32.mrb[0].mxu0
    %v4235 = vadd.f32 0.0, %v4234
    %v4236 = vpop.f32.mrb[0].mxu0
    %v4237 = vadd.f32 0.0, %v4236
    %v4238 = vpop.f32.mrb[0].mxu0
    %v4239 = vpop.f32.mrb[0].mxu0
    %4240 = vdwg.mxu0
    %4241 = vmatprep.subr.bf16.mxu0 %v4009
    %4242 = vmatpush1.bf16.msra.mxu0 %v4008
    %4243 = vmatprep.subr.bf16.mxu0 %v4013
    %4244 = vmatpush1.bf16.msra.mxu0 %v4012
    %4245 = vmatprep.subr.bf16.mxu0 %v4017
    %4246 = vmatpush1.bf16.msra.mxu0 %v4016
    %4247 = vmatprep.subr.bf16.mxu0 %v4021
    %4248 = vmatpush1.bf16.msra.mxu0 %v4020
    %4249 = vmatprep.subr.bf16.mxu0 %v4025
    %4250 = vmatpush1.bf16.msra.mxu0 %v4024
    %4251 = vmatprep.subr.bf16.mxu0 %v4029
    %4252 = vmatpush1.bf16.msra.mxu0 %v4028
    %4253 = vmatprep.subr.bf16.mxu0 %v4033
    %4254 = vmatpush1.bf16.msra.mxu0 %v4032
    %4255 = vmatprep.subr.bf16.mxu0 %v4037
    %4256 = vmatpush1.bf16.msra.mxu0 %v4036
    %4257 = vmatprep.subr.bf16.mxu0 %v4041
    %4258 = vmatpush1.bf16.msra.mxu0 %v4040
    %4259 = vmatprep.subr.bf16.mxu0 %v4045
    %4260 = vmatpush1.bf16.msra.mxu0 %v4044
    %4261 = vmatprep.subr.bf16.mxu0 %v4049
    %4262 = vmatpush1.bf16.msra.mxu0 %v4048
    %4263 = vmatprep.subr.bf16.mxu0 %v4053
    %4264 = vmatpush1.bf16.msra.mxu0 %v4052
    %4265 = vmatprep.subr.bf16.mxu0 %v4057
    %4266 = vmatpush1.bf16.msra.mxu0 %v4056
    %4267 = vmatprep.subr.bf16.mxu0 %v4061
    %4268 = vmatpush1.bf16.msra.mxu0 %v4060
    %4269 = vmatprep.subr.bf16.mxu0 %v4065
    %4270 = vmatpush1.bf16.msra.mxu0 %v4064
    %4271 = vmatprep.subr.bf16.mxu0 %v4069
    %4272 = vmatpush1.bf16.msra.mxu0 %v4068
    %4273 = vmatprep.mubr.bf16.mxu0 %v3431
    %4274 = vmatmul.mubr.bf16.gmra.mrb[0].mxu0 %v3430
    %v4275 = vpop.f32.mrb[0].mxu0
    %v4276 = vadd.f32 %v4235, %v4275
    %v4277 = vpop.f32.mrb[0].mxu0
    %v4278 = vadd.f32 %v4237, %v4277
    %v4279 = vpop.f32.mrb[0].mxu0
    %v4280 = vpop.f32.mrb[0].mxu0
    %4281 = vdwg.mxu0
    %4282 = vmatprep.subr.bf16.mxu0 %v3947
    %4283 = vmatpush1.bf16.msra.mxu0 %v3946
    %4284 = vmatprep.subr.bf16.mxu0 %v3951
    %4285 = vmatpush1.bf16.msra.mxu0 %v3950
    %4286 = vmatprep.subr.bf16.mxu0 %v3955
    %4287 = vmatpush1.bf16.msra.mxu0 %v3954
    %4288 = vmatprep.subr.bf16.mxu0 %v3959
    %4289 = vmatpush1.bf16.msra.mxu0 %v3958
    %4290 = vmatprep.subr.bf16.mxu0 %v3963
    %4291 = vmatpush1.bf16.msra.mxu0 %v3962
    %4292 = vmatprep.subr.bf16.mxu0 %v3967
    %4293 = vmatpush1.bf16.msra.mxu0 %v3966
    %4294 = vmatprep.subr.bf16.mxu0 %v3971
    %4295 = vmatpush1.bf16.msra.mxu0 %v3970
    %4296 = vmatprep.subr.bf16.mxu0 %v3975
    %4297 = vmatpush1.bf16.msra.mxu0 %v3974
    %4298 = vmatprep.subr.bf16.mxu0 %v3979
    %4299 = vmatpush1.bf16.msra.mxu0 %v3978
    %4300 = vmatprep.subr.bf16.mxu0 %v3983
    %4301 = vmatpush1.bf16.msra.mxu0 %v3982
    %4302 = vmatprep.subr.bf16.mxu0 %v3987
    %4303 = vmatpush1.bf16.msra.mxu0 %v3986
    %4304 = vmatprep.subr.bf16.mxu0 %v3991
    %4305 = vmatpush1.bf16.msra.mxu0 %v3990
    %4306 = vmatprep.subr.bf16.mxu0 %v3995
    %4307 = vmatpush1.bf16.msra.mxu0 %v3994
    %4308 = vmatprep.subr.bf16.mxu0 %v3999
    %4309 = vmatpush1.bf16.msra.mxu0 %v3998
    %4310 = vmatprep.subr.bf16.mxu0 %v4003
    %4311 = vmatpush1.bf16.msra.mxu0 %v4002
    %4312 = vmatprep.subr.bf16.mxu0 %v4007
    %4313 = vmatpush1.bf16.msra.mxu0 %v4006
    %4314 = vmatprep.mubr.bf16.mxu0 %v3429
    %4315 = vmatmul.mubr.bf16.gmra.mrb[0].mxu0 %v3428
    %v4316 = vpop.f32.mrb[0].mxu0
    %v4317 = vadd.f32 0.0, %v4316
    %v4318 = vpop.f32.mrb[0].mxu0
    %v4319 = vadd.f32 0.0, %v4318
    %v4320 = vpop.f32.mrb[0].mxu0
    %v4321 = vpop.f32.mrb[0].mxu0
    %4322 = vdwg.mxu0
    %4323 = vmatprep.subr.bf16.mxu0 %v4011
    %4324 = vmatpush1.bf16.msra.mxu0 %v4010
    %4325 = vmatprep.subr.bf16.mxu0 %v4015
    %4326 = vmatpush1.bf16.msra.mxu0 %v4014
    %4327 = vmatprep.subr.bf16.mxu0 %v4019
    %4328 = vmatpush1.bf16.msra.mxu0 %v4018
    %4329 = vmatprep.subr.bf16.mxu0 %v4023
    %4330 = vmatpush1.bf16.msra.mxu0 %v4022
    %4331 = vmatprep.subr.bf16.mxu0 %v4027
    %4332 = vmatpush1.bf16.msra.mxu0 %v4026
    %4333 = vmatprep.subr.bf16.mxu0 %v4031
    %4334 = vmatpush1.bf16.msra.mxu0 %v4030
    %4335 = vmatprep.subr.bf16.mxu0 %v4035
    %4336 = vmatpush1.bf16.msra.mxu0 %v4034
    %4337 = vmatprep.subr.bf16.mxu0 %v4039
    %4338 = vmatpush1.bf16.msra.mxu0 %v4038
    %4339 = vmatprep.subr.bf16.mxu0 %v4043
    %4340 = vmatpush1.bf16.msra.mxu0 %v4042
    %4341 = vmatprep.subr.bf16.mxu0 %v4047
    %4342 = vmatpush1.bf16.msra.mxu0 %v4046
    %4343 = vmatprep.subr.bf16.mxu0 %v4051
    %4344 = vmatpush1.bf16.msra.mxu0 %v4050
    %4345 = vmatprep.subr.bf16.mxu0 %v4055
    %4346 = vmatpush1.bf16.msra.mxu0 %v4054
    %4347 = vmatprep.subr.bf16.mxu0 %v4059
    %4348 = vmatpush1.bf16.msra.mxu0 %v4058
    %4349 = vmatprep.subr.bf16.mxu0 %v4063
    %4350 = vmatpush1.bf16.msra.mxu0 %v4062
    %4351 = vmatprep.subr.bf16.mxu0 %v4067
    %4352 = vmatpush1.bf16.msra.mxu0 %v4066
    %4353 = vmatprep.subr.bf16.mxu0 %v4071
    %4354 = vmatpush1.bf16.msra.mxu0 %v4070
    %4355 = vmatprep.mubr.bf16.mxu0 %v3431
    %4356 = vmatmul.mubr.bf16.gmra.mrb[0].mxu0 %v3430
    %v4357 = vpop.f32.mrb[0].mxu0
    %v4358 = vadd.f32 %v4317, %v4357
    %v4359 = vpop.f32.mrb[0].mxu0
    %v4360 = vadd.f32 %v4319, %v4359
    %v4361 = vpop.f32.mrb[0].mxu0
    %v4362 = vpop.f32.mrb[0].mxu0
    %4363 = vdwg.mxu0
    %v4364 = vadd.f32 %v1513, %v4276
    %v4365 = vadd.f32 %v1517, %v4278
    %v4366 = vadd.f32 %v1521, %v4358
    %v4367 = vadd.f32 %v1525, %v4360
    %v4368 = vpack.c.bf16 %v1379, %v1379
    %v4369 = vpack.c.bf16 %v1381, %v1381
    %v4370 = vpack.c.bf16 %v1420, %v1420
    %v4371 = vpack.c.bf16 %v1422, %v1422
    %v4372 = vpack.c.bf16 %v1461, %v1461
    %v4373 = vpack.c.bf16 %v1463, %v1463
    %v4374 = vpack.c.bf16 %v1502, %v1502
    %v4375 = vpack.c.bf16 %v1504, %v1504
    %4376 = vmatprep.subr.bf16.mxu0 %v2179
    %4377 = vmatpush1.bf16.msra.mxu0 %v2178
    %4378 = vmatprep.subr.bf16.mxu0 %v2183
    %4379 = vmatpush1.bf16.msra.mxu0 %v2182
    %4380 = vmatprep.subr.bf16.mxu0 %v2187
    %4381 = vmatpush1.bf16.msra.mxu0 %v2186
    %4382 = vmatprep.subr.bf16.mxu0 %v2191
    %4383 = vmatpush1.bf16.msra.mxu0 %v2190
    %4384 = vmatprep.subr.bf16.mxu0 %v2195
    %4385 = vmatpush1.bf16.msra.mxu0 %v2194
    %4386 = vmatprep.subr.bf16.mxu0 %v2199
    %4387 = vmatpush1.bf16.msra.mxu0 %v2198
    %4388 = vmatprep.subr.bf16.mxu0 %v2203
    %4389 = vmatpush1.bf16.msra.mxu0 %v2202
    %4390 = vmatprep.subr.bf16.mxu0 %v2207
    %4391 = vmatpush1.bf16.msra.mxu0 %v2206
    %4392 = vmatprep.subr.bf16.mxu0 %v2211
    %4393 = vmatpush1.bf16.msra.mxu0 %v2210
    %4394 = vmatprep.subr.bf16.mxu0 %v2215
    %4395 = vmatpush1.bf16.msra.mxu0 %v2214
    %4396 = vmatprep.subr.bf16.mxu0 %v2219
    %4397 = vmatpush1.bf16.msra.mxu0 %v2218
    %4398 = vmatprep.subr.bf16.mxu0 %v2223
    %4399 = vmatpush1.bf16.msra.mxu0 %v2222
    %4400 = vmatprep.subr.bf16.mxu0 %v2227
    %4401 = vmatpush1.bf16.msra.mxu0 %v2226
    %4402 = vmatprep.subr.bf16.mxu0 %v2231
    %4403 = vmatpush1.bf16.msra.mxu0 %v2230
    %4404 = vmatprep.subr.bf16.mxu0 %v2235
    %4405 = vmatpush1.bf16.msra.mxu0 %v2234
    %4406 = vmatprep.subr.bf16.mxu0 %v2239
    %4407 = vmatpush1.bf16.msra.mxu0 %v2238
    %4408 = vmatprep.mubr.bf16.mxu0 %v4373
    %4409 = vmatmul.mubr.bf16.gmra.mrb[0].mxu0 %v4372
    %v4410 = vpop.f32.mrb[0].mxu0
    %v4411 = vadd.f32 0.0, %v4410
    %v4412 = vpop.f32.mrb[0].mxu0
    %v4413 = vadd.f32 0.0, %v4412
    %v4414 = vpop.f32.mrb[0].mxu0
    %v4415 = vpop.f32.mrb[0].mxu0
    %4416 = vdwg.mxu0
    %4417 = vmatprep.subr.bf16.mxu0 %v2243
    %4418 = vmatpush1.bf16.msra.mxu0 %v2242
    %4419 = vmatprep.subr.bf16.mxu0 %v2247
    %4420 = vmatpush1.bf16.msra.mxu0 %v2246
    %4421 = vmatprep.subr.bf16.mxu0 %v2251
    %4422 = vmatpush1.bf16.msra.mxu0 %v2250
    %4423 = vmatprep.subr.bf16.mxu0 %v2255
    %4424 = vmatpush1.bf16.msra.mxu0 %v2254
    %4425 = vmatprep.subr.bf16.mxu0 %v2259
    %4426 = vmatpush1.bf16.msra.mxu0 %v2258
    %4427 = vmatprep.subr.bf16.mxu0 %v2263
    %4428 = vmatpush1.bf16.msra.mxu0 %v2262
    %4429 = vmatprep.subr.bf16.mxu0 %v2267
    %4430 = vmatpush1.bf16.msra.mxu0 %v2266
    %4431 = vmatprep.subr.bf16.mxu0 %v2271
    %4432 = vmatpush1.bf16.msra.mxu0 %v2270
    %4433 = vmatprep.subr.bf16.mxu0 %v2275
    %4434 = vmatpush1.bf16.msra.mxu0 %v2274
    %4435 = vmatprep.subr.bf16.mxu0 %v2279
    %4436 = vmatpush1.bf16.msra.mxu0 %v2278
    %4437 = vmatprep.subr.bf16.mxu0 %v2283
    %4438 = vmatpush1.bf16.msra.mxu0 %v2282
    %4439 = vmatprep.subr.bf16.mxu0 %v2287
    %4440 = vmatpush1.bf16.msra.mxu0 %v2286
    %4441 = vmatprep.subr.bf16.mxu0 %v2291
    %4442 = vmatpush1.bf16.msra.mxu0 %v2290
    %4443 = vmatprep.subr.bf16.mxu0 %v2295
    %4444 = vmatpush1.bf16.msra.mxu0 %v2294
    %4445 = vmatprep.subr.bf16.mxu0 %v2299
    %4446 = vmatpush1.bf16.msra.mxu0 %v2298
    %4447 = vmatprep.subr.bf16.mxu0 %v2303
    %4448 = vmatpush1.bf16.msra.mxu0 %v2302
    %4449 = vmatprep.mubr.bf16.mxu0 %v4375
    %4450 = vmatmul.mubr.bf16.gmra.mrb[0].mxu0 %v4374
    %v4451 = vpop.f32.mrb[0].mxu0
    %v4452 = vadd.f32 %v4411, %v4451
    %v4453 = vpop.f32.mrb[0].mxu0
    %v4454 = vadd.f32 %v4413, %v4453
    %v4455 = vpop.f32.mrb[0].mxu0
    %v4456 = vpop.f32.mrb[0].mxu0
    %4457 = vdwg.mxu0
    %4458 = vmatprep.subr.bf16.mxu0 %v2181
    %4459 = vmatpush1.bf16.msra.mxu0 %v2180
    %4460 = vmatprep.subr.bf16.mxu0 %v2185
    %4461 = vmatpush1.bf16.msra.mxu0 %v2184
    %4462 = vmatprep.subr.bf16.mxu0 %v2189
    %4463 = vmatpush1.bf16.msra.mxu0 %v2188
    %4464 = vmatprep.subr.bf16.mxu0 %v2193
    %4465 = vmatpush1.bf16.msra.mxu0 %v2192
    %4466 = vmatprep.subr.bf16.mxu0 %v2197
    %4467 = vmatpush1.bf16.msra.mxu0 %v2196
    %4468 = vmatprep.subr.bf16.mxu0 %v2201
    %4469 = vmatpush1.bf16.msra.mxu0 %v2200
    %4470 = vmatprep.subr.bf16.mxu0 %v2205
    %4471 = vmatpush1.bf16.msra.mxu0 %v2204
    %4472 = vmatprep.subr.bf16.mxu0 %v2209
    %4473 = vmatpush1.bf16.msra.mxu0 %v2208
    %4474 = vmatprep.subr.bf16.mxu0 %v2213
    %4475 = vmatpush1.bf16.msra.mxu0 %v2212
    %4476 = vmatprep.subr.bf16.mxu0 %v2217
    %4477 = vmatpush1.bf16.msra.mxu0 %v2216
    %4478 = vmatprep.subr.bf16.mxu0 %v2221
    %4479 = vmatpush1.bf16.msra.mxu0 %v2220
    %4480 = vmatprep.subr.bf16.mxu0 %v2225
    %4481 = vmatpush1.bf16.msra.mxu0 %v2224
    %4482 = vmatprep.subr.bf16.mxu0 %v2229
    %4483 = vmatpush1.bf16.msra.mxu0 %v2228
    %4484 = vmatprep.subr.bf16.mxu0 %v2233
    %4485 = vmatpush1.bf16.msra.mxu0 %v2232
    %4486 = vmatprep.subr.bf16.mxu0 %v2237
    %4487 = vmatpush1.bf16.msra.mxu0 %v2236
    %4488 = vmatprep.subr.bf16.mxu0 %v2241
    %4489 = vmatpush1.bf16.msra.mxu0 %v2240
    %4490 = vmatprep.mubr.bf16.mxu0 %v4373
    %4491 = vmatmul.mubr.bf16.gmra.mrb[0].mxu0 %v4372
    %v4492 = vpop.f32.mrb[0].mxu0
    %v4493 = vadd.f32 0.0, %v4492
    %v4494 = vpop.f32.mrb[0].mxu0
    %v4495 = vadd.f32 0.0, %v4494
    %v4496 = vpop.f32.mrb[0].mxu0
    %v4497 = vpop.f32.mrb[0].mxu0
    %4498 = vdwg.mxu0
    %4499 = vmatprep.subr.bf16.mxu0 %v2245
    %4500 = vmatpush1.bf16.msra.mxu0 %v2244
    %4501 = vmatprep.subr.bf16.mxu0 %v2249
    %4502 = vmatpush1.bf16.msra.mxu0 %v2248
    %4503 = vmatprep.subr.bf16.mxu0 %v2253
    %4504 = vmatpush1.bf16.msra.mxu0 %v2252
    %4505 = vmatprep.subr.bf16.mxu0 %v2257
    %4506 = vmatpush1.bf16.msra.mxu0 %v2256
    %4507 = vmatprep.subr.bf16.mxu0 %v2261
    %4508 = vmatpush1.bf16.msra.mxu0 %v2260
    %4509 = vmatprep.subr.bf16.mxu0 %v2265
    %4510 = vmatpush1.bf16.msra.mxu0 %v2264
    %4511 = vmatprep.subr.bf16.mxu0 %v2269
    %4512 = vmatpush1.bf16.msra.mxu0 %v2268
    %4513 = vmatprep.subr.bf16.mxu0 %v2273
    %4514 = vmatpush1.bf16.msra.mxu0 %v2272
    %4515 = vmatprep.subr.bf16.mxu0 %v2277
    %4516 = vmatpush1.bf16.msra.mxu0 %v2276
    %4517 = vmatprep.subr.bf16.mxu0 %v2281
    %4518 = vmatpush1.bf16.msra.mxu0 %v2280
    %4519 = vmatprep.subr.bf16.mxu0 %v2285
    %4520 = vmatpush1.bf16.msra.mxu0 %v2284
    %4521 = vmatprep.subr.bf16.mxu0 %v2289
    %4522 = vmatpush1.bf16.msra.mxu0 %v2288
    %4523 = vmatprep.subr.bf16.mxu0 %v2293
    %4524 = vmatpush1.bf16.msra.mxu0 %v2292
    %4525 = vmatprep.subr.bf16.mxu0 %v2297
    %4526 = vmatpush1.bf16.msra.mxu0 %v2296
    %4527 = vmatprep.subr.bf16.mxu0 %v2301
    %4528 = vmatpush1.bf16.msra.mxu0 %v2300
    %4529 = vmatprep.subr.bf16.mxu0 %v2305
    %4530 = vmatpush1.bf16.msra.mxu0 %v2304
    %4531 = vmatprep.mubr.bf16.mxu0 %v4375
    %4532 = vmatmul.mubr.bf16.gmra.mrb[0].mxu0 %v4374
    %v4533 = vpop.f32.mrb[0].mxu0
    %v4534 = vadd.f32 %v4493, %v4533
    %v4535 = vpop.f32.mrb[0].mxu0
    %v4536 = vadd.f32 %v4495, %v4535
    %v4537 = vpop.f32.mrb[0].mxu0
    %v4538 = vpop.f32.mrb[0].mxu0
    %4539 = vdwg.mxu0
    %4540 = vmatprep.subr.bf16.mxu0 %v2983
    %4541 = vmatpush1.bf16.msra.mxu0 %v2982
    %4542 = vmatprep.subr.bf16.mxu0 %v2987
    %4543 = vmatpush1.bf16.msra.mxu0 %v2986
    %4544 = vmatprep.subr.bf16.mxu0 %v2991
    %4545 = vmatpush1.bf16.msra.mxu0 %v2990
    %4546 = vmatprep.subr.bf16.mxu0 %v2995
    %4547 = vmatpush1.bf16.msra.mxu0 %v2994
    %4548 = vmatprep.subr.bf16.mxu0 %v2999
    %4549 = vmatpush1.bf16.msra.mxu0 %v2998
    %4550 = vmatprep.subr.bf16.mxu0 %v3003
    %4551 = vmatpush1.bf16.msra.mxu0 %v3002
    %4552 = vmatprep.subr.bf16.mxu0 %v3007
    %4553 = vmatpush1.bf16.msra.mxu0 %v3006
    %4554 = vmatprep.subr.bf16.mxu0 %v3011
    %4555 = vmatpush1.bf16.msra.mxu0 %v3010
    %4556 = vmatprep.subr.bf16.mxu0 %v3015
    %4557 = vmatpush1.bf16.msra.mxu0 %v3014
    %4558 = vmatprep.subr.bf16.mxu0 %v3019
    %4559 = vmatpush1.bf16.msra.mxu0 %v3018
    %4560 = vmatprep.subr.bf16.mxu0 %v3023
    %4561 = vmatpush1.bf16.msra.mxu0 %v3022
    %4562 = vmatprep.subr.bf16.mxu0 %v3027
    %4563 = vmatpush1.bf16.msra.mxu0 %v3026
    %4564 = vmatprep.subr.bf16.mxu0 %v3031
    %4565 = vmatpush1.bf16.msra.mxu0 %v3030
    %4566 = vmatprep.subr.bf16.mxu0 %v3035
    %4567 = vmatpush1.bf16.msra.mxu0 %v3034
    %4568 = vmatprep.subr.bf16.mxu0 %v3039
    %4569 = vmatpush1.bf16.msra.mxu0 %v3038
    %4570 = vmatprep.subr.bf16.mxu0 %v3043
    %4571 = vmatpush1.bf16.msra.mxu0 %v3042
    %4572 = vmatprep.mubr.bf16.mxu0 %v4369
    %4573 = vmatmul.mubr.bf16.gmra.mrb[0].mxu0 %v4368
    %v4574 = vpop.f32.mrb[0].mxu0
    %v4575 = vadd.f32 %v4452, %v4574
    %v4576 = vpop.f32.mrb[0].mxu0
    %v4577 = vadd.f32 %v4454, %v4576
    %v4578 = vpop.f32.mrb[0].mxu0
    %v4579 = vpop.f32.mrb[0].mxu0
    %4580 = vdwg.mxu0
    %4581 = vmatprep.subr.bf16.mxu0 %v3047
    %4582 = vmatpush1.bf16.msra.mxu0 %v3046
    %4583 = vmatprep.subr.bf16.mxu0 %v3051
    %4584 = vmatpush1.bf16.msra.mxu0 %v3050
    %4585 = vmatprep.subr.bf16.mxu0 %v3055
    %4586 = vmatpush1.bf16.msra.mxu0 %v3054
    %4587 = vmatprep.subr.bf16.mxu0 %v3059
    %4588 = vmatpush1.bf16.msra.mxu0 %v3058
    %4589 = vmatprep.subr.bf16.mxu0 %v3063
    %4590 = vmatpush1.bf16.msra.mxu0 %v3062
    %4591 = vmatprep.subr.bf16.mxu0 %v3067
    %4592 = vmatpush1.bf16.msra.mxu0 %v3066
    %4593 = vmatprep.subr.bf16.mxu0 %v3071
    %4594 = vmatpush1.bf16.msra.mxu0 %v3070
    %4595 = vmatprep.subr.bf16.mxu0 %v3075
    %4596 = vmatpush1.bf16.msra.mxu0 %v3074
    %4597 = vmatprep.subr.bf16.mxu0 %v3079
    %4598 = vmatpush1.bf16.msra.mxu0 %v3078
    %4599 = vmatprep.subr.bf16.mxu0 %v3083
    %4600 = vmatpush1.bf16.msra.mxu0 %v3082
    %4601 = vmatprep.subr.bf16.mxu0 %v3087
    %4602 = vmatpush1.bf16.msra.mxu0 %v3086
    %4603 = vmatprep.subr.bf16.mxu0 %v3091
    %4604 = vmatpush1.bf16.msra.mxu0 %v3090
    %4605 = vmatprep.subr.bf16.mxu0 %v3095
    %4606 = vmatpush1.bf16.msra.mxu0 %v3094
    %4607 = vmatprep.subr.bf16.mxu0 %v3099
    %4608 = vmatpush1.bf16.msra.mxu0 %v3098
    %4609 = vmatprep.subr.bf16.mxu0 %v3103
    %4610 = vmatpush1.bf16.msra.mxu0 %v3102
    %4611 = vmatprep.subr.bf16.mxu0 %v3107
    %4612 = vmatpush1.bf16.msra.mxu0 %v3106
    %4613 = vmatprep.mubr.bf16.mxu0 %v4371
    %4614 = vmatmul.mubr.bf16.gmra.mrb[0].mxu0 %v4370
    %v4615 = vpop.f32.mrb[0].mxu0
    %v4616 = vadd.f32 %v4575, %v4615
    %v4617 = vpop.f32.mrb[0].mxu0
    %v4618 = vadd.f32 %v4577, %v4617
    %v4619 = vpop.f32.mrb[0].mxu0
    %v4620 = vpop.f32.mrb[0].mxu0
    %4621 = vdwg.mxu0
    %4622 = vmatprep.subr.bf16.mxu0 %v2985
    %4623 = vmatpush1.bf16.msra.mxu0 %v2984
    %4624 = vmatprep.subr.bf16.mxu0 %v2989
    %4625 = vmatpush1.bf16.msra.mxu0 %v2988
    %4626 = vmatprep.subr.bf16.mxu0 %v2993
    %4627 = vmatpush1.bf16.msra.mxu0 %v2992
    %4628 = vmatprep.subr.bf16.mxu0 %v2997
    %4629 = vmatpush1.bf16.msra.mxu0 %v2996
    %4630 = vmatprep.subr.bf16.mxu0 %v3001
    %4631 = vmatpush1.bf16.msra.mxu0 %v3000
    %4632 = vmatprep.subr.bf16.mxu0 %v3005
    %4633 = vmatpush1.bf16.msra.mxu0 %v3004
    %4634 = vmatprep.subr.bf16.mxu0 %v3009
    %4635 = vmatpush1.bf16.msra.mxu0 %v3008
    %4636 = vmatprep.subr.bf16.mxu0 %v3013
    %4637 = vmatpush1.bf16.msra.mxu0 %v3012
    %4638 = vmatprep.subr.bf16.mxu0 %v3017
    %4639 = vmatpush1.bf16.msra.mxu0 %v3016
    %4640 = vmatprep.subr.bf16.mxu0 %v3021
    %4641 = vmatpush1.bf16.msra.mxu0 %v3020
    %4642 = vmatprep.subr.bf16.mxu0 %v3025
    %4643 = vmatpush1.bf16.msra.mxu0 %v3024
    %4644 = vmatprep.subr.bf16.mxu0 %v3029
    %4645 = vmatpush1.bf16.msra.mxu0 %v3028
    %4646 = vmatprep.subr.bf16.mxu0 %v3033
    %4647 = vmatpush1.bf16.msra.mxu0 %v3032
    %4648 = vmatprep.subr.bf16.mxu0 %v3037
    %4649 = vmatpush1.bf16.msra.mxu0 %v3036
    %4650 = vmatprep.subr.bf16.mxu0 %v3041
    %4651 = vmatpush1.bf16.msra.mxu0 %v3040
    %4652 = vmatprep.subr.bf16.mxu0 %v3045
    %4653 = vmatpush1.bf16.msra.mxu0 %v3044
    %4654 = vmatprep.mubr.bf16.mxu0 %v4369
    %4655 = vmatmul.mubr.bf16.gmra.mrb[0].mxu0 %v4368
    %v4656 = vpop.f32.mrb[0].mxu0
    %v4657 = vadd.f32 %v4534, %v4656
    %v4658 = vpop.f32.mrb[0].mxu0
    %v4659 = vadd.f32 %v4536, %v4658
    %v4660 = vpop.f32.mrb[0].mxu0
    %v4661 = vpop.f32.mrb[0].mxu0
    %4662 = vdwg.mxu0
    %4663 = vmatprep.subr.bf16.mxu0 %v3049
    %4664 = vmatpush1.bf16.msra.mxu0 %v3048
    %4665 = vmatprep.subr.bf16.mxu0 %v3053
    %4666 = vmatpush1.bf16.msra.mxu0 %v3052
    %4667 = vmatprep.subr.bf16.mxu0 %v3057
    %4668 = vmatpush1.bf16.msra.mxu0 %v3056
    %4669 = vmatprep.subr.bf16.mxu0 %v3061
    %4670 = vmatpush1.bf16.msra.mxu0 %v3060
    %4671 = vmatprep.subr.bf16.mxu0 %v3065
    %4672 = vmatpush1.bf16.msra.mxu0 %v3064
    %4673 = vmatprep.subr.bf16.mxu0 %v3069
    %4674 = vmatpush1.bf16.msra.mxu0 %v3068
    %4675 = vmatprep.subr.bf16.mxu0 %v3073
    %4676 = vmatpush1.bf16.msra.mxu0 %v3072
    %4677 = vmatprep.subr.bf16.mxu0 %v3077
    %4678 = vmatpush1.bf16.msra.mxu0 %v3076
    %4679 = vmatprep.subr.bf16.mxu0 %v3081
    %4680 = vmatpush1.bf16.msra.mxu0 %v3080
    %4681 = vmatprep.subr.bf16.mxu0 %v3085
    %4682 = vmatpush1.bf16.msra.mxu0 %v3084
    %4683 = vmatprep.subr.bf16.mxu0 %v3089
    %4684 = vmatpush1.bf16.msra.mxu0 %v3088
    %4685 = vmatprep.subr.bf16.mxu0 %v3093
    %4686 = vmatpush1.bf16.msra.mxu0 %v3092
    %4687 = vmatprep.subr.bf16.mxu0 %v3097
    %4688 = vmatpush1.bf16.msra.mxu0 %v3096
    %4689 = vmatprep.subr.bf16.mxu0 %v3101
    %4690 = vmatpush1.bf16.msra.mxu0 %v3100
    %4691 = vmatprep.subr.bf16.mxu0 %v3105
    %4692 = vmatpush1.bf16.msra.mxu0 %v3104
    %4693 = vmatprep.subr.bf16.mxu0 %v3109
    %4694 = vmatpush1.bf16.msra.mxu0 %v3108
    %4695 = vmatprep.mubr.bf16.mxu0 %v4371
    %4696 = vmatmul.mubr.bf16.gmra.mrb[0].mxu0 %v4370
    %v4697 = vpop.f32.mrb[0].mxu0
    %v4698 = vadd.f32 %v4657, %v4697
    %v4699 = vpop.f32.mrb[0].mxu0
    %v4700 = vadd.f32 %v4659, %v4699
    %v4701 = vpop.f32.mrb[0].mxu0
    %v4702 = vpop.f32.mrb[0].mxu0
    %4703 = vdwg.mxu0
    %v4704 = vadd.f32 %v4616, %v3407
    %v4705 = vadd.f32 %v4618, %v3411
    %v4706 = vadd.f32 %v4698, %v3415
    %v4707 = vadd.f32 %v4700, %v3419
    %v4708 = vpack.c.bf16 %v4704, %v4704
    %v4709 = vpack.c.bf16 %v4705, %v4705
    %v4710 = vpack.c.bf16 %v4706, %v4706
    %v4711 = vpack.c.bf16 %v4707, %v4707
    %v4712 = vld [vmem:[#allocation8 + $0x400] sm:$0xff]
    %v4713 = vld [vmem:[#allocation8 + $0x408] sm:$0xff]
    %v4714 = vld [vmem:[#allocation8 + $0x410] sm:$0xff]
    %v4715 = vld [vmem:[#allocation8 + $0x418] sm:$0xff]
    %v4716 = vld [vmem:[#allocation8 + $0x420] sm:$0xff]
    %v4717 = vld [vmem:[#allocation8 + $0x428] sm:$0xff]
    %v4718 = vld [vmem:[#allocation8 + $0x430] sm:$0xff]
    %v4719 = vld [vmem:[#allocation8 + $0x438] sm:$0xff]
    %v4720 = vld [vmem:[#allocation8 + $0x440] sm:$0xff]
    %v4721 = vld [vmem:[#allocation8 + $0x448] sm:$0xff]
    %v4722 = vld [vmem:[#allocation8 + $0x450] sm:$0xff]
    %v4723 = vld [vmem:[#allocation8 + $0x458] sm:$0xff]
    %v4724 = vld [vmem:[#allocation8 + $0x460] sm:$0xff]
    %v4725 = vld [vmem:[#allocation8 + $0x468] sm:$0xff]
    %v4726 = vld [vmem:[#allocation8 + $0x470] sm:$0xff]
    %v4727 = vld [vmem:[#allocation8 + $0x478] sm:$0xff]
    %v4728 = vld [vmem:[#allocation8 + $0x480] sm:$0xff]
    %v4729 = vld [vmem:[#allocation8 + $0x488] sm:$0xff]
    %v4730 = vld [vmem:[#allocation8 + $0x490] sm:$0xff]
    %v4731 = vld [vmem:[#allocation8 + $0x498] sm:$0xff]
    %v4732 = vld [vmem:[#allocation8 + $0x4a0] sm:$0xff]
    %v4733 = vld [vmem:[#allocation8 + $0x4a8] sm:$0xff]
    %v4734 = vld [vmem:[#allocation8 + $0x4b0] sm:$0xff]
    %v4735 = vld [vmem:[#allocation8 + $0x4b8] sm:$0xff]
    %v4736 = vld [vmem:[#allocation8 + $0x4c0] sm:$0xff]
    %v4737 = vld [vmem:[#allocation8 + $0x4c8] sm:$0xff]
    %v4738 = vld [vmem:[#allocation8 + $0x4d0] sm:$0xff]
    %v4739 = vld [vmem:[#allocation8 + $0x4d8] sm:$0xff]
    %v4740 = vld [vmem:[#allocation8 + $0x4e0] sm:$0xff]
    %v4741 = vld [vmem:[#allocation8 + $0x4e8] sm:$0xff]
    %v4742 = vld [vmem:[#allocation8 + $0x4f0] sm:$0xff]
    %v4743 = vld [vmem:[#allocation8 + $0x4f8] sm:$0xff]
    %v4744 = vld [vmem:[#allocation8 + $0x500] sm:$0xff]
    %v4745 = vld [vmem:[#allocation8 + $0x508] sm:$0xff]
    %v4746 = vld [vmem:[#allocation8 + $0x510] sm:$0xff]
    %v4747 = vld [vmem:[#allocation8 + $0x518] sm:$0xff]
    %v4748 = vld [vmem:[#allocation8 + $0x520] sm:$0xff]
    %v4749 = vld [vmem:[#allocation8 + $0x528] sm:$0xff]
    %v4750 = vld [vmem:[#allocation8 + $0x530] sm:$0xff]
    %v4751 = vld [vmem:[#allocation8 + $0x538] sm:$0xff]
    %v4752 = vld [vmem:[#allocation8 + $0x540] sm:$0xff]
    %v4753 = vld [vmem:[#allocation8 + $0x548] sm:$0xff]
    %v4754 = vld [vmem:[#allocation8 + $0x550] sm:$0xff]
    %v4755 = vld [vmem:[#allocation8 + $0x558] sm:$0xff]
    %v4756 = vld [vmem:[#allocation8 + $0x560] sm:$0xff]
    %v4757 = vld [vmem:[#allocation8 + $0x568] sm:$0xff]
    %v4758 = vld [vmem:[#allocation8 + $0x570] sm:$0xff]
    %v4759 = vld [vmem:[#allocation8 + $0x578] sm:$0xff]
    %v4760 = vld [vmem:[#allocation8 + $0x580] sm:$0xff]
    %v4761 = vld [vmem:[#allocation8 + $0x588] sm:$0xff]
    %v4762 = vld [vmem:[#allocation8 + $0x590] sm:$0xff]
    %v4763 = vld [vmem:[#allocation8 + $0x598] sm:$0xff]
    %v4764 = vld [vmem:[#allocation8 + $0x5a0] sm:$0xff]
    %v4765 = vld [vmem:[#allocation8 + $0x5a8] sm:$0xff]
    %v4766 = vld [vmem:[#allocation8 + $0x5b0] sm:$0xff]
    %v4767 = vld [vmem:[#allocation8 + $0x5b8] sm:$0xff]
    %v4768 = vld [vmem:[#allocation8 + $0x5c0] sm:$0xff]
    %v4769 = vld [vmem:[#allocation8 + $0x5c8] sm:$0xff]
    %v4770 = vld [vmem:[#allocation8 + $0x5d0] sm:$0xff]
    %v4771 = vld [vmem:[#allocation8 + $0x5d8] sm:$0xff]
    %v4772 = vld [vmem:[#allocation8 + $0x5e0] sm:$0xff]
    %v4773 = vld [vmem:[#allocation8 + $0x5e8] sm:$0xff]
    %v4774 = vld [vmem:[#allocation8 + $0x5f0] sm:$0xff]
    %v4775 = vld [vmem:[#allocation8 + $0x5f8] sm:$0xff]
    %v4776 = vld [vmem:[#allocation8 + $0x600] sm:$0xff]
    %v4777 = vld [vmem:[#allocation8 + $0x608] sm:$0xff]
    %v4778 = vld [vmem:[#allocation8 + $0x610] sm:$0xff]
    %v4779 = vld [vmem:[#allocation8 + $0x618] sm:$0xff]
    %v4780 = vld [vmem:[#allocation8 + $0x620] sm:$0xff]
    %v4781 = vld [vmem:[#allocation8 + $0x628] sm:$0xff]
    %v4782 = vld [vmem:[#allocation8 + $0x630] sm:$0xff]
    %v4783 = vld [vmem:[#allocation8 + $0x638] sm:$0xff]
    %v4784 = vld [vmem:[#allocation8 + $0x640] sm:$0xff]
    %v4785 = vld [vmem:[#allocation8 + $0x648] sm:$0xff]
    %v4786 = vld [vmem:[#allocation8 + $0x650] sm:$0xff]
    %v4787 = vld [vmem:[#allocation8 + $0x658] sm:$0xff]
    %v4788 = vld [vmem:[#allocation8 + $0x660] sm:$0xff]
    %v4789 = vld [vmem:[#allocation8 + $0x668] sm:$0xff]
    %v4790 = vld [vmem:[#allocation8 + $0x670] sm:$0xff]
    %v4791 = vld [vmem:[#allocation8 + $0x678] sm:$0xff]
    %v4792 = vld [vmem:[#allocation8 + $0x680] sm:$0xff]
    %v4793 = vld [vmem:[#allocation8 + $0x688] sm:$0xff]
    %v4794 = vld [vmem:[#allocation8 + $0x690] sm:$0xff]
    %v4795 = vld [vmem:[#allocation8 + $0x698] sm:$0xff]
    %v4796 = vld [vmem:[#allocation8 + $0x6a0] sm:$0xff]
    %v4797 = vld [vmem:[#allocation8 + $0x6a8] sm:$0xff]
    %v4798 = vld [vmem:[#allocation8 + $0x6b0] sm:$0xff]
    %v4799 = vld [vmem:[#allocation8 + $0x6b8] sm:$0xff]
    %v4800 = vld [vmem:[#allocation8 + $0x6c0] sm:$0xff]
    %v4801 = vld [vmem:[#allocation8 + $0x6c8] sm:$0xff]
    %v4802 = vld [vmem:[#allocation8 + $0x6d0] sm:$0xff]
    %v4803 = vld [vmem:[#allocation8 + $0x6d8] sm:$0xff]
    %v4804 = vld [vmem:[#allocation8 + $0x6e0] sm:$0xff]
    %v4805 = vld [vmem:[#allocation8 + $0x6e8] sm:$0xff]
    %v4806 = vld [vmem:[#allocation8 + $0x6f0] sm:$0xff]
    %v4807 = vld [vmem:[#allocation8 + $0x6f8] sm:$0xff]
    %v4808 = vld [vmem:[#allocation8 + $0x700] sm:$0xff]
    %v4809 = vld [vmem:[#allocation8 + $0x708] sm:$0xff]
    %v4810 = vld [vmem:[#allocation8 + $0x710] sm:$0xff]
    %v4811 = vld [vmem:[#allocation8 + $0x718] sm:$0xff]
    %v4812 = vld [vmem:[#allocation8 + $0x720] sm:$0xff]
    %v4813 = vld [vmem:[#allocation8 + $0x728] sm:$0xff]
    %v4814 = vld [vmem:[#allocation8 + $0x730] sm:$0xff]
    %v4815 = vld [vmem:[#allocation8 + $0x738] sm:$0xff]
    %v4816 = vld [vmem:[#allocation8 + $0x740] sm:$0xff]
    %v4817 = vld [vmem:[#allocation8 + $0x748] sm:$0xff]
    %v4818 = vld [vmem:[#allocation8 + $0x750] sm:$0xff]
    %v4819 = vld [vmem:[#allocation8 + $0x758] sm:$0xff]
    %v4820 = vld [vmem:[#allocation8 + $0x760] sm:$0xff]
    %v4821 = vld [vmem:[#allocation8 + $0x768] sm:$0xff]
    %v4822 = vld [vmem:[#allocation8 + $0x770] sm:$0xff]
    %v4823 = vld [vmem:[#allocation8 + $0x778] sm:$0xff]
    %v4824 = vld [vmem:[#allocation8 + $0x780] sm:$0xff]
    %v4825 = vld [vmem:[#allocation8 + $0x788] sm:$0xff]
    %v4826 = vld [vmem:[#allocation8 + $0x790] sm:$0xff]
    %v4827 = vld [vmem:[#allocation8 + $0x798] sm:$0xff]
    %v4828 = vld [vmem:[#allocation8 + $0x7a0] sm:$0xff]
    %v4829 = vld [vmem:[#allocation8 + $0x7a8] sm:$0xff]
    %v4830 = vld [vmem:[#allocation8 + $0x7b0] sm:$0xff]
    %v4831 = vld [vmem:[#allocation8 + $0x7b8] sm:$0xff]
    %v4832 = vld [vmem:[#allocation8 + $0x7c0] sm:$0xff]
    %v4833 = vld [vmem:[#allocation8 + $0x7c8] sm:$0xff]
    %v4834 = vld [vmem:[#allocation8 + $0x7d0] sm:$0xff]
    %v4835 = vld [vmem:[#allocation8 + $0x7d8] sm:$0xff]
    %v4836 = vld [vmem:[#allocation8 + $0x7e0] sm:$0xff]
    %v4837 = vld [vmem:[#allocation8 + $0x7e8] sm:$0xff]
    %v4838 = vld [vmem:[#allocation8 + $0x7f0] sm:$0xff]
    %v4839 = vld [vmem:[#allocation8 + $0x7f8] sm:$0xff]
    %v4968 = vunpack.c.l.b16 %v4712
    %v4969 = vunpack.c.h.b16 %v4712
    %v4970 = vunpack.c.l.b16 %v4713
    %v4971 = vunpack.c.h.b16 %v4713
    %v4972 = vunpack.c.l.b16 %v4714
    %v4973 = vunpack.c.h.b16 %v4714
    %v4974 = vunpack.c.l.b16 %v4715
    %v4975 = vunpack.c.h.b16 %v4715
    %v4976 = vunpack.c.l.b16 %v4716
    %v4977 = vunpack.c.h.b16 %v4716
    %v4978 = vunpack.c.l.b16 %v4717
    %v4979 = vunpack.c.h.b16 %v4717
    %v4980 = vunpack.c.l.b16 %v4718
    %v4981 = vunpack.c.h.b16 %v4718
    %v4982 = vunpack.c.l.b16 %v4719
    %v4983 = vunpack.c.h.b16 %v4719
    %v4984 = vunpack.c.l.b16 %v4720
    %v4985 = vunpack.c.h.b16 %v4720
    %v4986 = vunpack.c.l.b16 %v4721
    %v4987 = vunpack.c.h.b16 %v4721
    %v4988 = vunpack.c.l.b16 %v4722
    %v4989 = vunpack.c.h.b16 %v4722
    %v4990 = vunpack.c.l.b16 %v4723
    %v4991 = vunpack.c.h.b16 %v4723
    %v4992 = vunpack.c.l.b16 %v4724
    %v4993 = vunpack.c.h.b16 %v4724
    %v4994 = vunpack.c.l.b16 %v4725
    %v4995 = vunpack.c.h.b16 %v4725
    %v4996 = vunpack.c.l.b16 %v4726
    %v4997 = vunpack.c.h.b16 %v4726
    %v4998 = vunpack.c.l.b16 %v4727
    %v4999 = vunpack.c.h.b16 %v4727
    %v5000 = vunpack.c.l.b16 %v4728
    %v5001 = vunpack.c.h.b16 %v4728
    %v5002 = vunpack.c.l.b16 %v4729
    %v5003 = vunpack.c.h.b16 %v4729
    %v5004 = vunpack.c.l.b16 %v4730
    %v5005 = vunpack.c.h.b16 %v4730
    %v5006 = vunpack.c.l.b16 %v4731
    %v5007 = vunpack.c.h.b16 %v4731
    %v5008 = vunpack.c.l.b16 %v4732
    %v5009 = vunpack.c.h.b16 %v4732
    %v5010 = vunpack.c.l.b16 %v4733
    %v5011 = vunpack.c.h.b16 %v4733
    %v5012 = vunpack.c.l.b16 %v4734
    %v5013 = vunpack.c.h.b16 %v4734
    %v5014 = vunpack.c.l.b16 %v4735
    %v5015 = vunpack.c.h.b16 %v4735
    %v5016 = vunpack.c.l.b16 %v4736
    %v5017 = vunpack.c.h.b16 %v4736
    %v5018 = vunpack.c.l.b16 %v4737
    %v5019 = vunpack.c.h.b16 %v4737
    %v5020 = vunpack.c.l.b16 %v4738
    %v5021 = vunpack.c.h.b16 %v4738
    %v5022 = vunpack.c.l.b16 %v4739
    %v5023 = vunpack.c.h.b16 %v4739
    %v5024 = vunpack.c.l.b16 %v4740
    %v5025 = vunpack.c.h.b16 %v4740
    %v5026 = vunpack.c.l.b16 %v4741
    %v5027 = vunpack.c.h.b16 %v4741
    %v5028 = vunpack.c.l.b16 %v4742
    %v5029 = vunpack.c.h.b16 %v4742
    %v5030 = vunpack.c.l.b16 %v4743
    %v5031 = vunpack.c.h.b16 %v4743
    %v5032 = vunpack.c.l.b16 %v4744
    %v5033 = vunpack.c.h.b16 %v4744
    %v5034 = vunpack.c.l.b16 %v4745
    %v5035 = vunpack.c.h.b16 %v4745
    %v5036 = vunpack.c.l.b16 %v4746
    %v5037 = vunpack.c.h.b16 %v4746
    %v5038 = vunpack.c.l.b16 %v4747
    %v5039 = vunpack.c.h.b16 %v4747
    %v5040 = vunpack.c.l.b16 %v4748
    %v5041 = vunpack.c.h.b16 %v4748
    %v5042 = vunpack.c.l.b16 %v4749
    %v5043 = vunpack.c.h.b16 %v4749
    %v5044 = vunpack.c.l.b16 %v4750
    %v5045 = vunpack.c.h.b16 %v4750
    %v5046 = vunpack.c.l.b16 %v4751
    %v5047 = vunpack.c.h.b16 %v4751
    %v5048 = vunpack.c.l.b16 %v4752
    %v5049 = vunpack.c.h.b16 %v4752
    %v5050 = vunpack.c.l.b16 %v4753
    %v5051 = vunpack.c.h.b16 %v4753
    %v5052 = vunpack.c.l.b16 %v4754
    %v5053 = vunpack.c.h.b16 %v4754
    %v5054 = vunpack.c.l.b16 %v4755
    %v5055 = vunpack.c.h.b16 %v4755
    %v5056 = vunpack.c.l.b16 %v4756
    %v5057 = vunpack.c.h.b16 %v4756
    %v5058 = vunpack.c.l.b16 %v4757
    %v5059 = vunpack.c.h.b16 %v4757
    %v5060 = vunpack.c.l.b16 %v4758
    %v5061 = vunpack.c.h.b16 %v4758
    %v5062 = vunpack.c.l.b16 %v4759
    %v5063 = vunpack.c.h.b16 %v4759
    %v5064 = vunpack.c.l.b16 %v4760
    %v5065 = vunpack.c.h.b16 %v4760
    %v5066 = vunpack.c.l.b16 %v4761
    %v5067 = vunpack.c.h.b16 %v4761
    %v5068 = vunpack.c.l.b16 %v4762
    %v5069 = vunpack.c.h.b16 %v4762
    %v5070 = vunpack.c.l.b16 %v4763
    %v5071 = vunpack.c.h.b16 %v4763
    %v5072 = vunpack.c.l.b16 %v4764
    %v5073 = vunpack.c.h.b16 %v4764
    %v5074 = vunpack.c.l.b16 %v4765
    %v5075 = vunpack.c.h.b16 %v4765
    %v5076 = vunpack.c.l.b16 %v4766
    %v5077 = vunpack.c.h.b16 %v4766
    %v5078 = vunpack.c.l.b16 %v4767
    %v5079 = vunpack.c.h.b16 %v4767
    %v5080 = vunpack.c.l.b16 %v4768
    %v5081 = vunpack.c.h.b16 %v4768
    %v5082 = vunpack.c.l.b16 %v4769
    %v5083 = vunpack.c.h.b16 %v4769
    %v5084 = vunpack.c.l.b16 %v4770
    %v5085 = vunpack.c.h.b16 %v4770
    %v5086 = vunpack.c.l.b16 %v4771
    %v5087 = vunpack.c.h.b16 %v4771
    %v5088 = vunpack.c.l.b16 %v4772
    %v5089 = vunpack.c.h.b16 %v4772
    %v5090 = vunpack.c.l.b16 %v4773
    %v5091 = vunpack.c.h.b16 %v4773
    %v5092 = vunpack.c.l.b16 %v4774
    %v5093 = vunpack.c.h.b16 %v4774
    %v5094 = vunpack.c.l.b16 %v4775
    %v5095 = vunpack.c.h.b16 %v4775
    %v5096 = vunpack.c.l.b16 %v4776
    %v5097 = vunpack.c.h.b16 %v4776
    %v5098 = vunpack.c.l.b16 %v4777
    %v5099 = vunpack.c.h.b16 %v4777
    %v5100 = vunpack.c.l.b16 %v4778
    %v5101 = vunpack.c.h.b16 %v4778
    %v5102 = vunpack.c.l.b16 %v4779
    %v5103 = vunpack.c.h.b16 %v4779
    %v5104 = vunpack.c.l.b16 %v4780
    %v5105 = vunpack.c.h.b16 %v4780
    %v5106 = vunpack.c.l.b16 %v4781
    %v5107 = vunpack.c.h.b16 %v4781
    %v5108 = vunpack.c.l.b16 %v4782
    %v5109 = vunpack.c.h.b16 %v4782
    %v5110 = vunpack.c.l.b16 %v4783
    %v5111 = vunpack.c.h.b16 %v4783
    %v5112 = vunpack.c.l.b16 %v4784
    %v5113 = vunpack.c.h.b16 %v4784
    %v5114 = vunpack.c.l.b16 %v4785
    %v5115 = vunpack.c.h.b16 %v4785
    %v5116 = vunpack.c.l.b16 %v4786
    %v5117 = vunpack.c.h.b16 %v4786
    %v5118 = vunpack.c.l.b16 %v4787
    %v5119 = vunpack.c.h.b16 %v4787
    %v5120 = vunpack.c.l.b16 %v4788
    %v5121 = vunpack.c.h.b16 %v4788
    %v5122 = vunpack.c.l.b16 %v4789
    %v5123 = vunpack.c.h.b16 %v4789
    %v5124 = vunpack.c.l.b16 %v4790
    %v5125 = vunpack.c.h.b16 %v4790
    %v5126 = vunpack.c.l.b16 %v4791
    %v5127 = vunpack.c.h.b16 %v4791
    %v5128 = vunpack.c.l.b16 %v4792
    %v5129 = vunpack.c.h.b16 %v4792
    %v5130 = vunpack.c.l.b16 %v4793
    %v5131 = vunpack.c.h.b16 %v4793
    %v5132 = vunpack.c.l.b16 %v4794
    %v5133 = vunpack.c.h.b16 %v4794
    %v5134 = vunpack.c.l.b16 %v4795
    %v5135 = vunpack.c.h.b16 %v4795
    %v5136 = vunpack.c.l.b16 %v4796
    %v5137 = vunpack.c.h.b16 %v4796
    %v5138 = vunpack.c.l.b16 %v4797
    %v5139 = vunpack.c.h.b16 %v4797
    %v5140 = vunpack.c.l.b16 %v4798
    %v5141 = vunpack.c.h.b16 %v4798
    %v5142 = vunpack.c.l.b16 %v4799
    %v5143 = vunpack.c.h.b16 %v4799
    %v5144 = vunpack.c.l.b16 %v4800
    %v5145 = vunpack.c.h.b16 %v4800
    %v5146 = vunpack.c.l.b16 %v4801
    %v5147 = vunpack.c.h.b16 %v4801
    %v5148 = vunpack.c.l.b16 %v4802
    %v5149 = vunpack.c.h.b16 %v4802
    %v5150 = vunpack.c.l.b16 %v4803
    %v5151 = vunpack.c.h.b16 %v4803
    %v5152 = vunpack.c.l.b16 %v4804
    %v5153 = vunpack.c.h.b16 %v4804
    %v5154 = vunpack.c.l.b16 %v4805
    %v5155 = vunpack.c.h.b16 %v4805
    %v5156 = vunpack.c.l.b16 %v4806
    %v5157 = vunpack.c.h.b16 %v4806
    %v5158 = vunpack.c.l.b16 %v4807
    %v5159 = vunpack.c.h.b16 %v4807
    %v5160 = vunpack.c.l.b16 %v4808
    %v5161 = vunpack.c.h.b16 %v4808
    %v5162 = vunpack.c.l.b16 %v4809
    %v5163 = vunpack.c.h.b16 %v4809
    %v5164 = vunpack.c.l.b16 %v4810
    %v5165 = vunpack.c.h.b16 %v4810
    %v5166 = vunpack.c.l.b16 %v4811
    %v5167 = vunpack.c.h.b16 %v4811
    %v5168 = vunpack.c.l.b16 %v4812
    %v5169 = vunpack.c.h.b16 %v4812
    %v5170 = vunpack.c.l.b16 %v4813
    %v5171 = vunpack.c.h.b16 %v4813
    %v5172 = vunpack.c.l.b16 %v4814
    %v5173 = vunpack.c.h.b16 %v4814
    %v5174 = vunpack.c.l.b16 %v4815
    %v5175 = vunpack.c.h.b16 %v4815
    %v5176 = vunpack.c.l.b16 %v4816
    %v5177 = vunpack.c.h.b16 %v4816
    %v5178 = vunpack.c.l.b16 %v4817
    %v5179 = vunpack.c.h.b16 %v4817
    %v5180 = vunpack.c.l.b16 %v4818
    %v5181 = vunpack.c.h.b16 %v4818
    %v5182 = vunpack.c.l.b16 %v4819
    %v5183 = vunpack.c.h.b16 %v4819
    %v5184 = vunpack.c.l.b16 %v4820
    %v5185 = vunpack.c.h.b16 %v4820
    %v5186 = vunpack.c.l.b16 %v4821
    %v5187 = vunpack.c.h.b16 %v4821
    %v5188 = vunpack.c.l.b16 %v4822
    %v5189 = vunpack.c.h.b16 %v4822
    %v5190 = vunpack.c.l.b16 %v4823
    %v5191 = vunpack.c.h.b16 %v4823
    %v5192 = vunpack.c.l.b16 %v4824
    %v5193 = vunpack.c.h.b16 %v4824
    %v5194 = vunpack.c.l.b16 %v4825
    %v5195 = vunpack.c.h.b16 %v4825
    %v5196 = vunpack.c.l.b16 %v4826
    %v5197 = vunpack.c.h.b16 %v4826
    %v5198 = vunpack.c.l.b16 %v4827
    %v5199 = vunpack.c.h.b16 %v4827
    %v5200 = vunpack.c.l.b16 %v4828
    %v5201 = vunpack.c.h.b16 %v4828
    %v5202 = vunpack.c.l.b16 %v4829
    %v5203 = vunpack.c.h.b16 %v4829
    %v5204 = vunpack.c.l.b16 %v4830
    %v5205 = vunpack.c.h.b16 %v4830
    %v5206 = vunpack.c.l.b16 %v4831
    %v5207 = vunpack.c.h.b16 %v4831
    %v5208 = vunpack.c.l.b16 %v4832
    %v5209 = vunpack.c.h.b16 %v4832
    %v5210 = vunpack.c.l.b16 %v4833
    %v5211 = vunpack.c.h.b16 %v4833
    %v5212 = vunpack.c.l.b16 %v4834
    %v5213 = vunpack.c.h.b16 %v4834
    %v5214 = vunpack.c.l.b16 %v4835
    %v5215 = vunpack.c.h.b16 %v4835
    %v5216 = vunpack.c.l.b16 %v4836
    %v5217 = vunpack.c.h.b16 %v4836
    %v5218 = vunpack.c.l.b16 %v4837
    %v5219 = vunpack.c.h.b16 %v4837
    %v5220 = vunpack.c.l.b16 %v4838
    %v5221 = vunpack.c.h.b16 %v4838
    %v5222 = vunpack.c.l.b16 %v4839
    %v5223 = vunpack.c.h.b16 %v4839
    %v5224 = vpack.c.b16 %v4972, %v4968
    %v5225 = vpack.c.b16 %v4973, %v4969
    %v5226 = vpack.c.b16 %v4974, %v4970
    %v5227 = vpack.c.b16 %v4975, %v4971
    %v5228 = vpack.c.b16 %v4980, %v4976
    %v5229 = vpack.c.b16 %v4981, %v4977
    %v5230 = vpack.c.b16 %v4982, %v4978
    %v5231 = vpack.c.b16 %v4983, %v4979
    %v5232 = vpack.c.b16 %v4988, %v4984
    %v5233 = vpack.c.b16 %v4989, %v4985
    %v5234 = vpack.c.b16 %v4990, %v4986
    %v5235 = vpack.c.b16 %v4991, %v4987
    %v5236 = vpack.c.b16 %v4996, %v4992
    %v5237 = vpack.c.b16 %v4997, %v4993
    %v5238 = vpack.c.b16 %v4998, %v4994
    %v5239 = vpack.c.b16 %v4999, %v4995
    %v5240 = vpack.c.b16 %v5004, %v5000
    %v5241 = vpack.c.b16 %v5005, %v5001
    %v5242 = vpack.c.b16 %v5006, %v5002
    %v5243 = vpack.c.b16 %v5007, %v5003
    %v5244 = vpack.c.b16 %v5012, %v5008
    %v5245 = vpack.c.b16 %v5013, %v5009
    %v5246 = vpack.c.b16 %v5014, %v5010
    %v5247 = vpack.c.b16 %v5015, %v5011
    %v5248 = vpack.c.b16 %v5020, %v5016
    %v5249 = vpack.c.b16 %v5021, %v5017
    %v5250 = vpack.c.b16 %v5022, %v5018
    %v5251 = vpack.c.b16 %v5023, %v5019
    %v5252 = vpack.c.b16 %v5028, %v5024
    %v5253 = vpack.c.b16 %v5029, %v5025
    %v5254 = vpack.c.b16 %v5030, %v5026
    %v5255 = vpack.c.b16 %v5031, %v5027
    %v5256 = vpack.c.b16 %v5036, %v5032
    %v5257 = vpack.c.b16 %v5037, %v5033
    %v5258 = vpack.c.b16 %v5038, %v5034
    %v5259 = vpack.c.b16 %v5039, %v5035
    %v5260 = vpack.c.b16 %v5044, %v5040
    %v5261 = vpack.c.b16 %v5045, %v5041
    %v5262 = vpack.c.b16 %v5046, %v5042
    %v5263 = vpack.c.b16 %v5047, %v5043
    %v5264 = vpack.c.b16 %v5052, %v5048
    %v5265 = vpack.c.b16 %v5053, %v5049
    %v5266 = vpack.c.b16 %v5054, %v5050
    %v5267 = vpack.c.b16 %v5055, %v5051
    %v5268 = vpack.c.b16 %v5060, %v5056
    %v5269 = vpack.c.b16 %v5061, %v5057
    %v5270 = vpack.c.b16 %v5062, %v5058
    %v5271 = vpack.c.b16 %v5063, %v5059
    %v5272 = vpack.c.b16 %v5068, %v5064
    %v5273 = vpack.c.b16 %v5069, %v5065
    %v5274 = vpack.c.b16 %v5070, %v5066
    %v5275 = vpack.c.b16 %v5071, %v5067
    %v5276 = vpack.c.b16 %v5076, %v5072
    %v5277 = vpack.c.b16 %v5077, %v5073
    %v5278 = vpack.c.b16 %v5078, %v5074
    %v5279 = vpack.c.b16 %v5079, %v5075
    %v5280 = vpack.c.b16 %v5084, %v5080
    %v5281 = vpack.c.b16 %v5085, %v5081
    %v5282 = vpack.c.b16 %v5086, %v5082
    %v5283 = vpack.c.b16 %v5087, %v5083
    %v5284 = vpack.c.b16 %v5092, %v5088
    %v5285 = vpack.c.b16 %v5093, %v5089
    %v5286 = vpack.c.b16 %v5094, %v5090
    %v5287 = vpack.c.b16 %v5095, %v5091
    %v5288 = vpack.c.b16 %v5100, %v5096
    %v5289 = vpack.c.b16 %v5101, %v5097
    %v5290 = vpack.c.b16 %v5102, %v5098
    %v5291 = vpack.c.b16 %v5103, %v5099
    %v5292 = vpack.c.b16 %v5108, %v5104
    %v5293 = vpack.c.b16 %v5109, %v5105
    %v5294 = vpack.c.b16 %v5110, %v5106
    %v5295 = vpack.c.b16 %v5111, %v5107
    %v5296 = vpack.c.b16 %v5116, %v5112
    %v5297 = vpack.c.b16 %v5117, %v5113
    %v5298 = vpack.c.b16 %v5118, %v5114
    %v5299 = vpack.c.b16 %v5119, %v5115
    %v5300 = vpack.c.b16 %v5124, %v5120
    %v5301 = vpack.c.b16 %v5125, %v5121
    %v5302 = vpack.c.b16 %v5126, %v5122
    %v5303 = vpack.c.b16 %v5127, %v5123
    %v5304 = vpack.c.b16 %v5132, %v5128
    %v5305 = vpack.c.b16 %v5133, %v5129
    %v5306 = vpack.c.b16 %v5134, %v5130
    %v5307 = vpack.c.b16 %v5135, %v5131
    %v5308 = vpack.c.b16 %v5140, %v5136
    %v5309 = vpack.c.b16 %v5141, %v5137
    %v5310 = vpack.c.b16 %v5142, %v5138
    %v5311 = vpack.c.b16 %v5143, %v5139
    %v5312 = vpack.c.b16 %v5148, %v5144
    %v5313 = vpack.c.b16 %v5149, %v5145
    %v5314 = vpack.c.b16 %v5150, %v5146
    %v5315 = vpack.c.b16 %v5151, %v5147
    %v5316 = vpack.c.b16 %v5156, %v5152
    %v5317 = vpack.c.b16 %v5157, %v5153
    %v5318 = vpack.c.b16 %v5158, %v5154
    %v5319 = vpack.c.b16 %v5159, %v5155
    %v5320 = vpack.c.b16 %v5164, %v5160
    %v5321 = vpack.c.b16 %v5165, %v5161
    %v5322 = vpack.c.b16 %v5166, %v5162
    %v5323 = vpack.c.b16 %v5167, %v5163
    %v5324 = vpack.c.b16 %v5172, %v5168
    %v5325 = vpack.c.b16 %v5173, %v5169
    %v5326 = vpack.c.b16 %v5174, %v5170
    %v5327 = vpack.c.b16 %v5175, %v5171
    %v5328 = vpack.c.b16 %v5180, %v5176
    %v5329 = vpack.c.b16 %v5181, %v5177
    %v5330 = vpack.c.b16 %v5182, %v5178
    %v5331 = vpack.c.b16 %v5183, %v5179
    %v5332 = vpack.c.b16 %v5188, %v5184
    %v5333 = vpack.c.b16 %v5189, %v5185
    %v5334 = vpack.c.b16 %v5190, %v5186
    %v5335 = vpack.c.b16 %v5191, %v5187
    %v5336 = vpack.c.b16 %v5196, %v5192
    %v5337 = vpack.c.b16 %v5197, %v5193
    %v5338 = vpack.c.b16 %v5198, %v5194
    %v5339 = vpack.c.b16 %v5199, %v5195
    %v5340 = vpack.c.b16 %v5204, %v5200
    %v5341 = vpack.c.b16 %v5205, %v5201
    %v5342 = vpack.c.b16 %v5206, %v5202
    %v5343 = vpack.c.b16 %v5207, %v5203
    %v5344 = vpack.c.b16 %v5212, %v5208
    %v5345 = vpack.c.b16 %v5213, %v5209
    %v5346 = vpack.c.b16 %v5214, %v5210
    %v5347 = vpack.c.b16 %v5215, %v5211
    %v5348 = vpack.c.b16 %v5220, %v5216
    %v5349 = vpack.c.b16 %v5221, %v5217
    %v5350 = vpack.c.b16 %v5222, %v5218
    %v5351 = vpack.c.b16 %v5223, %v5219
    %5480 = vmatprep.subr.bf16.mxu0 %v5225
    %5481 = vmatpush1.bf16.msra.mxu0 %v5224
    %5482 = vmatprep.subr.bf16.mxu0 %v5229
    %5483 = vmatpush1.bf16.msra.mxu0 %v5228
    %5484 = vmatprep.subr.bf16.mxu0 %v5233
    %5485 = vmatpush1.bf16.msra.mxu0 %v5232
    %5486 = vmatprep.subr.bf16.mxu0 %v5237
    %5487 = vmatpush1.bf16.msra.mxu0 %v5236
    %5488 = vmatprep.subr.bf16.mxu0 %v5241
    %5489 = vmatpush1.bf16.msra.mxu0 %v5240
    %5490 = vmatprep.subr.bf16.mxu0 %v5245
    %5491 = vmatpush1.bf16.msra.mxu0 %v5244
    %5492 = vmatprep.subr.bf16.mxu0 %v5249
    %5493 = vmatpush1.bf16.msra.mxu0 %v5248
    %5494 = vmatprep.subr.bf16.mxu0 %v5253
    %5495 = vmatpush1.bf16.msra.mxu0 %v5252
    %5496 = vmatprep.subr.bf16.mxu0 %v5257
    %5497 = vmatpush1.bf16.msra.mxu0 %v5256
    %5498 = vmatprep.subr.bf16.mxu0 %v5261
    %5499 = vmatpush1.bf16.msra.mxu0 %v5260
    %5500 = vmatprep.subr.bf16.mxu0 %v5265
    %5501 = vmatpush1.bf16.msra.mxu0 %v5264
    %5502 = vmatprep.subr.bf16.mxu0 %v5269
    %5503 = vmatpush1.bf16.msra.mxu0 %v5268
    %5504 = vmatprep.subr.bf16.mxu0 %v5273
    %5505 = vmatpush1.bf16.msra.mxu0 %v5272
    %5506 = vmatprep.subr.bf16.mxu0 %v5277
    %5507 = vmatpush1.bf16.msra.mxu0 %v5276
    %5508 = vmatprep.subr.bf16.mxu0 %v5281
    %5509 = vmatpush1.bf16.msra.mxu0 %v5280
    %5510 = vmatprep.subr.bf16.mxu0 %v5285
    %5511 = vmatpush1.bf16.msra.mxu0 %v5284
    %5512 = vmatprep.mubr.bf16.mxu0 %v4709
    %5513 = vmatmul.mubr.bf16.gmra.mrb[0].mxu0 %v4708
    %v5514 = vpop.f32.mrb[0].mxu0
    %v5515 = vadd.f32 0.0, %v5514
    %v5516 = vpop.f32.mrb[0].mxu0
    %v5517 = vadd.f32 0.0, %v5516
    %v5518 = vpop.f32.mrb[0].mxu0
    %v5519 = vpop.f32.mrb[0].mxu0
    %5520 = vdwg.mxu0
    %5521 = vmatprep.subr.bf16.mxu0 %v5289
    %5522 = vmatpush1.bf16.msra.mxu0 %v5288
    %5523 = vmatprep.subr.bf16.mxu0 %v5293
    %5524 = vmatpush1.bf16.msra.mxu0 %v5292
    %5525 = vmatprep.subr.bf16.mxu0 %v5297
    %5526 = vmatpush1.bf16.msra.mxu0 %v5296
    %5527 = vmatprep.subr.bf16.mxu0 %v5301
    %5528 = vmatpush1.bf16.msra.mxu0 %v5300
    %5529 = vmatprep.subr.bf16.mxu0 %v5305
    %5530 = vmatpush1.bf16.msra.mxu0 %v5304
    %5531 = vmatprep.subr.bf16.mxu0 %v5309
    %5532 = vmatpush1.bf16.msra.mxu0 %v5308
    %5533 = vmatprep.subr.bf16.mxu0 %v5313
    %5534 = vmatpush1.bf16.msra.mxu0 %v5312
    %5535 = vmatprep.subr.bf16.mxu0 %v5317
    %5536 = vmatpush1.bf16.msra.mxu0 %v5316
    %5537 = vmatprep.subr.bf16.mxu0 %v5321
    %5538 = vmatpush1.bf16.msra.mxu0 %v5320
    %5539 = vmatprep.subr.bf16.mxu0 %v5325
    %5540 = vmatpush1.bf16.msra.mxu0 %v5324
    %5541 = vmatprep.subr.bf16.mxu0 %v5329
    %5542 = vmatpush1.bf16.msra.mxu0 %v5328
    %5543 = vmatprep.subr.bf16.mxu0 %v5333
    %5544 = vmatpush1.bf16.msra.mxu0 %v5332
    %5545 = vmatprep.subr.bf16.mxu0 %v5337
    %5546 = vmatpush1.bf16.msra.mxu0 %v5336
    %5547 = vmatprep.subr.bf16.mxu0 %v5341
    %5548 = vmatpush1.bf16.msra.mxu0 %v5340
    %5549 = vmatprep.subr.bf16.mxu0 %v5345
    %5550 = vmatpush1.bf16.msra.mxu0 %v5344
    %5551 = vmatprep.subr.bf16.mxu0 %v5349
    %5552 = vmatpush1.bf16.msra.mxu0 %v5348
    %5553 = vmatprep.mubr.bf16.mxu0 %v4711
    %5554 = vmatmul.mubr.bf16.gmra.mrb[0].mxu0 %v4710
    %v5555 = vpop.f32.mrb[0].mxu0
    %v5556 = vadd.f32 %v5515, %v5555
    %v5557 = vpop.f32.mrb[0].mxu0
    %v5558 = vadd.f32 %v5517, %v5557
    %v5559 = vpop.f32.mrb[0].mxu0
    %v5560 = vpop.f32.mrb[0].mxu0
    %5561 = vdwg.mxu0
    %5562 = vmatprep.subr.bf16.mxu0 %v5227
    %5563 = vmatpush1.bf16.msra.mxu0 %v5226
    %5564 = vmatprep.subr.bf16.mxu0 %v5231
    %5565 = vmatpush1.bf16.msra.mxu0 %v5230
    %5566 = vmatprep.subr.bf16.mxu0 %v5235
    %5567 = vmatpush1.bf16.msra.mxu0 %v5234
    %5568 = vmatprep.subr.bf16.mxu0 %v5239
    %5569 = vmatpush1.bf16.msra.mxu0 %v5238
    %5570 = vmatprep.subr.bf16.mxu0 %v5243
    %5571 = vmatpush1.bf16.msra.mxu0 %v5242
    %5572 = vmatprep.subr.bf16.mxu0 %v5247
    %5573 = vmatpush1.bf16.msra.mxu0 %v5246
    %5574 = vmatprep.subr.bf16.mxu0 %v5251
    %5575 = vmatpush1.bf16.msra.mxu0 %v5250
    %5576 = vmatprep.subr.bf16.mxu0 %v5255
    %5577 = vmatpush1.bf16.msra.mxu0 %v5254
    %5578 = vmatprep.subr.bf16.mxu0 %v5259
    %5579 = vmatpush1.bf16.msra.mxu0 %v5258
    %5580 = vmatprep.subr.bf16.mxu0 %v5263
    %5581 = vmatpush1.bf16.msra.mxu0 %v5262
    %5582 = vmatprep.subr.bf16.mxu0 %v5267
    %5583 = vmatpush1.bf16.msra.mxu0 %v5266
    %5584 = vmatprep.subr.bf16.mxu0 %v5271
    %5585 = vmatpush1.bf16.msra.mxu0 %v5270
    %5586 = vmatprep.subr.bf16.mxu0 %v5275
    %5587 = vmatpush1.bf16.msra.mxu0 %v5274
    %5588 = vmatprep.subr.bf16.mxu0 %v5279
    %5589 = vmatpush1.bf16.msra.mxu0 %v5278
    %5590 = vmatprep.subr.bf16.mxu0 %v5283
    %5591 = vmatpush1.bf16.msra.mxu0 %v5282
    %5592 = vmatprep.subr.bf16.mxu0 %v5287
    %5593 = vmatpush1.bf16.msra.mxu0 %v5286
    %5594 = vmatprep.mubr.bf16.mxu0 %v4709
    %5595 = vmatmul.mubr.bf16.gmra.mrb[0].mxu0 %v4708
    %v5596 = vpop.f32.mrb[0].mxu0
    %v5597 = vadd.f32 0.0, %v5596
    %v5598 = vpop.f32.mrb[0].mxu0
    %v5599 = vadd.f32 0.0, %v5598
    %v5600 = vpop.f32.mrb[0].mxu0
    %v5601 = vpop.f32.mrb[0].mxu0
    %5602 = vdwg.mxu0
    %5603 = vmatprep.subr.bf16.mxu0 %v5291
    %5604 = vmatpush1.bf16.msra.mxu0 %v5290
    %5605 = vmatprep.subr.bf16.mxu0 %v5295
    %5606 = vmatpush1.bf16.msra.mxu0 %v5294
    %5607 = vmatprep.subr.bf16.mxu0 %v5299
    %5608 = vmatpush1.bf16.msra.mxu0 %v5298
    %5609 = vmatprep.subr.bf16.mxu0 %v5303
    %5610 = vmatpush1.bf16.msra.mxu0 %v5302
    %5611 = vmatprep.subr.bf16.mxu0 %v5307
    %5612 = vmatpush1.bf16.msra.mxu0 %v5306
    %5613 = vmatprep.subr.bf16.mxu0 %v5311
    %5614 = vmatpush1.bf16.msra.mxu0 %v5310
    %5615 = vmatprep.subr.bf16.mxu0 %v5315
    %5616 = vmatpush1.bf16.msra.mxu0 %v5314
    %5617 = vmatprep.subr.bf16.mxu0 %v5319
    %5618 = vmatpush1.bf16.msra.mxu0 %v5318
    %5619 = vmatprep.subr.bf16.mxu0 %v5323
    %5620 = vmatpush1.bf16.msra.mxu0 %v5322
    %5621 = vmatprep.subr.bf16.mxu0 %v5327
    %5622 = vmatpush1.bf16.msra.mxu0 %v5326
    %5623 = vmatprep.subr.bf16.mxu0 %v5331
    %5624 = vmatpush1.bf16.msra.mxu0 %v5330
    %5625 = vmatprep.subr.bf16.mxu0 %v5335
    %5626 = vmatpush1.bf16.msra.mxu0 %v5334
    %5627 = vmatprep.subr.bf16.mxu0 %v5339
    %5628 = vmatpush1.bf16.msra.mxu0 %v5338
    %5629 = vmatprep.subr.bf16.mxu0 %v5343
    %5630 = vmatpush1.bf16.msra.mxu0 %v5342
    %5631 = vmatprep.subr.bf16.mxu0 %v5347
    %5632 = vmatpush1.bf16.msra.mxu0 %v5346
    %5633 = vmatprep.subr.bf16.mxu0 %v5351
    %5634 = vmatpush1.bf16.msra.mxu0 %v5350
    %5635 = vmatprep.mubr.bf16.mxu0 %v4711
    %5636 = vmatmul.mubr.bf16.gmra.mrb[0].mxu0 %v4710
    %v5637 = vpop.f32.mrb[0].mxu0
    %v5638 = vadd.f32 %v5597, %v5637
    %v5639 = vpop.f32.mrb[0].mxu0
    %v5640 = vadd.f32 %v5599, %v5639
    %v5641 = vpop.f32.mrb[0].mxu0
    %v5642 = vpop.f32.mrb[0].mxu0
    %5643 = vdwg.mxu0
    %v5644 = vadd.f32 %v4364, %v5556
    %v5645 = vadd.f32 %v4365, %v5558
    %v5646 = vadd.f32 %v4366, %v5638
    %v5647 = vadd.f32 %v4367, %v5640
    %v5648 = vmax.f32 %v5644, 0.0
    %v5649 = vmax.f32 %v5645, 0.0
    %v5650 = vmax.f32 %v5646, 0.0
    %v5651 = vmax.f32 %v5647, 0.0
    %v5652 = vpack.c.bf16 %v5648, %v5648
    %v5653 = vpack.c.bf16 %v5649, %v5649
    %v5654 = vpack.c.bf16 %v5650, %v5650
    %v5655 = vpack.c.bf16 %v5651, %v5651
    %v5656 = vld [vmem:[#allocation10] sm:$0xff]
    %v5657 = vld [vmem:[#allocation10 + $0x8] sm:$0xff]
    %v5658 = vld [vmem:[#allocation10 + $0x10] sm:$0xff]
    %v5659 = vld [vmem:[#allocation10 + $0x18] sm:$0xff]
    %v5660 = vld [vmem:[#allocation10 + $0x20] sm:$0xff]
    %v5661 = vld [vmem:[#allocation10 + $0x28] sm:$0xff]
    %v5662 = vld [vmem:[#allocation10 + $0x30] sm:$0xff]
    %v5663 = vld [vmem:[#allocation10 + $0x38] sm:$0xff]
    %v5664 = vld [vmem:[#allocation10 + $0x40] sm:$0xff]
    %v5665 = vld [vmem:[#allocation10 + $0x48] sm:$0xff]
    %v5666 = vld [vmem:[#allocation10 + $0x50] sm:$0xff]
    %v5667 = vld [vmem:[#allocation10 + $0x58] sm:$0xff]
    %v5668 = vld [vmem:[#allocation10 + $0x60] sm:$0xff]
    %v5669 = vld [vmem:[#allocation10 + $0x68] sm:$0xff]
    %v5670 = vld [vmem:[#allocation10 + $0x70] sm:$0xff]
    %v5671 = vld [vmem:[#allocation10 + $0x78] sm:$0xff]
    %v5672 = vld [vmem:[#allocation10 + $0x80] sm:$0xff]
    %v5673 = vld [vmem:[#allocation10 + $0x88] sm:$0xff]
    %v5674 = vld [vmem:[#allocation10 + $0x90] sm:$0xff]
    %v5675 = vld [vmem:[#allocation10 + $0x98] sm:$0xff]
    %v5676 = vld [vmem:[#allocation10 + $0xa0] sm:$0xff]
    %v5677 = vld [vmem:[#allocation10 + $0xa8] sm:$0xff]
    %v5678 = vld [vmem:[#allocation10 + $0xb0] sm:$0xff]
    %v5679 = vld [vmem:[#allocation10 + $0xb8] sm:$0xff]
    %v5680 = vld [vmem:[#allocation10 + $0xc0] sm:$0xff]
    %v5681 = vld [vmem:[#allocation10 + $0xc8] sm:$0xff]
    %v5682 = vld [vmem:[#allocation10 + $0xd0] sm:$0xff]
    %v5683 = vld [vmem:[#allocation10 + $0xd8] sm:$0xff]
    %v5684 = vld [vmem:[#allocation10 + $0xe0] sm:$0xff]
    %v5685 = vld [vmem:[#allocation10 + $0xe8] sm:$0xff]
    %v5686 = vld [vmem:[#allocation10 + $0xf0] sm:$0xff]
    %v5687 = vld [vmem:[#allocation10 + $0xf8] sm:$0xff]
    %v5688 = vld [vmem:[#allocation10 + $0x100] sm:$0xff]
    %v5689 = vld [vmem:[#allocation10 + $0x108] sm:$0xff]
    %v5690 = vld [vmem:[#allocation10 + $0x110] sm:$0xff]
    %v5691 = vld [vmem:[#allocation10 + $0x118] sm:$0xff]
    %v5692 = vld [vmem:[#allocation10 + $0x120] sm:$0xff]
    %v5693 = vld [vmem:[#allocation10 + $0x128] sm:$0xff]
    %v5694 = vld [vmem:[#allocation10 + $0x130] sm:$0xff]
    %v5695 = vld [vmem:[#allocation10 + $0x138] sm:$0xff]
    %v5696 = vld [vmem:[#allocation10 + $0x140] sm:$0xff]
    %v5697 = vld [vmem:[#allocation10 + $0x148] sm:$0xff]
    %v5698 = vld [vmem:[#allocation10 + $0x150] sm:$0xff]
    %v5699 = vld [vmem:[#allocation10 + $0x158] sm:$0xff]
    %v5700 = vld [vmem:[#allocation10 + $0x160] sm:$0xff]
    %v5701 = vld [vmem:[#allocation10 + $0x168] sm:$0xff]
    %v5702 = vld [vmem:[#allocation10 + $0x170] sm:$0xff]
    %v5703 = vld [vmem:[#allocation10 + $0x178] sm:$0xff]
    %v5704 = vld [vmem:[#allocation10 + $0x180] sm:$0xff]
    %v5705 = vld [vmem:[#allocation10 + $0x188] sm:$0xff]
    %v5706 = vld [vmem:[#allocation10 + $0x190] sm:$0xff]
    %v5707 = vld [vmem:[#allocation10 + $0x198] sm:$0xff]
    %v5708 = vld [vmem:[#allocation10 + $0x1a0] sm:$0xff]
    %v5709 = vld [vmem:[#allocation10 + $0x1a8] sm:$0xff]
    %v5710 = vld [vmem:[#allocation10 + $0x1b0] sm:$0xff]
    %v5711 = vld [vmem:[#allocation10 + $0x1b8] sm:$0xff]
    %v5712 = vld [vmem:[#allocation10 + $0x1c0] sm:$0xff]
    %v5713 = vld [vmem:[#allocation10 + $0x1c8] sm:$0xff]
    %v5714 = vld [vmem:[#allocation10 + $0x1d0] sm:$0xff]
    %v5715 = vld [vmem:[#allocation10 + $0x1d8] sm:$0xff]
    %v5716 = vld [vmem:[#allocation10 + $0x1e0] sm:$0xff]
    %v5717 = vld [vmem:[#allocation10 + $0x1e8] sm:$0xff]
    %v5718 = vld [vmem:[#allocation10 + $0x1f0] sm:$0xff]
    %v5719 = vld [vmem:[#allocation10 + $0x1f8] sm:$0xff]
    %v5720 = vld [vmem:[%s9] sm:$0x3]
    %v5722 = vlaneseq
    %v5723 = vshrl.u32 %v5722, 7
    %v5724 = vsub.s32 0, %v5723
    %v5725 = vrot.slane %v5720, %v5724
    %v5726 = vlaneseq
    %v5727 = vshrl.u32 %v5726, 7
    %v5728 = vsub.s32 1, %v5727
    %v5729 = vrot.slane %v5720, %v5728
    %v5796 = vunpack.c.l.b16 %v5656
    %v5797 = vunpack.c.h.b16 %v5656
    %v5798 = vunpack.c.l.b16 %v5657
    %v5799 = vunpack.c.h.b16 %v5657
    %v5800 = vunpack.c.l.b16 %v5658
    %v5801 = vunpack.c.h.b16 %v5658
    %v5802 = vunpack.c.l.b16 %v5659
    %v5803 = vunpack.c.h.b16 %v5659
    %v5804 = vunpack.c.l.b16 %v5660
    %v5805 = vunpack.c.h.b16 %v5660
    %v5806 = vunpack.c.l.b16 %v5661
    %v5807 = vunpack.c.h.b16 %v5661
    %v5808 = vunpack.c.l.b16 %v5662
    %v5809 = vunpack.c.h.b16 %v5662
    %v5810 = vunpack.c.l.b16 %v5663
    %v5811 = vunpack.c.h.b16 %v5663
    %v5812 = vunpack.c.l.b16 %v5664
    %v5813 = vunpack.c.h.b16 %v5664
    %v5814 = vunpack.c.l.b16 %v5665
    %v5815 = vunpack.c.h.b16 %v5665
    %v5816 = vunpack.c.l.b16 %v5666
    %v5817 = vunpack.c.h.b16 %v5666
    %v5818 = vunpack.c.l.b16 %v5667
    %v5819 = vunpack.c.h.b16 %v5667
    %v5820 = vunpack.c.l.b16 %v5668
    %v5821 = vunpack.c.h.b16 %v5668
    %v5822 = vunpack.c.l.b16 %v5669
    %v5823 = vunpack.c.h.b16 %v5669
    %v5824 = vunpack.c.l.b16 %v5670
    %v5825 = vunpack.c.h.b16 %v5670
    %v5826 = vunpack.c.l.b16 %v5671
    %v5827 = vunpack.c.h.b16 %v5671
    %v5828 = vunpack.c.l.b16 %v5672
    %v5829 = vunpack.c.h.b16 %v5672
    %v5830 = vunpack.c.l.b16 %v5673
    %v5831 = vunpack.c.h.b16 %v5673
    %v5832 = vunpack.c.l.b16 %v5674
    %v5833 = vunpack.c.h.b16 %v5674
    %v5834 = vunpack.c.l.b16 %v5675
    %v5835 = vunpack.c.h.b16 %v5675
    %v5836 = vunpack.c.l.b16 %v5676
    %v5837 = vunpack.c.h.b16 %v5676
    %v5838 = vunpack.c.l.b16 %v5677
    %v5839 = vunpack.c.h.b16 %v5677
    %v5840 = vunpack.c.l.b16 %v5678
    %v5841 = vunpack.c.h.b16 %v5678
    %v5842 = vunpack.c.l.b16 %v5679
    %v5843 = vunpack.c.h.b16 %v5679
    %v5844 = vunpack.c.l.b16 %v5680
    %v5845 = vunpack.c.h.b16 %v5680
    %v5846 = vunpack.c.l.b16 %v5681
    %v5847 = vunpack.c.h.b16 %v5681
    %v5848 = vunpack.c.l.b16 %v5682
    %v5849 = vunpack.c.h.b16 %v5682
    %v5850 = vunpack.c.l.b16 %v5683
    %v5851 = vunpack.c.h.b16 %v5683
    %v5852 = vunpack.c.l.b16 %v5684
    %v5853 = vunpack.c.h.b16 %v5684
    %v5854 = vunpack.c.l.b16 %v5685
    %v5855 = vunpack.c.h.b16 %v5685
    %v5856 = vunpack.c.l.b16 %v5686
    %v5857 = vunpack.c.h.b16 %v5686
    %v5858 = vunpack.c.l.b16 %v5687
    %v5859 = vunpack.c.h.b16 %v5687
    %v5860 = vunpack.c.l.b16 %v5688
    %v5861 = vunpack.c.h.b16 %v5688
    %v5862 = vunpack.c.l.b16 %v5689
    %v5863 = vunpack.c.h.b16 %v5689
    %v5864 = vunpack.c.l.b16 %v5690
    %v5865 = vunpack.c.h.b16 %v5690
    %v5866 = vunpack.c.l.b16 %v5691
    %v5867 = vunpack.c.h.b16 %v5691
    %v5868 = vunpack.c.l.b16 %v5692
    %v5869 = vunpack.c.h.b16 %v5692
    %v5870 = vunpack.c.l.b16 %v5693
    %v5871 = vunpack.c.h.b16 %v5693
    %v5872 = vunpack.c.l.b16 %v5694
    %v5873 = vunpack.c.h.b16 %v5694
    %v5874 = vunpack.c.l.b16 %v5695
    %v5875 = vunpack.c.h.b16 %v5695
    %v5876 = vunpack.c.l.b16 %v5696
    %v5877 = vunpack.c.h.b16 %v5696
    %v5878 = vunpack.c.l.b16 %v5697
    %v5879 = vunpack.c.h.b16 %v5697
    %v5880 = vunpack.c.l.b16 %v5698
    %v5881 = vunpack.c.h.b16 %v5698
    %v5882 = vunpack.c.l.b16 %v5699
    %v5883 = vunpack.c.h.b16 %v5699
    %v5884 = vunpack.c.l.b16 %v5700
    %v5885 = vunpack.c.h.b16 %v5700
    %v5886 = vunpack.c.l.b16 %v5701
    %v5887 = vunpack.c.h.b16 %v5701
    %v5888 = vunpack.c.l.b16 %v5702
    %v5889 = vunpack.c.h.b16 %v5702
    %v5890 = vunpack.c.l.b16 %v5703
    %v5891 = vunpack.c.h.b16 %v5703
    %v5892 = vunpack.c.l.b16 %v5704
    %v5893 = vunpack.c.h.b16 %v5704
    %v5894 = vunpack.c.l.b16 %v5705
    %v5895 = vunpack.c.h.b16 %v5705
    %v5896 = vunpack.c.l.b16 %v5706
    %v5897 = vunpack.c.h.b16 %v5706
    %v5898 = vunpack.c.l.b16 %v5707
    %v5899 = vunpack.c.h.b16 %v5707
    %v5900 = vunpack.c.l.b16 %v5708
    %v5901 = vunpack.c.h.b16 %v5708
    %v5902 = vunpack.c.l.b16 %v5709
    %v5903 = vunpack.c.h.b16 %v5709
    %v5904 = vunpack.c.l.b16 %v5710
    %v5905 = vunpack.c.h.b16 %v5710
    %v5906 = vunpack.c.l.b16 %v5711
    %v5907 = vunpack.c.h.b16 %v5711
    %v5908 = vunpack.c.l.b16 %v5712
    %v5909 = vunpack.c.h.b16 %v5712
    %v5910 = vunpack.c.l.b16 %v5713
    %v5911 = vunpack.c.h.b16 %v5713
    %v5912 = vunpack.c.l.b16 %v5714
    %v5913 = vunpack.c.h.b16 %v5714
    %v5914 = vunpack.c.l.b16 %v5715
    %v5915 = vunpack.c.h.b16 %v5715
    %v5916 = vunpack.c.l.b16 %v5716
    %v5917 = vunpack.c.h.b16 %v5716
    %v5918 = vunpack.c.l.b16 %v5717
    %v5919 = vunpack.c.h.b16 %v5717
    %v5920 = vunpack.c.l.b16 %v5718
    %v5921 = vunpack.c.h.b16 %v5718
    %v5922 = vunpack.c.l.b16 %v5719
    %v5923 = vunpack.c.h.b16 %v5719
    %v5924 = vpack.c.b16 %v5798, %v5796
    %v5925 = vpack.c.b16 %v5799, %v5797
    %v5926 = vpack.c.b16 %v5802, %v5800
    %v5927 = vpack.c.b16 %v5803, %v5801
    %v5928 = vpack.c.b16 %v5806, %v5804
    %v5929 = vpack.c.b16 %v5807, %v5805
    %v5930 = vpack.c.b16 %v5810, %v5808
    %v5931 = vpack.c.b16 %v5811, %v5809
    %v5932 = vpack.c.b16 %v5814, %v5812
    %v5933 = vpack.c.b16 %v5815, %v5813
    %v5934 = vpack.c.b16 %v5818, %v5816
    %v5935 = vpack.c.b16 %v5819, %v5817
    %v5936 = vpack.c.b16 %v5822, %v5820
    %v5937 = vpack.c.b16 %v5823, %v5821
    %v5938 = vpack.c.b16 %v5826, %v5824
    %v5939 = vpack.c.b16 %v5827, %v5825
    %v5940 = vpack.c.b16 %v5830, %v5828
    %v5941 = vpack.c.b16 %v5831, %v5829
    %v5942 = vpack.c.b16 %v5834, %v5832
    %v5943 = vpack.c.b16 %v5835, %v5833
    %v5944 = vpack.c.b16 %v5838, %v5836
    %v5945 = vpack.c.b16 %v5839, %v5837
    %v5946 = vpack.c.b16 %v5842, %v5840
    %v5947 = vpack.c.b16 %v5843, %v5841
    %v5948 = vpack.c.b16 %v5846, %v5844
    %v5949 = vpack.c.b16 %v5847, %v5845
    %v5950 = vpack.c.b16 %v5850, %v5848
    %v5951 = vpack.c.b16 %v5851, %v5849
    %v5952 = vpack.c.b16 %v5854, %v5852
    %v5953 = vpack.c.b16 %v5855, %v5853
    %v5954 = vpack.c.b16 %v5858, %v5856
    %v5955 = vpack.c.b16 %v5859, %v5857
    %v5956 = vpack.c.b16 %v5862, %v5860
    %v5957 = vpack.c.b16 %v5863, %v5861
    %v5958 = vpack.c.b16 %v5866, %v5864
    %v5959 = vpack.c.b16 %v5867, %v5865
    %v5960 = vpack.c.b16 %v5870, %v5868
    %v5961 = vpack.c.b16 %v5871, %v5869
    %v5962 = vpack.c.b16 %v5874, %v5872
    %v5963 = vpack.c.b16 %v5875, %v5873
    %v5964 = vpack.c.b16 %v5878, %v5876
    %v5965 = vpack.c.b16 %v5879, %v5877
    %v5966 = vpack.c.b16 %v5882, %v5880
    %v5967 = vpack.c.b16 %v5883, %v5881
    %v5968 = vpack.c.b16 %v5886, %v5884
    %v5969 = vpack.c.b16 %v5887, %v5885
    %v5970 = vpack.c.b16 %v5890, %v5888
    %v5971 = vpack.c.b16 %v5891, %v5889
    %v5972 = vpack.c.b16 %v5894, %v5892
    %v5973 = vpack.c.b16 %v5895, %v5893
    %v5974 = vpack.c.b16 %v5898, %v5896
    %v5975 = vpack.c.b16 %v5899, %v5897
    %v5976 = vpack.c.b16 %v5902, %v5900
    %v5977 = vpack.c.b16 %v5903, %v5901
    %v5978 = vpack.c.b16 %v5906, %v5904
    %v5979 = vpack.c.b16 %v5907, %v5905
    %v5980 = vpack.c.b16 %v5910, %v5908
    %v5981 = vpack.c.b16 %v5911, %v5909
    %v5982 = vpack.c.b16 %v5914, %v5912
    %v5983 = vpack.c.b16 %v5915, %v5913
    %v5984 = vpack.c.b16 %v5918, %v5916
    %v5985 = vpack.c.b16 %v5919, %v5917
    %v5986 = vpack.c.b16 %v5922, %v5920
    %v5987 = vpack.c.b16 %v5923, %v5921
    %6052 = vmatprep.subr.bf16.mxu0 %v5925
    %6053 = vmatpush1.bf16.msra.mxu0 %v5924
    %6054 = vmatprep.subr.bf16.mxu0 %v5927
    %6055 = vmatpush1.bf16.msra.mxu0 %v5926
    %6056 = vmatprep.subr.bf16.mxu0 %v5929
    %6057 = vmatpush1.bf16.msra.mxu0 %v5928
    %6058 = vmatprep.subr.bf16.mxu0 %v5931
    %6059 = vmatpush1.bf16.msra.mxu0 %v5930
    %6060 = vmatprep.subr.bf16.mxu0 %v5933
    %6061 = vmatpush1.bf16.msra.mxu0 %v5932
    %6062 = vmatprep.subr.bf16.mxu0 %v5935
    %6063 = vmatpush1.bf16.msra.mxu0 %v5934
    %6064 = vmatprep.subr.bf16.mxu0 %v5937
    %6065 = vmatpush1.bf16.msra.mxu0 %v5936
    %6066 = vmatprep.subr.bf16.mxu0 %v5939
    %6067 = vmatpush1.bf16.msra.mxu0 %v5938
    %6068 = vmatprep.subr.bf16.mxu0 %v5941
    %6069 = vmatpush1.bf16.msra.mxu0 %v5940
    %6070 = vmatprep.subr.bf16.mxu0 %v5943
    %6071 = vmatpush1.bf16.msra.mxu0 %v5942
    %6072 = vmatprep.subr.bf16.mxu0 %v5945
    %6073 = vmatpush1.bf16.msra.mxu0 %v5944
    %6074 = vmatprep.subr.bf16.mxu0 %v5947
    %6075 = vmatpush1.bf16.msra.mxu0 %v5946
    %6076 = vmatprep.subr.bf16.mxu0 %v5949
    %6077 = vmatpush1.bf16.msra.mxu0 %v5948
    %6078 = vmatprep.subr.bf16.mxu0 %v5951
    %6079 = vmatpush1.bf16.msra.mxu0 %v5950
    %6080 = vmatprep.subr.bf16.mxu0 %v5953
    %6081 = vmatpush1.bf16.msra.mxu0 %v5952
    %6082 = vmatprep.subr.bf16.mxu0 %v5955
    %6083 = vmatpush1.bf16.msra.mxu0 %v5954
    %6084 = vmatprep.mubr.bf16.mxu0 %v5653
    %6085 = vmatmul.mubr.bf16.gmra.mrb[0].mxu0 %v5652
    %v6086 = vpop.f32.mrb[0].mxu0
    %v6087 = vadd.f32 %v5725, %v6086
    %v6088 = vpop.f32.mrb[0].mxu0
    %v6089 = vadd.f32 %v5729, %v6088
    %v6090 = vpop.f32.mrb[0].mxu0
    %v6091 = vpop.f32.mrb[0].mxu0
    %6092 = vdwg.mxu0
    %6093 = vmatprep.subr.bf16.mxu0 %v5957
    %6094 = vmatpush1.bf16.msra.mxu0 %v5956
    %6095 = vmatprep.subr.bf16.mxu0 %v5959
    %6096 = vmatpush1.bf16.msra.mxu0 %v5958
    %6097 = vmatprep.subr.bf16.mxu0 %v5961
    %6098 = vmatpush1.bf16.msra.mxu0 %v5960
    %6099 = vmatprep.subr.bf16.mxu0 %v5963
    %6100 = vmatpush1.bf16.msra.mxu0 %v5962
    %6101 = vmatprep.subr.bf16.mxu0 %v5965
    %6102 = vmatpush1.bf16.msra.mxu0 %v5964
    %6103 = vmatprep.subr.bf16.mxu0 %v5967
    %6104 = vmatpush1.bf16.msra.mxu0 %v5966
    %6105 = vmatprep.subr.bf16.mxu0 %v5969
    %6106 = vmatpush1.bf16.msra.mxu0 %v5968
    %6107 = vmatprep.subr.bf16.mxu0 %v5971
    %6108 = vmatpush1.bf16.msra.mxu0 %v5970
    %6109 = vmatprep.subr.bf16.mxu0 %v5973
    %6110 = vmatpush1.bf16.msra.mxu0 %v5972
    %6111 = vmatprep.subr.bf16.mxu0 %v5975
    %6112 = vmatpush1.bf16.msra.mxu0 %v5974
    %6113 = vmatprep.subr.bf16.mxu0 %v5977
    %6114 = vmatpush1.bf16.msra.mxu0 %v5976
    %6115 = vmatprep.subr.bf16.mxu0 %v5979
    %6116 = vmatpush1.bf16.msra.mxu0 %v5978
    %6117 = vmatprep.subr.bf16.mxu0 %v5981
    %6118 = vmatpush1.bf16.msra.mxu0 %v5980
    %6119 = vmatprep.subr.bf16.mxu0 %v5983
    %6120 = vmatpush1.bf16.msra.mxu0 %v5982
    %6121 = vmatprep.subr.bf16.mxu0 %v5985
    %6122 = vmatpush1.bf16.msra.mxu0 %v5984
    %6123 = vmatprep.subr.bf16.mxu0 %v5987
    %6124 = vmatpush1.bf16.msra.mxu0 %v5986
    %6125 = vmatprep.mubr.bf16.mxu0 %v5655
    %6126 = vmatmul.mubr.bf16.gmra.mrb[0].mxu0 %v5654
    %v6127 = vpop.f32.mrb[0].mxu0
    %v6128 = vadd.f32 %v6087, %v6127
    %v6129 = vpop.f32.mrb[0].mxu0
    %v6130 = vadd.f32 %v6089, %v6129
    %v6131 = vpop.f32.mrb[0].mxu0
    %v6132 = vpop.f32.mrb[0].mxu0
    %6133 = vdwg.mxu0
    %v6134 = vmax.f32 %v6128, 0.0
    %v6135 = vmax.f32 %v6130, 0.0
    %v6136 = vpack.c.bf16 %v6134, %v6134
    %v6137 = vpack.c.bf16 %v6135, %v6135
    %v6138 = vld [vmem:[#allocation11] sm:$0xf]
    %v6139 = vld [vmem:[#allocation11 + $0x4] sm:$0xf]
    %v6140 = vld [vmem:[#allocation11 + $0x8] sm:$0xf]
    %v6141 = vld [vmem:[#allocation11 + $0xc] sm:$0xf]
    %v6142 = vld [vmem:[#allocation11 + $0x10] sm:$0xf]
    %v6143 = vld [vmem:[#allocation11 + $0x14] sm:$0xf]
    %v6144 = vld [vmem:[#allocation11 + $0x18] sm:$0xf]
    %v6145 = vld [vmem:[#allocation11 + $0x1c] sm:$0xf]
    %v6146 = vld [vmem:[#allocation11 + $0x20] sm:$0xf]
    %v6147 = vld [vmem:[#allocation11 + $0x24] sm:$0xf]
    %v6148 = vld [vmem:[#allocation11 + $0x28] sm:$0xf]
    %v6149 = vld [vmem:[#allocation11 + $0x2c] sm:$0xf]
    %v6150 = vld [vmem:[#allocation11 + $0x30] sm:$0xf]
    %v6151 = vld [vmem:[#allocation11 + $0x34] sm:$0xf]
    %v6152 = vld [vmem:[#allocation11 + $0x38] sm:$0xf]
    %v6153 = vld [vmem:[#allocation11 + $0x3c] sm:$0xf]
    %v6154 = vld [vmem:[#allocation11 + $0x40] sm:$0xf]
    %v6155 = vld [vmem:[#allocation11 + $0x44] sm:$0xf]
    %v6156 = vld [vmem:[#allocation11 + $0x48] sm:$0xf]
    %v6157 = vld [vmem:[#allocation11 + $0x4c] sm:$0xf]
    %v6158 = vld [vmem:[#allocation11 + $0x50] sm:$0xf]
    %v6159 = vld [vmem:[#allocation11 + $0x54] sm:$0xf]
    %v6160 = vld [vmem:[#allocation11 + $0x58] sm:$0xf]
    %v6161 = vld [vmem:[#allocation11 + $0x5c] sm:$0xf]
    %v6162 = vld [vmem:[#allocation11 + $0x60] sm:$0xf]
    %v6163 = vld [vmem:[#allocation11 + $0x64] sm:$0xf]
    %v6164 = vld [vmem:[#allocation11 + $0x68] sm:$0xf]
    %v6165 = vld [vmem:[#allocation11 + $0x6c] sm:$0xf]
    %v6166 = vld [vmem:[#allocation11 + $0x70] sm:$0xf]
    %v6167 = vld [vmem:[#allocation11 + $0x74] sm:$0xf]
    %v6168 = vld [vmem:[#allocation11 + $0x78] sm:$0xf]
    %v6169 = vld [vmem:[#allocation11 + $0x7c] sm:$0xf]
    %v6170 = vld [vmem:[%s11] sm:$0x1]
    %v6172 = vlaneseq
    %v6173 = vshrl.u32 %v6172, 7
    %v6174 = vsub.s32 0, %v6173
    %v6175 = vrot.slane %v6170, %v6174
    %v6209 = vunpack.c.l.b16 %v6138
    %v6210 = vunpack.c.l.b16 %v6139
    %v6211 = vunpack.c.l.b16 %v6140
    %v6212 = vunpack.c.l.b16 %v6141
    %v6213 = vunpack.c.l.b16 %v6142
    %v6214 = vunpack.c.l.b16 %v6143
    %v6215 = vunpack.c.l.b16 %v6144
    %v6216 = vunpack.c.l.b16 %v6145
    %v6217 = vunpack.c.l.b16 %v6146
    %v6218 = vunpack.c.l.b16 %v6147
    %v6219 = vunpack.c.l.b16 %v6148
    %v6220 = vunpack.c.l.b16 %v6149
    %v6221 = vunpack.c.l.b16 %v6150
    %v6222 = vunpack.c.l.b16 %v6151
    %v6223 = vunpack.c.l.b16 %v6152
    %v6224 = vunpack.c.l.b16 %v6153
    %v6225 = vunpack.c.l.b16 %v6154
    %v6226 = vunpack.c.l.b16 %v6155
    %v6227 = vunpack.c.l.b16 %v6156
    %v6228 = vunpack.c.l.b16 %v6157
    %v6229 = vunpack.c.l.b16 %v6158
    %v6230 = vunpack.c.l.b16 %v6159
    %v6231 = vunpack.c.l.b16 %v6160
    %v6232 = vunpack.c.l.b16 %v6161
    %v6233 = vunpack.c.l.b16 %v6162
    %v6234 = vunpack.c.l.b16 %v6163
    %v6235 = vunpack.c.l.b16 %v6164
    %v6236 = vunpack.c.l.b16 %v6165
    %v6237 = vunpack.c.l.b16 %v6166
    %v6238 = vunpack.c.l.b16 %v6167
    %v6239 = vunpack.c.l.b16 %v6168
    %v6240 = vunpack.c.l.b16 %v6169
    %v6241 = vpack.c.b16 %v6210, %v6209
    %v6242 = vpack.c.b16 %v6212, %v6211
    %v6243 = vpack.c.b16 %v6214, %v6213
    %v6244 = vpack.c.b16 %v6216, %v6215
    %v6245 = vpack.c.b16 %v6218, %v6217
    %v6246 = vpack.c.b16 %v6220, %v6219
    %v6247 = vpack.c.b16 %v6222, %v6221
    %v6248 = vpack.c.b16 %v6224, %v6223
    %v6249 = vpack.c.b16 %v6226, %v6225
    %v6250 = vpack.c.b16 %v6228, %v6227
    %v6251 = vpack.c.b16 %v6230, %v6229
    %v6252 = vpack.c.b16 %v6232, %v6231
    %v6253 = vpack.c.b16 %v6234, %v6233
    %v6254 = vpack.c.b16 %v6236, %v6235
    %v6255 = vpack.c.b16 %v6238, %v6237
    %v6256 = vpack.c.b16 %v6240, %v6239
    %6273 = vmatprep.subr.bf16.mxu0 0
    %6274 = vmatpush1.bf16.msra.mxu0 %v6241
    %6275 = vmatprep.subr.bf16.mxu0 0
    %6276 = vmatpush1.bf16.msra.mxu0 %v6242
    %6277 = vmatprep.subr.bf16.mxu0 0
    %6278 = vmatpush1.bf16.msra.mxu0 %v6243
    %6279 = vmatprep.subr.bf16.mxu0 0
    %6280 = vmatpush1.bf16.msra.mxu0 %v6244
    %6281 = vmatprep.subr.bf16.mxu0 0
    %6282 = vmatpush1.bf16.msra.mxu0 %v6245
    %6283 = vmatprep.subr.bf16.mxu0 0
    %6284 = vmatpush1.bf16.msra.mxu0 %v6246
    %6285 = vmatprep.subr.bf16.mxu0 0
    %6286 = vmatpush1.bf16.msra.mxu0 %v6247
    %6287 = vmatprep.subr.bf16.mxu0 0
    %6288 = vmatpush1.bf16.msra.mxu0 %v6248
    %6289 = vmatprep.subr.bf16.mxu0 0
    %6290 = vmatpush1.bf16.msra.mxu0 %v6249
    %6291 = vmatprep.subr.bf16.mxu0 0
    %6292 = vmatpush1.bf16.msra.mxu0 %v6250
    %6293 = vmatprep.subr.bf16.mxu0 0
    %6294 = vmatpush1.bf16.msra.mxu0 %v6251
    %6295 = vmatprep.subr.bf16.mxu0 0
    %6296 = vmatpush1.bf16.msra.mxu0 %v6252
    %6297 = vmatprep.subr.bf16.mxu0 0
    %6298 = vmatpush1.bf16.msra.mxu0 %v6253
    %6299 = vmatprep.subr.bf16.mxu0 0
    %6300 = vmatpush1.bf16.msra.mxu0 %v6254
    %6301 = vmatprep.subr.bf16.mxu0 0
    %6302 = vmatpush1.bf16.msra.mxu0 %v6255
    %6303 = vmatprep.subr.bf16.mxu0 0
    %6304 = vmatpush1.bf16.msra.mxu0 %v6256
    %6305 = vmatprep.mubr.bf16.mxu0 %v6137
    %6306 = vmatmul.mubr.bf16.gmra.mrb[0].mxu0 %v6136
    %v6307 = vpop.f32.mrb[0].mxu0
    %v6308 = vadd.f32 %v6175, %v6307
    %v6309 = vpop.f32.mrb[0].mxu0
    %v6310 = vpop.f32.mrb[0].mxu0
    %v6311 = vpop.f32.mrb[0].mxu0
    %6312 = vdwg.mxu0
    %6313 = vst [vmem:[#allocation13] sm:$0xff] %v6308
    // Predicated region
    $region74: #{classify_forward.1} parent=1 // pred_check
      _
    $region75: #{classify_forward.1} parent=1 // pred_check_branch
      %6315 = sbr.rel (0) target = $region77
    $region76: #{classify_forward.1} parent=1 // pred_region
      %s6317 = ssub.s32 128, 128
      %6318 = vsyncadd [#allocation4], %s6317
      %s6320 = sshll.u32 [#allocation13], 4
      %s6321 = int_to_ptr.vmem [resolvable:$true] %s6320
      %6323 = dma.vmem_to_hbm [thread:$0]  %s6321, 128, %s12, [#allocation4]
    $region77: #{classify_forward.1} parent=1 // pred_fallthru
      _
    // Predicated region
    $region78: #{classify_forward.1} parent=1 // pred_check
      _
    $region79: #{classify_forward.1} parent=1 // pred_check_branch
      %6325 = sbr.rel (0) target = $region81
    $region80: #{classify_forward.1} parent=1 // pred_region
      %6326 = dma.done [#allocation4], 128
    $region81: #{classify_forward.1} parent=1 // pred_fallthru
      _
    %6327 = vsyncpa [#allocation3], 1
    %6328 = vsyncpa [#allocation6], 1
    %6329 = vsyncpa [#allocation9], 1
    %6330 = vsyncpa [#allocation12], 1
    %6331 = vsyncpa [#allocation4], 1

</llo_original>
